<compile_context>
chip_gen: v7x
topology: tpu7x:2x2x1
jax: 0.10.0
libtpu: 0.0.40
codegen_flags: <defaults>
</compile_context>

<pallas_src>
import math
from functools import partial

import jax
import jax.numpy as jnp
from jax.experimental import pallas as pl

BN_EPS = 1e-5

# Set True on v6e/v7x to feed the MXU bf16 operands (f32 accumulation) for
# higher matmul throughput and half the A/B DMA bytes.  Default False to keep
# f32-exact parity with the PyTorch reference; this workload is launch/HBM
# overhead bound (not MXU bound) at these shapes.
USE_BF16_MATMUL = False


def _mxu_dot(a, b):
    if USE_BF16_MATMUL:
        a = a.astype(jnp.bfloat16)
        b = b.astype(jnp.bfloat16)
    return jnp.dot(a, b, preferred_element_type=jnp.float32)


# ----------------------------- Pallas kernels ------------------------------

def _gemm_bn(a_ref, b_ref, g_ref, bt_ref):
    """im2col-GEMM followed by train-mode BatchNorm (biased per-batch stats)."""
    y = _mxu_dot(a_ref[...], b_ref[...])                  # (M, Cout) f32
    mean = jnp.mean(y, axis=0, keepdims=True)             # (1, Cout)
    c = y - mean
    var = jnp.mean(c * c, axis=0, keepdims=True)          # biased variance
    scale = g_ref[...] * jax.lax.rsqrt(var + BN_EPS)
    return c * scale + bt_ref[...]


def _conv_bn_kernel(*refs, relu, res_mode):
    """Fused conv(GEMM) + BN [+ ReLU] [+ residual add].

    res_mode:
      'none'   refs = (A, B, gamma, beta, out)
      'direct' refs = (A, B, gamma, beta, residual, out)      identity skip
      'conv'   refs = (A, B, gamma, beta, SA, SB, sgamma, sbeta, out)
               residual = BN(1x1 strided conv) computed in the same kernel
    """
    if res_mode == "none":
        a_ref, b_ref, g_ref, bt_ref, o_ref = refs
    elif res_mode == "direct":
        a_ref, b_ref, g_ref, bt_ref, r_ref, o_ref = refs
    else:  # "conv"
        a_ref, b_ref, g_ref, bt_ref, sa_ref, sb_ref, sg_ref, sbt_ref, o_ref = refs

    y = _gemm_bn(a_ref, b_ref, g_ref, bt_ref)
    if relu:
        y = jnp.maximum(y, 0.0)
    if res_mode == "direct":
        y = y + r_ref[...]
    elif res_mode == "conv":
        y = y + _gemm_bn(sa_ref, sb_ref, sg_ref, sbt_ref)
    o_ref[...] = y


def _max_taps_kernel(*refs):
    """Elementwise max over the 9 tap inputs -> 3x3 stride-2 max pool."""
    o_ref = refs[-1]
    y = refs[0][...]
    for r in refs[1:-1]:
        y = jnp.maximum(y, r[...])
    o_ref[...] = y


def _decoder_kernel(x_ref, w_ref, b_ref, o_ref):
    """Global average pool (AdaptiveAvgPool2d((1,1))) fused with the Linear head."""
    pooled = jnp.mean(x_ref[...], axis=1)                 # (N, C)
    o_ref[...] = _mxu_dot(pooled, w_ref[...]) + b_ref[...]


# ----------------------------- wrappers (JAX glue) --------------------------

def _im2col(x, kh, kw, stride, pad):
    """(N,H,W,Cin) -> ((N*Ho*Wo, kh*kw*Cin) patches, (N, Ho, Wo))."""
    N, H, W, Cin = x.shape
    Ho = (H + 2 * pad - kh) // stride + 1
    Wo = (W + 2 * pad - kw) // stride + 1
    xp = jnp.pad(x, ((0, 0), (pad, pad), (pad, pad), (0, 0))) if pad else x
    cols = []
    for i in range(kh):
        for j in range(kw):
            cols.append(jax.lax.slice(
                xp, (0, i, j, 0),
                (N, i + (Ho - 1) * stride + 1, j + (Wo - 1) * stride + 1, Cin),
                (1, stride, stride, 1)))
    patches = cols[0] if len(cols) == 1 else jnp.concatenate(cols, axis=-1)
    return patches.reshape(N * Ho * Wo, kh * kw * Cin), (N, Ho, Wo)


def conv_bn(x, w, gamma, beta, *, stride, pad, relu, residual=None, shortcut=None):
    """One pallas_call: conv(x; w) -> BN(gamma, beta) [-> ReLU] [+ residual].

    residual: NHWC tensor added after BN (identity shortcut).
    shortcut: dict(x, stride, w, gamma, beta) -> 1x1 strided conv + BN on the
              block input, computed inside the same kernel as the residual.
    """
    kh, kw, cin, cout = w.shape
    A, (N, Ho, Wo) = _im2col(x, kh, kw, stride, pad)
    B = w.reshape(kh * kw * cin, cout)
    M = N * Ho * Wo
    inputs = [A, B, gamma.reshape(1, cout), beta.reshape(1, cout)]
    if residual is not None:
        res_mode = "direct"
        inputs.append(residual.reshape(M, cout))
    elif shortcut is not None:
        res_mode = "conv"
        SA, _ = _im2col(shortcut["x"], 1, 1, shortcut["stride"], 0)
        SB = shortcut["w"].reshape(shortcut["w"].shape[2], cout)
        inputs += [SA, SB, shortcut["gamma"].reshape(1, cout),
                   shortcut["beta"].reshape(1, cout)]
    else:
        res_mode = "none"

    # Whole-array VMEM blocks (no grid): largest operand set (gate conv) is
    # ~0.35 MB, far under VMEM on all generations (incl. v7x's 64 MiB).
    out = pl.pallas_call(
        partial(_conv_bn_kernel, relu=relu, res_mode=res_mode),
        out_shape=jax.ShapeDtypeStruct((M, cout), jnp.float32),
    )(*inputs)
    return out.reshape(N, Ho, Wo, cout)


def maxpool3x3_s2_p1(x):
    N, H, W, C = x.shape
    neg = float(jnp.finfo(jnp.float32).min)
    xp = jnp.pad(x, ((0, 0), (1, 1), (1, 1), (0, 0)), constant_values=neg)
    Ho = (H + 2 - 3) // 2 + 1
    Wo = (W + 2 - 3) // 2 + 1
    M = N * Ho * Wo
    taps = []
    for i in range(3):
        for j in range(3):
            t = jax.lax.slice(
                xp, (0, i, j, 0),
                (N, i + (Ho - 1) * 2 + 1, j + (Wo - 1) * 2 + 1, C),
                (1, 2, 2, 1))
            taps.append(t.reshape(M, C))
    out = pl.pallas_call(
        _max_taps_kernel,
        out_shape=jax.ShapeDtypeStruct((M, C), jnp.float32),
    )(*taps)
    return out.reshape(N, Ho, Wo, C)


def decoder_head(x, w, b):
    N, H, W, C = x.shape
    n_classes = w.shape[1]
    return pl.pallas_call(
        _decoder_kernel,
        out_shape=jax.ShapeDtypeStruct((N, n_classes), jnp.float32),
    )(x.reshape(N, H * W, C), w, b.reshape(1, n_classes))


# ----------------------------- model ---------------------------------------

def basic_block(x, blk):
    """ResNetBasicBlock: conv_bn -> ReLU -> conv_bn, + residual; no post-add act."""
    down = blk["downsampling"]
    y = conv_bn(x, blk["conv1_w"], blk["bn1_gamma"], blk["bn1_beta"],
                stride=down, pad=1, relu=True)
    if blk["shortcut"] is not None:
        sc = blk["shortcut"]
        return conv_bn(y, blk["conv2_w"], blk["bn2_gamma"], blk["bn2_beta"],
                       stride=1, pad=1, relu=False,
                       shortcut=dict(x=x, stride=down, w=sc["w"],
                                     gamma=sc["gamma"], beta=sc["beta"]))
    return conv_bn(y, blk["conv2_w"], blk["bn2_gamma"], blk["bn2_beta"],
                   stride=1, pad=1, relu=False, residual=x)


def resnet_forward(params, x_nchw):
    x = jnp.transpose(x_nchw, (0, 2, 3, 1)).astype(jnp.float32)   # NCHW -> NHWC
    g = params["gate"]
    x = conv_bn(x, g["conv_w"], g["bn_gamma"], g["bn_beta"],
                stride=2, pad=3, relu=True)          # 7x7/s2 conv + BN + ReLU
    x = maxpool3x3_s2_p1(x)                          # 3x3/s2/p1 max pool
    for layer in params["layers"]:
        for blk in layer:
            x = basic_block(x, blk)
    d = params["decoder"]
    return decoder_head(x, d["w"], d["b"])           # global avg pool + Linear


# ----------------------------- parameter init ------------------------------

def _conv_init(key, kh, kw, cin, cout):
    fan_in = kh * kw * cin
    return jax.random.normal(key, (kh, kw, cin, cout), jnp.float32) / math.sqrt(fan_in)


def build_params(key, in_channels=3, blocks_sizes=(8, 16, 32, 64),
                 deepths=(1, 1, 1, 1), n_classes=10):
    keys = iter(jax.random.split(key, 256))
    params = {}
    c0 = blocks_sizes[0]
    params["gate"] = dict(
        conv_w=_conv_init(next(keys), 7, 7, in_channels, c0),
        bn_gamma=jnp.ones((c0,), jnp.float32),
        bn_beta=jnp.zeros((c0,), jnp.float32))
    layers = []
    layer_io = [(c0, c0)] + list(zip(blocks_sizes, blocks_sizes[1:]))
    for (cin, cout), n in zip(layer_io, deepths):
        blocks = []
        for b in range(n):
            b_in = cin if b == 0 else cout
            down = (2 if cin != cout else 1) if b == 0 else 1
            blk = dict(
                downsampling=down,
                conv1_w=_conv_init(next(keys), 3, 3, b_in, cout),
                bn1_gamma=jnp.ones((cout,), jnp.float32),
                bn1_beta=jnp.zeros((cout,), jnp.float32),
                conv2_w=_conv_init(next(keys), 3, 3, cout, cout),
                bn2_gamma=jnp.ones((cout,), jnp.float32),
                bn2_beta=jnp.zeros((cout,), jnp.float32),
                shortcut=None)
            if b_in != cout:  # should_apply_shortcut
                blk["shortcut"] = dict(
                    w=_conv_init(next(keys), 1, 1, b_in, cout),
                    gamma=jnp.ones((cout,), jnp.float32),
                    beta=jnp.zeros((cout,), jnp.float32))
            blocks.append(blk)
        layers.append(blocks)
    params["layers"] = layers
    cf = blocks_sizes[-1]
    params["decoder"] = dict(
        w=jax.random.normal(next(keys), (cf, n_classes), jnp.float32) / math.sqrt(cf),
        b=jnp.zeros((n_classes,), jnp.float32))
    return params


# --------------------------------- main -------------------------------------

if __name__ == "__main__":
    key = jax.random.PRNGKey(0)
    pkey, xkey = jax.random.split(key)
    # Small config: ResNet(in_channels=3, n_classes=10,
    #                      blocks_sizes=[8,16,32,64], deepths=[1,1,1,1])
    params = build_params(pkey, in_channels=3, blocks_sizes=(8, 16, 32, 64),
                          deepths=(1, 1, 1, 1), n_classes=10)
    x = jax.random.normal(xkey, (2, 3, 32, 32), jnp.float32)  # NCHW like PyTorch
    forward = jax.jit(partial(resnet_forward, params))
    logits = forward(x)
    jax.block_until_ready(logits)
    assert logits.shape == (2, 10), logits.shape
    assert bool(jnp.all(jnp.isfinite(logits)))
    print("KERNEL_OK")
</pallas_src>

<mosaic_0001>
module attributes {stable_mosaic.version = 11 : i64} {
  func.func @_conv_bn_kernel(%arg0: memref<512x147xf32, #tpu.memory_space<vmem>>, %arg1: memref<147x8xf32, #tpu.memory_space<vmem>>, %arg2: memref<1x8xf32, #tpu.memory_space<vmem>>, %arg3: memref<1x8xf32, #tpu.memory_space<vmem>>, %arg4: memref<512x8xf32, #tpu.memory_space<vmem>>) attributes {dimension_semantics = [], scalar_prefetch = 0 : i64, scratch_operands = 0 : i64, tpu.core_type = #tpu.core_type<tc>} {
    %c0 = arith.constant 0 : index
    %c0_0 = arith.constant 0 : index
    %0 = vector.load %arg0[%c0, %c0_0] : memref<512x147xf32, #tpu.memory_space<vmem>>, vector<512x147xf32>
    %c0_1 = arith.constant 0 : index
    %c0_2 = arith.constant 0 : index
    %1 = vector.load %arg1[%c0_1, %c0_2] : memref<147x8xf32, #tpu.memory_space<vmem>>, vector<147x8xf32>
    %cst = arith.constant dense<0.000000e+00> : vector<512x8xf32>
    %2 = tpu.matmul %0, %1, %cst {dimension_numbers = #tpu.dot_dimension_numbers<[1], [0], [0], [1], [0, 0, 1, 1], [], []>} : vector<512x147xf32>, vector<147x8xf32>, vector<512x8xf32> -> vector<512x8xf32>
    %cst_3 = arith.constant dense<0.000000e+00> : vector<8xf32>
    %3 = vector.multi_reduction <add>, %2, %cst_3 [0] : vector<512x8xf32> to vector<8xf32>
    %4 = vector.shape_cast %3 : vector<8xf32> to vector<1x8xf32>
    %cst_4 = arith.constant 5.120000e+02 : f32
    %5 = vector.broadcast %cst_4 : f32 to vector<1x8xf32>
    %6 = arith.divf %4, %5 : vector<1x8xf32>
    %7 = vector.broadcast %6 : vector<1x8xf32> to vector<512x8xf32>
    %8 = arith.subf %2, %7 : vector<512x8xf32>
    %9 = arith.mulf %8, %8 : vector<512x8xf32>
    %cst_5 = arith.constant dense<0.000000e+00> : vector<8xf32>
    %10 = vector.multi_reduction <add>, %9, %cst_5 [0] : vector<512x8xf32> to vector<8xf32>
    %11 = vector.shape_cast %10 : vector<8xf32> to vector<1x8xf32>
    %cst_6 = arith.constant 5.120000e+02 : f32
    %12 = vector.broadcast %cst_6 : f32 to vector<1x8xf32>
    %13 = arith.divf %11, %12 : vector<1x8xf32>
    %c0_7 = arith.constant 0 : index
    %c0_8 = arith.constant 0 : index
    %14 = vector.load %arg2[%c0_7, %c0_8] : memref<1x8xf32, #tpu.memory_space<vmem>>, vector<1x8xf32>
    %cst_9 = arith.constant 9.99999974E-6 : f32
    %15 = vector.broadcast %cst_9 : f32 to vector<1x8xf32>
    %16 = arith.addf %13, %15 : vector<1x8xf32>
    %17 = math.rsqrt %16 : vector<1x8xf32>
    %18 = arith.mulf %14, %17 : vector<1x8xf32>
    %19 = vector.broadcast %18 : vector<1x8xf32> to vector<512x8xf32>
    %20 = arith.mulf %8, %19 : vector<512x8xf32>
    %c0_10 = arith.constant 0 : index
    %c0_11 = arith.constant 0 : index
    %21 = vector.load %arg3[%c0_10, %c0_11] : memref<1x8xf32, #tpu.memory_space<vmem>>, vector<1x8xf32>
    %22 = vector.broadcast %21 : vector<1x8xf32> to vector<512x8xf32>
    %23 = arith.addf %20, %22 : vector<512x8xf32>
    %cst_12 = arith.constant 0.000000e+00 : f32
    %24 = vector.broadcast %cst_12 : f32 to vector<512x8xf32>
    %25 = arith.maximumf %23, %24 : vector<512x8xf32>
    %c0_13 = arith.constant 0 : index
    %c0_14 = arith.constant 0 : index
    %26 = vector.load %arg4[%c0_13, %c0_14] : memref<512x8xf32, #tpu.memory_space<vmem>>, vector<512x8xf32>
    tpu.vector_store %arg4[%c0_13, %c0_14], %25 {strides = array<i32>} : memref<512x8xf32, #tpu.memory_space<vmem>>, vector<512x8xf32>,
    return
  }
}

module attributes {stable_mosaic.version = 11 : i64} {
  func.func @_max_taps_kernel(%arg0: memref<128x8xf32, #tpu.memory_space<vmem>>, %arg1: memref<128x8xf32, #tpu.memory_space<vmem>>, %arg2: memref<128x8xf32, #tpu.memory_space<vmem>>, %arg3: memref<128x8xf32, #tpu.memory_space<vmem>>, %arg4: memref<128x8xf32, #tpu.memory_space<vmem>>, %arg5: memref<128x8xf32, #tpu.memory_space<vmem>>, %arg6: memref<128x8xf32, #tpu.memory_space<vmem>>, %arg7: memref<128x8xf32, #tpu.memory_space<vmem>>, %arg8: memref<128x8xf32, #tpu.memory_space<vmem>>, %arg9: memref<128x8xf32, #tpu.memory_space<vmem>>) attributes {dimension_semantics = [], scalar_prefetch = 0 : i64, scratch_operands = 0 : i64, tpu.core_type = #tpu.core_type<tc>} {
    %c0 = arith.constant 0 : index
    %c0_0 = arith.constant 0 : index
    %0 = vector.load %arg0[%c0, %c0_0] : memref<128x8xf32, #tpu.memory_space<vmem>>, vector<128x8xf32>
    %c0_1 = arith.constant 0 : index
    %c0_2 = arith.constant 0 : index
    %1 = vector.load %arg1[%c0_1, %c0_2] : memref<128x8xf32, #tpu.memory_space<vmem>>, vector<128x8xf32>
    %2 = arith.maximumf %0, %1 : vector<128x8xf32>
    %c0_3 = arith.constant 0 : index
    %c0_4 = arith.constant 0 : index
    %3 = vector.load %arg2[%c0_3, %c0_4] : memref<128x8xf32, #tpu.memory_space<vmem>>, vector<128x8xf32>
    %4 = arith.maximumf %2, %3 : vector<128x8xf32>
    %c0_5 = arith.constant 0 : index
    %c0_6 = arith.constant 0 : index
    %5 = vector.load %arg3[%c0_5, %c0_6] : memref<128x8xf32, #tpu.memory_space<vmem>>, vector<128x8xf32>
    %6 = arith.maximumf %4, %5 : vector<128x8xf32>
    %c0_7 = arith.constant 0 : index
    %c0_8 = arith.constant 0 : index
    %7 = vector.load %arg4[%c0_7, %c0_8] : memref<128x8xf32, #tpu.memory_space<vmem>>, vector<128x8xf32>
    %8 = arith.maximumf %6, %7 : vector<128x8xf32>
    %c0_9 = arith.constant 0 : index
    %c0_10 = arith.constant 0 : index
    %9 = vector.load %arg5[%c0_9, %c0_10] : memref<128x8xf32, #tpu.memory_space<vmem>>, vector<128x8xf32>
    %10 = arith.maximumf %8, %9 : vector<128x8xf32>
    %c0_11 = arith.constant 0 : index
    %c0_12 = arith.constant 0 : index
    %11 = vector.load %arg6[%c0_11, %c0_12] : memref<128x8xf32, #tpu.memory_space<vmem>>, vector<128x8xf32>
    %12 = arith.maximumf %10, %11 : vector<128x8xf32>
    %c0_13 = arith.constant 0 : index
    %c0_14 = arith.constant 0 : index
    %13 = vector.load %arg7[%c0_13, %c0_14] : memref<128x8xf32, #tpu.memory_space<vmem>>, vector<128x8xf32>
    %14 = arith.maximumf %12, %13 : vector<128x8xf32>
    %c0_15 = arith.constant 0 : index
    %c0_16 = arith.constant 0 : index
    %15 = vector.load %arg8[%c0_15, %c0_16] : memref<128x8xf32, #tpu.memory_space<vmem>>, vector<128x8xf32>
    %16 = arith.maximumf %14, %15 : vector<128x8xf32>
    %c0_17 = arith.constant 0 : index
    %c0_18 = arith.constant 0 : index
    %17 = vector.load %arg9[%c0_17, %c0_18] : memref<128x8xf32, #tpu.memory_space<vmem>>, vector<128x8xf32>
    tpu.vector_store %arg9[%c0_17, %c0_18], %16 {strides = array<i32>} : memref<128x8xf32, #tpu.memory_space<vmem>>, vector<128x8xf32>,
    return
  }
}

module attributes {stable_mosaic.version = 11 : i64} {
  func.func @_conv_bn_kernel(%arg0: memref<128x72xf32, #tpu.memory_space<vmem>>, %arg1: memref<72x8xf32, #tpu.memory_space<vmem>>, %arg2: memref<1x8xf32, #tpu.memory_space<vmem>>, %arg3: memref<1x8xf32, #tpu.memory_space<vmem>>, %arg4: memref<128x8xf32, #tpu.memory_space<vmem>>, %arg5: memref<128x8xf32, #tpu.memory_space<vmem>>) attributes {dimension_semantics = [], scalar_prefetch = 0 : i64, scratch_operands = 0 : i64, tpu.core_type = #tpu.core_type<tc>} {
    %c0 = arith.constant 0 : index
    %c0_0 = arith.constant 0 : index
    %0 = vector.load %arg0[%c0, %c0_0] : memref<128x72xf32, #tpu.memory_space<vmem>>, vector<128x72xf32>
    %c0_1 = arith.constant 0 : index
    %c0_2 = arith.constant 0 : index
    %1 = vector.load %arg1[%c0_1, %c0_2] : memref<72x8xf32, #tpu.memory_space<vmem>>, vector<72x8xf32>
    %cst = arith.constant dense<0.000000e+00> : vector<128x8xf32>
    %2 = tpu.matmul %0, %1, %cst {dimension_numbers = #tpu.dot_dimension_numbers<[1], [0], [0], [1], [0, 0, 1, 1], [], []>} : vector<128x72xf32>, vector<72x8xf32>, vector<128x8xf32> -> vector<128x8xf32>
    %cst_3 = arith.constant dense<0.000000e+00> : vector<8xf32>
    %3 = vector.multi_reduction <add>, %2, %cst_3 [0] : vector<128x8xf32> to vector<8xf32>
    %4 = vector.shape_cast %3 : vector<8xf32> to vector<1x8xf32>
    %cst_4 = arith.constant 1.280000e+02 : f32
    %5 = vector.broadcast %cst_4 : f32 to vector<1x8xf32>
    %6 = arith.divf %4, %5 : vector<1x8xf32>
    %7 = vector.broadcast %6 : vector<1x8xf32> to vector<128x8xf32>
    %8 = arith.subf %2, %7 : vector<128x8xf32>
    %9 = arith.mulf %8, %8 : vector<128x8xf32>
    %cst_5 = arith.constant dense<0.000000e+00> : vector<8xf32>
    %10 = vector.multi_reduction <add>, %9, %cst_5 [0] : vector<128x8xf32> to vector<8xf32>
    %11 = vector.shape_cast %10 : vector<8xf32> to vector<1x8xf32>
    %cst_6 = arith.constant 1.280000e+02 : f32
    %12 = vector.broadcast %cst_6 : f32 to vector<1x8xf32>
    %13 = arith.divf %11, %12 : vector<1x8xf32>
    %c0_7 = arith.constant 0 : index
    %c0_8 = arith.constant 0 : index
    %14 = vector.load %arg2[%c0_7, %c0_8] : memref<1x8xf32, #tpu.memory_space<vmem>>, vector<1x8xf32>
    %cst_9 = arith.constant 9.99999974E-6 : f32
    %15 = vector.broadcast %cst_9 : f32 to vector<1x8xf32>
    %16 = arith.addf %13, %15 : vector<1x8xf32>
    %17 = math.rsqrt %16 : vector<1x8xf32>
    %18 = arith.mulf %14, %17 : vector<1x8xf32>
    %19 = vector.broadcast %18 : vector<1x8xf32> to vector<128x8xf32>
    %20 = arith.mulf %8, %19 : vector<128x8xf32>
    %c0_10 = arith.constant 0 : index
    %c0_11 = arith.constant 0 : index
    %21 = vector.load %arg3[%c0_10, %c0_11] : memref<1x8xf32, #tpu.memory_space<vmem>>, vector<1x8xf32>
    %22 = vector.broadcast %21 : vector<1x8xf32> to vector<128x8xf32>
    %23 = arith.addf %20, %22 : vector<128x8xf32>
    %c0_12 = arith.constant 0 : index
    %c0_13 = arith.constant 0 : index
    %24 = vector.load %arg4[%c0_12, %c0_13] : memref<128x8xf32, #tpu.memory_space<vmem>>, vector<128x8xf32>
    %25 = arith.addf %23, %24 : vector<128x8xf32>
    %c0_14 = arith.constant 0 : index
    %c0_15 = arith.constant 0 : index
    %26 = vector.load %arg5[%c0_14, %c0_15] : memref<128x8xf32, #tpu.memory_space<vmem>>, vector<128x8xf32>
    tpu.vector_store %arg5[%c0_14, %c0_15], %25 {strides = array<i32>} : memref<128x8xf32, #tpu.memory_space<vmem>>, vector<128x8xf32>,
    return
  }
}

module attributes {stable_mosaic.version = 11 : i64} {
  func.func @_conv_bn_kernel(%arg0: memref<128x72xf32, #tpu.memory_space<vmem>>, %arg1: memref<72x8xf32, #tpu.memory_space<vmem>>, %arg2: memref<1x8xf32, #tpu.memory_space<vmem>>, %arg3: memref<1x8xf32, #tpu.memory_space<vmem>>, %arg4: memref<128x8xf32, #tpu.memory_space<vmem>>) attributes {dimension_semantics = [], scalar_prefetch = 0 : i64, scratch_operands = 0 : i64, tpu.core_type = #tpu.core_type<tc>} {
    %c0 = arith.constant 0 : index
    %c0_0 = arith.constant 0 : index
    %0 = vector.load %arg0[%c0, %c0_0] : memref<128x72xf32, #tpu.memory_space<vmem>>, vector<128x72xf32>
    %c0_1 = arith.constant 0 : index
    %c0_2 = arith.constant 0 : index
    %1 = vector.load %arg1[%c0_1, %c0_2] : memref<72x8xf32, #tpu.memory_space<vmem>>, vector<72x8xf32>
    %cst = arith.constant dense<0.000000e+00> : vector<128x8xf32>
    %2 = tpu.matmul %0, %1, %cst {dimension_numbers = #tpu.dot_dimension_numbers<[1], [0], [0], [1], [0, 0, 1, 1], [], []>} : vector<128x72xf32>, vector<72x8xf32>, vector<128x8xf32> -> vector<128x8xf32>
    %cst_3 = arith.constant dense<0.000000e+00> : vector<8xf32>
    %3 = vector.multi_reduction <add>, %2, %cst_3 [0] : vector<128x8xf32> to vector<8xf32>
    %4 = vector.shape_cast %3 : vector<8xf32> to vector<1x8xf32>
    %cst_4 = arith.constant 1.280000e+02 : f32
    %5 = vector.broadcast %cst_4 : f32 to vector<1x8xf32>
    %6 = arith.divf %4, %5 : vector<1x8xf32>
    %7 = vector.broadcast %6 : vector<1x8xf32> to vector<128x8xf32>
    %8 = arith.subf %2, %7 : vector<128x8xf32>
    %9 = arith.mulf %8, %8 : vector<128x8xf32>
    %cst_5 = arith.constant dense<0.000000e+00> : vector<8xf32>
    %10 = vector.multi_reduction <add>, %9, %cst_5 [0] : vector<128x8xf32> to vector<8xf32>
    %11 = vector.shape_cast %10 : vector<8xf32> to vector<1x8xf32>
    %cst_6 = arith.constant 1.280000e+02 : f32
    %12 = vector.broadcast %cst_6 : f32 to vector<1x8xf32>
    %13 = arith.divf %11, %12 : vector<1x8xf32>
    %c0_7 = arith.constant 0 : index
    %c0_8 = arith.constant 0 : index
    %14 = vector.load %arg2[%c0_7, %c0_8] : memref<1x8xf32, #tpu.memory_space<vmem>>, vector<1x8xf32>
    %cst_9 = arith.constant 9.99999974E-6 : f32
    %15 = vector.broadcast %cst_9 : f32 to vector<1x8xf32>
    %16 = arith.addf %13, %15 : vector<1x8xf32>
    %17 = math.rsqrt %16 : vector<1x8xf32>
    %18 = arith.mulf %14, %17 : vector<1x8xf32>
    %19 = vector.broadcast %18 : vector<1x8xf32> to vector<128x8xf32>
    %20 = arith.mulf %8, %19 : vector<128x8xf32>
    %c0_10 = arith.constant 0 : index
    %c0_11 = arith.constant 0 : index
    %21 = vector.load %arg3[%c0_10, %c0_11] : memref<1x8xf32, #tpu.memory_space<vmem>>, vector<1x8xf32>
    %22 = vector.broadcast %21 : vector<1x8xf32> to vector<128x8xf32>
    %23 = arith.addf %20, %22 : vector<128x8xf32>
    %cst_12 = arith.constant 0.000000e+00 : f32
    %24 = vector.broadcast %cst_12 : f32 to vector<128x8xf32>
    %25 = arith.maximumf %23, %24 : vector<128x8xf32>
    %c0_13 = arith.constant 0 : index
    %c0_14 = arith.constant 0 : index
    %26 = vector.load %arg4[%c0_13, %c0_14] : memref<128x8xf32, #tpu.memory_space<vmem>>, vector<128x8xf32>
    tpu.vector_store %arg4[%c0_13, %c0_14], %25 {strides = array<i32>} : memref<128x8xf32, #tpu.memory_space<vmem>>, vector<128x8xf32>,
    return
  }
}

module attributes {stable_mosaic.version = 11 : i64} {
  func.func @_conv_bn_kernel(%arg0: memref<32x72xf32, #tpu.memory_space<vmem>>, %arg1: memref<72x16xf32, #tpu.memory_space<vmem>>, %arg2: memref<1x16xf32, #tpu.memory_space<vmem>>, %arg3: memref<1x16xf32, #tpu.memory_space<vmem>>, %arg4: memref<32x16xf32, #tpu.memory_space<vmem>>) attributes {dimension_semantics = [], scalar_prefetch = 0 : i64, scratch_operands = 0 : i64, tpu.core_type = #tpu.core_type<tc>} {
    %c0 = arith.constant 0 : index
    %c0_0 = arith.constant 0 : index
    %0 = vector.load %arg0[%c0, %c0_0] : memref<32x72xf32, #tpu.memory_space<vmem>>, vector<32x72xf32>
    %c0_1 = arith.constant 0 : index
    %c0_2 = arith.constant 0 : index
    %1 = vector.load %arg1[%c0_1, %c0_2] : memref<72x16xf32, #tpu.memory_space<vmem>>, vector<72x16xf32>
    %cst = arith.constant dense<0.000000e+00> : vector<32x16xf32>
    %2 = tpu.matmul %0, %1, %cst {dimension_numbers = #tpu.dot_dimension_numbers<[1], [0], [0], [1], [0, 0, 1, 1], [], []>} : vector<32x72xf32>, vector<72x16xf32>, vector<32x16xf32> -> vector<32x16xf32>
    %cst_3 = arith.constant dense<0.000000e+00> : vector<16xf32>
    %3 = vector.multi_reduction <add>, %2, %cst_3 [0] : vector<32x16xf32> to vector<16xf32>
    %4 = vector.shape_cast %3 : vector<16xf32> to vector<1x16xf32>
    %cst_4 = arith.constant 3.200000e+01 : f32
    %5 = vector.broadcast %cst_4 : f32 to vector<1x16xf32>
    %6 = arith.divf %4, %5 : vector<1x16xf32>
    %7 = vector.broadcast %6 : vector<1x16xf32> to vector<32x16xf32>
    %8 = arith.subf %2, %7 : vector<32x16xf32>
    %9 = arith.mulf %8, %8 : vector<32x16xf32>
    %cst_5 = arith.constant dense<0.000000e+00> : vector<16xf32>
    %10 = vector.multi_reduction <add>, %9, %cst_5 [0] : vector<32x16xf32> to vector<16xf32>
    %11 = vector.shape_cast %10 : vector<16xf32> to vector<1x16xf32>
    %cst_6 = arith.constant 3.200000e+01 : f32
    %12 = vector.broadcast %cst_6 : f32 to vector<1x16xf32>
    %13 = arith.divf %11, %12 : vector<1x16xf32>
    %c0_7 = arith.constant 0 : index
    %c0_8 = arith.constant 0 : index
    %14 = vector.load %arg2[%c0_7, %c0_8] : memref<1x16xf32, #tpu.memory_space<vmem>>, vector<1x16xf32>
    %cst_9 = arith.constant 9.99999974E-6 : f32
    %15 = vector.broadcast %cst_9 : f32 to vector<1x16xf32>
    %16 = arith.addf %13, %15 : vector<1x16xf32>
    %17 = math.rsqrt %16 : vector<1x16xf32>
    %18 = arith.mulf %14, %17 : vector<1x16xf32>
    %19 = vector.broadcast %18 : vector<1x16xf32> to vector<32x16xf32>
    %20 = arith.mulf %8, %19 : vector<32x16xf32>
    %c0_10 = arith.constant 0 : index
    %c0_11 = arith.constant 0 : index
    %21 = vector.load %arg3[%c0_10, %c0_11] : memref<1x16xf32, #tpu.memory_space<vmem>>, vector<1x16xf32>
    %22 = vector.broadcast %21 : vector<1x16xf32> to vector<32x16xf32>
    %23 = arith.addf %20, %22 : vector<32x16xf32>
    %cst_12 = arith.constant 0.000000e+00 : f32
    %24 = vector.broadcast %cst_12 : f32 to vector<32x16xf32>
    %25 = arith.maximumf %23, %24 : vector<32x16xf32>
    %c0_13 = arith.constant 0 : index
    %c0_14 = arith.constant 0 : index
    %26 = vector.load %arg4[%c0_13, %c0_14] : memref<32x16xf32, #tpu.memory_space<vmem>>, vector<32x16xf32>
    tpu.vector_store %arg4[%c0_13, %c0_14], %25 {strides = array<i32>} : memref<32x16xf32, #tpu.memory_space<vmem>>, vector<32x16xf32>,
    return
  }
}

module attributes {stable_mosaic.version = 11 : i64} {
  func.func @_conv_bn_kernel(%arg0: memref<32x144xf32, #tpu.memory_space<vmem>>, %arg1: memref<144x16xf32, #tpu.memory_space<vmem>>, %arg2: memref<1x16xf32, #tpu.memory_space<vmem>>, %arg3: memref<1x16xf32, #tpu.memory_space<vmem>>, %arg4: memref<32x8xf32, #tpu.memory_space<vmem>>, %arg5: memref<8x16xf32, #tpu.memory_space<vmem>>, %arg6: memref<1x16xf32, #tpu.memory_space<vmem>>, %arg7: memref<1x16xf32, #tpu.memory_space<vmem>>, %arg8: memref<32x16xf32, #tpu.memory_space<vmem>>) attributes {dimension_semantics = [], scalar_prefetch = 0 : i64, scratch_operands = 0 : i64, tpu.core_type = #tpu.core_type<tc>} {
    %c0 = arith.constant 0 : index
    %c0_0 = arith.constant 0 : index
    %0 = vector.load %arg0[%c0, %c0_0] : memref<32x144xf32, #tpu.memory_space<vmem>>, vector<32x144xf32>
    %c0_1 = arith.constant 0 : index
    %c0_2 = arith.constant 0 : index
    %1 = vector.load %arg1[%c0_1, %c0_2] : memref<144x16xf32, #tpu.memory_space<vmem>>, vector<144x16xf32>
    %cst = arith.constant dense<0.000000e+00> : vector<32x16xf32>
    %2 = tpu.matmul %0, %1, %cst {dimension_numbers = #tpu.dot_dimension_numbers<[1], [0], [0], [1], [0, 0, 1, 1], [], []>} : vector<32x144xf32>, vector<144x16xf32>, vector<32x16xf32> -> vector<32x16xf32>
    %cst_3 = arith.constant dense<0.000000e+00> : vector<16xf32>
    %3 = vector.multi_reduction <add>, %2, %cst_3 [0] : vector<32x16xf32> to vector<16xf32>
    %4 = vector.shape_cast %3 : vector<16xf32> to vector<1x16xf32>
    %cst_4 = arith.constant 3.200000e+01 : f32
    %5 = vector.broadcast %cst_4 : f32 to vector<1x16xf32>
    %6 = arith.divf %4, %5 : vector<1x16xf32>
    %7 = vector.broadcast %6 : vector<1x16xf32> to vector<32x16xf32>
    %8 = arith.subf %2, %7 : vector<32x16xf32>
    %9 = arith.mulf %8, %8 : vector<32x16xf32>
    %cst_5 = arith.constant dense<0.000000e+00> : vector<16xf32>
    %10 = vector.multi_reduction <add>, %9, %cst_5 [0] : vector<32x16xf32> to vector<16xf32>
    %11 = vector.shape_cast %10 : vector<16xf32> to vector<1x16xf32>
    %cst_6 = arith.constant 3.200000e+01 : f32
    %12 = vector.broadcast %cst_6 : f32 to vector<1x16xf32>
    %13 = arith.divf %11, %12 : vector<1x16xf32>
    %c0_7 = arith.constant 0 : index
    %c0_8 = arith.constant 0 : index
    %14 = vector.load %arg2[%c0_7, %c0_8] : memref<1x16xf32, #tpu.memory_space<vmem>>, vector<1x16xf32>
    %cst_9 = arith.constant 9.99999974E-6 : f32
    %15 = vector.broadcast %cst_9 : f32 to vector<1x16xf32>
    %16 = arith.addf %13, %15 : vector<1x16xf32>
    %17 = math.rsqrt %16 : vector<1x16xf32>
    %18 = arith.mulf %14, %17 : vector<1x16xf32>
    %19 = vector.broadcast %18 : vector<1x16xf32> to vector<32x16xf32>
    %20 = arith.mulf %8, %19 : vector<32x16xf32>
    %c0_10 = arith.constant 0 : index
    %c0_11 = arith.constant 0 : index
    %21 = vector.load %arg3[%c0_10, %c0_11] : memref<1x16xf32, #tpu.memory_space<vmem>>, vector<1x16xf32>
    %22 = vector.broadcast %21 : vector<1x16xf32> to vector<32x16xf32>
    %23 = arith.addf %20, %22 : vector<32x16xf32>
    %c0_12 = arith.constant 0 : index
    %c0_13 = arith.constant 0 : index
    %24 = vector.load %arg4[%c0_12, %c0_13] : memref<32x8xf32, #tpu.memory_space<vmem>>, vector<32x8xf32>
    %c0_14 = arith.constant 0 : index
    %c0_15 = arith.constant 0 : index
    %25 = vector.load %arg5[%c0_14, %c0_15] : memref<8x16xf32, #tpu.memory_space<vmem>>, vector<8x16xf32>
    %cst_16 = arith.constant dense<0.000000e+00> : vector<32x16xf32>
    %26 = tpu.matmul %24, %25, %cst_16 {dimension_numbers = #tpu.dot_dimension_numbers<[1], [0], [0], [1], [0, 0, 1, 1], [], []>} : vector<32x8xf32>, vector<8x16xf32>, vector<32x16xf32> -> vector<32x16xf32>
    %cst_17 = arith.constant dense<0.000000e+00> : vector<16xf32>
    %27 = vector.multi_reduction <add>, %26, %cst_17 [0] : vector<32x16xf32> to vector<16xf32>
    %28 = vector.shape_cast %27 : vector<16xf32> to vector<1x16xf32>
    %cst_18 = arith.constant 3.200000e+01 : f32
    %29 = vector.broadcast %cst_18 : f32 to vector<1x16xf32>
    %30 = arith.divf %28, %29 : vector<1x16xf32>
    %31 = vector.broadcast %30 : vector<1x16xf32> to vector<32x16xf32>
    %32 = arith.subf %26, %31 : vector<32x16xf32>
    %33 = arith.mulf %32, %32 : vector<32x16xf32>
    %cst_19 = arith.constant dense<0.000000e+00> : vector<16xf32>
    %34 = vector.multi_reduction <add>, %33, %cst_19 [0] : vector<32x16xf32> to vector<16xf32>
    %35 = vector.shape_cast %34 : vector<16xf32> to vector<1x16xf32>
    %cst_20 = arith.constant 3.200000e+01 : f32
    %36 = vector.broadcast %cst_20 : f32 to vector<1x16xf32>
    %37 = arith.divf %35, %36 : vector<1x16xf32>
    %c0_21 = arith.constant 0 : index
    %c0_22 = arith.constant 0 : index
    %38 = vector.load %arg6[%c0_21, %c0_22] : memref<1x16xf32, #tpu.memory_space<vmem>>, vector<1x16xf32>
    %cst_23 = arith.constant 9.99999974E-6 : f32
    %39 = vector.broadcast %cst_23 : f32 to vector<1x16xf32>
    %40 = arith.addf %37, %39 : vector<1x16xf32>
    %41 = math.rsqrt %40 : vector<1x16xf32>
    %42 = arith.mulf %38, %41 : vector<1x16xf32>
    %43 = vector.broadcast %42 : vector<1x16xf32> to vector<32x16xf32>
    %44 = arith.mulf %32, %43 : vector<32x16xf32>
    %c0_24 = arith.constant 0 : index
    %c0_25 = arith.constant 0 : index
    %45 = vector.load %arg7[%c0_24, %c0_25] : memref<1x16xf32, #tpu.memory_space<vmem>>, vector<1x16xf32>
    %46 = vector.broadcast %45 : vector<1x16xf32> to vector<32x16xf32>
    %47 = arith.addf %44, %46 : vector<32x16xf32>
    %48 = arith.addf %23, %47 : vector<32x16xf32>
    %c0_26 = arith.constant 0 : index
    %c0_27 = arith.constant 0 : index
    %49 = vector.load %arg8[%c0_26, %c0_27] : memref<32x16xf32, #tpu.memory_space<vmem>>, vector<32x16xf32>
    tpu.vector_store %arg8[%c0_26, %c0_27], %48 {strides = array<i32>} : memref<32x16xf32, #tpu.memory_space<vmem>>, vector<32x16xf32>,
    return
  }
}

module attributes {stable_mosaic.version = 11 : i64} {
  func.func @_conv_bn_kernel(%arg0: memref<8x144xf32, #tpu.memory_space<vmem>>, %arg1: memref<144x32xf32, #tpu.memory_space<vmem>>, %arg2: memref<1x32xf32, #tpu.memory_space<vmem>>, %arg3: memref<1x32xf32, #tpu.memory_space<vmem>>, %arg4: memref<8x32xf32, #tpu.memory_space<vmem>>) attributes {dimension_semantics = [], scalar_prefetch = 0 : i64, scratch_operands = 0 : i64, tpu.core_type = #tpu.core_type<tc>} {
    %c0 = arith.constant 0 : index
    %c0_0 = arith.constant 0 : index
    %0 = vector.load %arg0[%c0, %c0_0] : memref<8x144xf32, #tpu.memory_space<vmem>>, vector<8x144xf32>
    %c0_1 = arith.constant 0 : index
    %c0_2 = arith.constant 0 : index
    %1 = vector.load %arg1[%c0_1, %c0_2] : memref<144x32xf32, #tpu.memory_space<vmem>>, vector<144x32xf32>
    %cst = arith.constant dense<0.000000e+00> : vector<8x32xf32>
    %2 = tpu.matmul %0, %1, %cst {dimension_numbers = #tpu.dot_dimension_numbers<[1], [0], [0], [1], [0, 0, 1, 1], [], []>} : vector<8x144xf32>, vector<144x32xf32>, vector<8x32xf32> -> vector<8x32xf32>
    %cst_3 = arith.constant dense<0.000000e+00> : vector<32xf32>
    %3 = vector.multi_reduction <add>, %2, %cst_3 [0] : vector<8x32xf32> to vector<32xf32>
    %4 = vector.shape_cast %3 : vector<32xf32> to vector<1x32xf32>
    %cst_4 = arith.constant 8.000000e+00 : f32
    %5 = vector.broadcast %cst_4 : f32 to vector<1x32xf32>
    %6 = arith.divf %4, %5 : vector<1x32xf32>
    %7 = vector.broadcast %6 : vector<1x32xf32> to vector<8x32xf32>
    %8 = arith.subf %2, %7 : vector<8x32xf32>
    %9 = arith.mulf %8, %8 : vector<8x32xf32>
    %cst_5 = arith.constant dense<0.000000e+00> : vector<32xf32>
    %10 = vector.multi_reduction <add>, %9, %cst_5 [0] : vector<8x32xf32> to vector<32xf32>
    %11 = vector.shape_cast %10 : vector<32xf32> to vector<1x32xf32>
    %cst_6 = arith.constant 8.000000e+00 : f32
    %12 = vector.broadcast %cst_6 : f32 to vector<1x32xf32>
    %13 = arith.divf %11, %12 : vector<1x32xf32>
    %c0_7 = arith.constant 0 : index
    %c0_8 = arith.constant 0 : index
    %14 = vector.load %arg2[%c0_7, %c0_8] : memref<1x32xf32, #tpu.memory_space<vmem>>, vector<1x32xf32>
    %cst_9 = arith.constant 9.99999974E-6 : f32
    %15 = vector.broadcast %cst_9 : f32 to vector<1x32xf32>
    %16 = arith.addf %13, %15 : vector<1x32xf32>
    %17 = math.rsqrt %16 : vector<1x32xf32>
    %18 = arith.mulf %14, %17 : vector<1x32xf32>
    %19 = vector.broadcast %18 : vector<1x32xf32> to vector<8x32xf32>
    %20 = arith.mulf %8, %19 : vector<8x32xf32>
    %c0_10 = arith.constant 0 : index
    %c0_11 = arith.constant 0 : index
    %21 = vector.load %arg3[%c0_10, %c0_11] : memref<1x32xf32, #tpu.memory_space<vmem>>, vector<1x32xf32>
    %22 = vector.broadcast %21 : vector<1x32xf32> to vector<8x32xf32>
    %23 = arith.addf %20, %22 : vector<8x32xf32>
    %cst_12 = arith.constant 0.000000e+00 : f32
    %24 = vector.broadcast %cst_12 : f32 to vector<8x32xf32>
    %25 = arith.maximumf %23, %24 : vector<8x32xf32>
    %c0_13 = arith.constant 0 : index
    %c0_14 = arith.constant 0 : index
    %26 = vector.load %arg4[%c0_13, %c0_14] : memref<8x32xf32, #tpu.memory_space<vmem>>, vector<8x32xf32>
    tpu.vector_store %arg4[%c0_13, %c0_14], %25 {strides = array<i32>} : memref<8x32xf32, #tpu.memory_space<vmem>>, vector<8x32xf32>,
    return
  }
}

module attributes {stable_mosaic.version = 11 : i64} {
  func.func @_conv_bn_kernel(%arg0: memref<8x288xf32, #tpu.memory_space<vmem>>, %arg1: memref<288x32xf32, #tpu.memory_space<vmem>>, %arg2: memref<1x32xf32, #tpu.memory_space<vmem>>, %arg3: memref<1x32xf32, #tpu.memory_space<vmem>>, %arg4: memref<8x16xf32, #tpu.memory_space<vmem>>, %arg5: memref<16x32xf32, #tpu.memory_space<vmem>>, %arg6: memref<1x32xf32, #tpu.memory_space<vmem>>, %arg7: memref<1x32xf32, #tpu.memory_space<vmem>>, %arg8: memref<8x32xf32, #tpu.memory_space<vmem>>) attributes {dimension_semantics = [], scalar_prefetch = 0 : i64, scratch_operands = 0 : i64, tpu.core_type = #tpu.core_type<tc>} {
    %c0 = arith.constant 0 : index
    %c0_0 = arith.constant 0 : index
    %0 = vector.load %arg0[%c0, %c0_0] : memref<8x288xf32, #tpu.memory_space<vmem>>, vector<8x288xf32>
    %c0_1 = arith.constant 0 : index
    %c0_2 = arith.constant 0 : index
    %1 = vector.load %arg1[%c0_1, %c0_2] : memref<288x32xf32, #tpu.memory_space<vmem>>, vector<288x32xf32>
    %cst = arith.constant dense<0.000000e+00> : vector<8x32xf32>
    %2 = tpu.matmul %0, %1, %cst {dimension_numbers = #tpu.dot_dimension_numbers<[1], [0], [0], [1], [0, 0, 1, 1], [], []>} : vector<8x288xf32>, vector<288x32xf32>, vector<8x32xf32> -> vector<8x32xf32>
    %cst_3 = arith.constant dense<0.000000e+00> : vector<32xf32>
    %3 = vector.multi_reduction <add>, %2, %cst_3 [0] : vector<8x32xf32> to vector<32xf32>
    %4 = vector.shape_cast %3 : vector<32xf32> to vector<1x32xf32>
    %cst_4 = arith.constant 8.000000e+00 : f32
    %5 = vector.broadcast %cst_4 : f32 to vector<1x32xf32>
    %6 = arith.divf %4, %5 : vector<1x32xf32>
    %7 = vector.broadcast %6 : vector<1x32xf32> to vector<8x32xf32>
    %8 = arith.subf %2, %7 : vector<8x32xf32>
    %9 = arith.mulf %8, %8 : vector<8x32xf32>
    %cst_5 = arith.constant dense<0.000000e+00> : vector<32xf32>
    %10 = vector.multi_reduction <add>, %9, %cst_5 [0] : vector<8x32xf32> to vector<32xf32>
    %11 = vector.shape_cast %10 : vector<32xf32> to vector<1x32xf32>
    %cst_6 = arith.constant 8.000000e+00 : f32
    %12 = vector.broadcast %cst_6 : f32 to vector<1x32xf32>
    %13 = arith.divf %11, %12 : vector<1x32xf32>
    %c0_7 = arith.constant 0 : index
    %c0_8 = arith.constant 0 : index
    %14 = vector.load %arg2[%c0_7, %c0_8] : memref<1x32xf32, #tpu.memory_space<vmem>>, vector<1x32xf32>
    %cst_9 = arith.constant 9.99999974E-6 : f32
    %15 = vector.broadcast %cst_9 : f32 to vector<1x32xf32>
    %16 = arith.addf %13, %15 : vector<1x32xf32>
    %17 = math.rsqrt %16 : vector<1x32xf32>
    %18 = arith.mulf %14, %17 : vector<1x32xf32>
    %19 = vector.broadcast %18 : vector<1x32xf32> to vector<8x32xf32>
    %20 = arith.mulf %8, %19 : vector<8x32xf32>
    %c0_10 = arith.constant 0 : index
    %c0_11 = arith.constant 0 : index
    %21 = vector.load %arg3[%c0_10, %c0_11] : memref<1x32xf32, #tpu.memory_space<vmem>>, vector<1x32xf32>
    %22 = vector.broadcast %21 : vector<1x32xf32> to vector<8x32xf32>
    %23 = arith.addf %20, %22 : vector<8x32xf32>
    %c0_12 = arith.constant 0 : index
    %c0_13 = arith.constant 0 : index
    %24 = vector.load %arg4[%c0_12, %c0_13] : memref<8x16xf32, #tpu.memory_space<vmem>>, vector<8x16xf32>
    %c0_14 = arith.constant 0 : index
    %c0_15 = arith.constant 0 : index
    %25 = vector.load %arg5[%c0_14, %c0_15] : memref<16x32xf32, #tpu.memory_space<vmem>>, vector<16x32xf32>
    %cst_16 = arith.constant dense<0.000000e+00> : vector<8x32xf32>
    %26 = tpu.matmul %24, %25, %cst_16 {dimension_numbers = #tpu.dot_dimension_numbers<[1], [0], [0], [1], [0, 0, 1, 1], [], []>} : vector<8x16xf32>, vector<16x32xf32>, vector<8x32xf32> -> vector<8x32xf32>
    %cst_17 = arith.constant dense<0.000000e+00> : vector<32xf32>
    %27 = vector.multi_reduction <add>, %26, %cst_17 [0] : vector<8x32xf32> to vector<32xf32>
    %28 = vector.shape_cast %27 : vector<32xf32> to vector<1x32xf32>
    %cst_18 = arith.constant 8.000000e+00 : f32
    %29 = vector.broadcast %cst_18 : f32 to vector<1x32xf32>
    %30 = arith.divf %28, %29 : vector<1x32xf32>
    %31 = vector.broadcast %30 : vector<1x32xf32> to vector<8x32xf32>
    %32 = arith.subf %26, %31 : vector<8x32xf32>
    %33 = arith.mulf %32, %32 : vector<8x32xf32>
    %cst_19 = arith.constant dense<0.000000e+00> : vector<32xf32>
    %34 = vector.multi_reduction <add>, %33, %cst_19 [0] : vector<8x32xf32> to vector<32xf32>
    %35 = vector.shape_cast %34 : vector<32xf32> to vector<1x32xf32>
    %cst_20 = arith.constant 8.000000e+00 : f32
    %36 = vector.broadcast %cst_20 : f32 to vector<1x32xf32>
    %37 = arith.divf %35, %36 : vector<1x32xf32>
    %c0_21 = arith.constant 0 : index
    %c0_22 = arith.constant 0 : index
    %38 = vector.load %arg6[%c0_21, %c0_22] : memref<1x32xf32, #tpu.memory_space<vmem>>, vector<1x32xf32>
    %cst_23 = arith.constant 9.99999974E-6 : f32
    %39 = vector.broadcast %cst_23 : f32 to vector<1x32xf32>
    %40 = arith.addf %37, %39 : vector<1x32xf32>
    %41 = math.rsqrt %40 : vector<1x32xf32>
    %42 = arith.mulf %38, %41 : vector<1x32xf32>
    %43 = vector.broadcast %42 : vector<1x32xf32> to vector<8x32xf32>
    %44 = arith.mulf %32, %43 : vector<8x32xf32>
    %c0_24 = arith.constant 0 : index
    %c0_25 = arith.constant 0 : index
    %45 = vector.load %arg7[%c0_24, %c0_25] : memref<1x32xf32, #tpu.memory_space<vmem>>, vector<1x32xf32>
    %46 = vector.broadcast %45 : vector<1x32xf32> to vector<8x32xf32>
    %47 = arith.addf %44, %46 : vector<8x32xf32>
    %48 = arith.addf %23, %47 : vector<8x32xf32>
    %c0_26 = arith.constant 0 : index
    %c0_27 = arith.constant 0 : index
    %49 = vector.load %arg8[%c0_26, %c0_27] : memref<8x32xf32, #tpu.memory_space<vmem>>, vector<8x32xf32>
    tpu.vector_store %arg8[%c0_26, %c0_27], %48 {strides = array<i32>} : memref<8x32xf32, #tpu.memory_space<vmem>>, vector<8x32xf32>,
    return
  }
}

module attributes {stable_mosaic.version = 11 : i64} {
  func.func @_conv_bn_kernel(%arg0: memref<2x288xf32, #tpu.memory_space<vmem>>, %arg1: memref<288x64xf32, #tpu.memory_space<vmem>>, %arg2: memref<1x64xf32, #tpu.memory_space<vmem>>, %arg3: memref<1x64xf32, #tpu.memory_space<vmem>>, %arg4: memref<2x64xf32, #tpu.memory_space<vmem>>) attributes {dimension_semantics = [], scalar_prefetch = 0 : i64, scratch_operands = 0 : i64, tpu.core_type = #tpu.core_type<tc>} {
    %c0 = arith.constant 0 : index
    %c0_0 = arith.constant 0 : index
    %0 = vector.load %arg0[%c0, %c0_0] : memref<2x288xf32, #tpu.memory_space<vmem>>, vector<2x288xf32>
    %c0_1 = arith.constant 0 : index
    %c0_2 = arith.constant 0 : index
    %1 = vector.load %arg1[%c0_1, %c0_2] : memref<288x64xf32, #tpu.memory_space<vmem>>, vector<288x64xf32>
    %cst = arith.constant dense<0.000000e+00> : vector<2x64xf32>
    %2 = tpu.matmul %0, %1, %cst {dimension_numbers = #tpu.dot_dimension_numbers<[1], [0], [0], [1], [0, 0, 1, 1], [], []>} : vector<2x288xf32>, vector<288x64xf32>, vector<2x64xf32> -> vector<2x64xf32>
    %cst_3 = arith.constant dense<0.000000e+00> : vector<64xf32>
    %3 = vector.multi_reduction <add>, %2, %cst_3 [0] : vector<2x64xf32> to vector<64xf32>
    %4 = vector.shape_cast %3 : vector<64xf32> to vector<1x64xf32>
    %cst_4 = arith.constant 2.000000e+00 : f32
    %5 = vector.broadcast %cst_4 : f32 to vector<1x64xf32>
    %6 = arith.divf %4, %5 : vector<1x64xf32>
    %7 = vector.broadcast %6 : vector<1x64xf32> to vector<2x64xf32>
    %8 = arith.subf %2, %7 : vector<2x64xf32>
    %9 = arith.mulf %8, %8 : vector<2x64xf32>
    %cst_5 = arith.constant dense<0.000000e+00> : vector<64xf32>
    %10 = vector.multi_reduction <add>, %9, %cst_5 [0] : vector<2x64xf32> to vector<64xf32>
    %11 = vector.shape_cast %10 : vector<64xf32> to vector<1x64xf32>
    %cst_6 = arith.constant 2.000000e+00 : f32
    %12 = vector.broadcast %cst_6 : f32 to vector<1x64xf32>
    %13 = arith.divf %11, %12 : vector<1x64xf32>
    %c0_7 = arith.constant 0 : index
    %c0_8 = arith.constant 0 : index
    %14 = vector.load %arg2[%c0_7, %c0_8] : memref<1x64xf32, #tpu.memory_space<vmem>>, vector<1x64xf32>
    %cst_9 = arith.constant 9.99999974E-6 : f32
    %15 = vector.broadcast %cst_9 : f32 to vector<1x64xf32>
    %16 = arith.addf %13, %15 : vector<1x64xf32>
    %17 = math.rsqrt %16 : vector<1x64xf32>
    %18 = arith.mulf %14, %17 : vector<1x64xf32>
    %19 = vector.broadcast %18 : vector<1x64xf32> to vector<2x64xf32>
    %20 = arith.mulf %8, %19 : vector<2x64xf32>
    %c0_10 = arith.constant 0 : index
    %c0_11 = arith.constant 0 : index
    %21 = vector.load %arg3[%c0_10, %c0_11] : memref<1x64xf32, #tpu.memory_space<vmem>>, vector<1x64xf32>
    %22 = vector.broadcast %21 : vector<1x64xf32> to vector<2x64xf32>
    %23 = arith.addf %20, %22 : vector<2x64xf32>
    %cst_12 = arith.constant 0.000000e+00 : f32
    %24 = vector.broadcast %cst_12 : f32 to vector<2x64xf32>
    %25 = arith.maximumf %23, %24 : vector<2x64xf32>
    %c0_13 = arith.constant 0 : index
    %c0_14 = arith.constant 0 : index
    %26 = vector.load %arg4[%c0_13, %c0_14] : memref<2x64xf32, #tpu.memory_space<vmem>>, vector<2x64xf32>
    tpu.vector_store %arg4[%c0_13, %c0_14], %25 {strides = array<i32>} : memref<2x64xf32, #tpu.memory_space<vmem>>, vector<2x64xf32>,
    return
  }
}

module attributes {stable_mosaic.version = 11 : i64} {
  func.func @_conv_bn_kernel(%arg0: memref<2x576xf32, #tpu.memory_space<vmem>>, %arg1: memref<576x64xf32, #tpu.memory_space<vmem>>, %arg2: memref<1x64xf32, #tpu.memory_space<vmem>>, %arg3: memref<1x64xf32, #tpu.memory_space<vmem>>, %arg4: memref<2x32xf32, #tpu.memory_space<vmem>>, %arg5: memref<32x64xf32, #tpu.memory_space<vmem>>, %arg6: memref<1x64xf32, #tpu.memory_space<vmem>>, %arg7: memref<1x64xf32, #tpu.memory_space<vmem>>, %arg8: memref<2x64xf32, #tpu.memory_space<vmem>>) attributes {dimension_semantics = [], scalar_prefetch = 0 : i64, scratch_operands = 0 : i64, tpu.core_type = #tpu.core_type<tc>} {
    %c0 = arith.constant 0 : index
    %c0_0 = arith.constant 0 : index
    %0 = vector.load %arg0[%c0, %c0_0] : memref<2x576xf32, #tpu.memory_space<vmem>>, vector<2x576xf32>
    %c0_1 = arith.constant 0 : index
    %c0_2 = arith.constant 0 : index
    %1 = vector.load %arg1[%c0_1, %c0_2] : memref<576x64xf32, #tpu.memory_space<vmem>>, vector<576x64xf32>
    %cst = arith.constant dense<0.000000e+00> : vector<2x64xf32>
    %2 = tpu.matmul %0, %1, %cst {dimension_numbers = #tpu.dot_dimension_numbers<[1], [0], [0], [1], [0, 0, 1, 1], [], []>} : vector<2x576xf32>, vector<576x64xf32>, vector<2x64xf32> -> vector<2x64xf32>
    %cst_3 = arith.constant dense<0.000000e+00> : vector<64xf32>
    %3 = vector.multi_reduction <add>, %2, %cst_3 [0] : vector<2x64xf32> to vector<64xf32>
    %4 = vector.shape_cast %3 : vector<64xf32> to vector<1x64xf32>
    %cst_4 = arith.constant 2.000000e+00 : f32
    %5 = vector.broadcast %cst_4 : f32 to vector<1x64xf32>
    %6 = arith.divf %4, %5 : vector<1x64xf32>
    %7 = vector.broadcast %6 : vector<1x64xf32> to vector<2x64xf32>
    %8 = arith.subf %2, %7 : vector<2x64xf32>
    %9 = arith.mulf %8, %8 : vector<2x64xf32>
    %cst_5 = arith.constant dense<0.000000e+00> : vector<64xf32>
    %10 = vector.multi_reduction <add>, %9, %cst_5 [0] : vector<2x64xf32> to vector<64xf32>
    %11 = vector.shape_cast %10 : vector<64xf32> to vector<1x64xf32>
    %cst_6 = arith.constant 2.000000e+00 : f32
    %12 = vector.broadcast %cst_6 : f32 to vector<1x64xf32>
    %13 = arith.divf %11, %12 : vector<1x64xf32>
    %c0_7 = arith.constant 0 : index
    %c0_8 = arith.constant 0 : index
    %14 = vector.load %arg2[%c0_7, %c0_8] : memref<1x64xf32, #tpu.memory_space<vmem>>, vector<1x64xf32>
    %cst_9 = arith.constant 9.99999974E-6 : f32
    %15 = vector.broadcast %cst_9 : f32 to vector<1x64xf32>
    %16 = arith.addf %13, %15 : vector<1x64xf32>
    %17 = math.rsqrt %16 : vector<1x64xf32>
    %18 = arith.mulf %14, %17 : vector<1x64xf32>
    %19 = vector.broadcast %18 : vector<1x64xf32> to vector<2x64xf32>
    %20 = arith.mulf %8, %19 : vector<2x64xf32>
    %c0_10 = arith.constant 0 : index
    %c0_11 = arith.constant 0 : index
    %21 = vector.load %arg3[%c0_10, %c0_11] : memref<1x64xf32, #tpu.memory_space<vmem>>, vector<1x64xf32>
    %22 = vector.broadcast %21 : vector<1x64xf32> to vector<2x64xf32>
    %23 = arith.addf %20, %22 : vector<2x64xf32>
    %c0_12 = arith.constant 0 : index
    %c0_13 = arith.constant 0 : index
    %24 = vector.load %arg4[%c0_12, %c0_13] : memref<2x32xf32, #tpu.memory_space<vmem>>, vector<2x32xf32>
    %c0_14 = arith.constant 0 : index
    %c0_15 = arith.constant 0 : index
    %25 = vector.load %arg5[%c0_14, %c0_15] : memref<32x64xf32, #tpu.memory_space<vmem>>, vector<32x64xf32>
    %cst_16 = arith.constant dense<0.000000e+00> : vector<2x64xf32>
    %26 = tpu.matmul %24, %25, %cst_16 {dimension_numbers = #tpu.dot_dimension_numbers<[1], [0], [0], [1], [0, 0, 1, 1], [], []>} : vector<2x32xf32>, vector<32x64xf32>, vector<2x64xf32> -> vector<2x64xf32>
    %cst_17 = arith.constant dense<0.000000e+00> : vector<64xf32>
    %27 = vector.multi_reduction <add>, %26, %cst_17 [0] : vector<2x64xf32> to vector<64xf32>
    %28 = vector.shape_cast %27 : vector<64xf32> to vector<1x64xf32>
    %cst_18 = arith.constant 2.000000e+00 : f32
    %29 = vector.broadcast %cst_18 : f32 to vector<1x64xf32>
    %30 = arith.divf %28, %29 : vector<1x64xf32>
    %31 = vector.broadcast %30 : vector<1x64xf32> to vector<2x64xf32>
    %32 = arith.subf %26, %31 : vector<2x64xf32>
    %33 = arith.mulf %32, %32 : vector<2x64xf32>
    %cst_19 = arith.constant dense<0.000000e+00> : vector<64xf32>
    %34 = vector.multi_reduction <add>, %33, %cst_19 [0] : vector<2x64xf32> to vector<64xf32>
    %35 = vector.shape_cast %34 : vector<64xf32> to vector<1x64xf32>
    %cst_20 = arith.constant 2.000000e+00 : f32
    %36 = vector.broadcast %cst_20 : f32 to vector<1x64xf32>
    %37 = arith.divf %35, %36 : vector<1x64xf32>
    %c0_21 = arith.constant 0 : index
    %c0_22 = arith.constant 0 : index
    %38 = vector.load %arg6[%c0_21, %c0_22] : memref<1x64xf32, #tpu.memory_space<vmem>>, vector<1x64xf32>
    %cst_23 = arith.constant 9.99999974E-6 : f32
    %39 = vector.broadcast %cst_23 : f32 to vector<1x64xf32>
    %40 = arith.addf %37, %39 : vector<1x64xf32>
    %41 = math.rsqrt %40 : vector<1x64xf32>
    %42 = arith.mulf %38, %41 : vector<1x64xf32>
    %43 = vector.broadcast %42 : vector<1x64xf32> to vector<2x64xf32>
    %44 = arith.mulf %32, %43 : vector<2x64xf32>
    %c0_24 = arith.constant 0 : index
    %c0_25 = arith.constant 0 : index
    %45 = vector.load %arg7[%c0_24, %c0_25] : memref<1x64xf32, #tpu.memory_space<vmem>>, vector<1x64xf32>
    %46 = vector.broadcast %45 : vector<1x64xf32> to vector<2x64xf32>
    %47 = arith.addf %44, %46 : vector<2x64xf32>
    %48 = arith.addf %23, %47 : vector<2x64xf32>
    %c0_26 = arith.constant 0 : index
    %c0_27 = arith.constant 0 : index
    %49 = vector.load %arg8[%c0_26, %c0_27] : memref<2x64xf32, #tpu.memory_space<vmem>>, vector<2x64xf32>
    tpu.vector_store %arg8[%c0_26, %c0_27], %48 {strides = array<i32>} : memref<2x64xf32, #tpu.memory_space<vmem>>, vector<2x64xf32>,
    return
  }
}

module attributes {stable_mosaic.version = 11 : i64} {
  func.func @_decoder_kernel(%arg0: memref<2x1x64xf32, #tpu.memory_space<vmem>>, %arg1: memref<64x10xf32, #tpu.memory_space<vmem>>, %arg2: memref<1x10xf32, #tpu.memory_space<vmem>>, %arg3: memref<2x10xf32, #tpu.memory_space<vmem>>) attributes {dimension_semantics = [], scalar_prefetch = 0 : i64, scratch_operands = 0 : i64, tpu.core_type = #tpu.core_type<tc>} {
    %c0 = arith.constant 0 : index
    %c0_0 = arith.constant 0 : index
    %c0_1 = arith.constant 0 : index
    %0 = vector.load %arg0[%c0, %c0_0, %c0_1] : memref<2x1x64xf32, #tpu.memory_space<vmem>>, vector<2x1x64xf32>
    %cst = arith.constant dense<0.000000e+00> : vector<2x64xf32>
    %1 = vector.multi_reduction <add>, %0, %cst [1] : vector<2x1x64xf32> to vector<2x64xf32>
    %cst_2 = arith.constant 1.000000e+00 : f32
    %2 = vector.broadcast %cst_2 : f32 to vector<2x64xf32>
    %3 = arith.divf %1, %2 : vector<2x64xf32>
    %c0_3 = arith.constant 0 : index
    %c0_4 = arith.constant 0 : index
    %4 = vector.load %arg1[%c0_3, %c0_4] : memref<64x10xf32, #tpu.memory_space<vmem>>, vector<64x10xf32>
    %cst_5 = arith.constant dense<0.000000e+00> : vector<2x10xf32>
    %5 = tpu.matmul %3, %4, %cst_5 {dimension_numbers = #tpu.dot_dimension_numbers<[1], [0], [0], [1], [0, 0, 1, 1], [], []>} : vector<2x64xf32>, vector<64x10xf32>, vector<2x10xf32> -> vector<2x10xf32>
    %c0_6 = arith.constant 0 : index
    %c0_7 = arith.constant 0 : index
    %6 = vector.load %arg2[%c0_6, %c0_7] : memref<1x10xf32, #tpu.memory_space<vmem>>, vector<1x10xf32>
    %7 = vector.broadcast %6 : vector<1x10xf32> to vector<2x10xf32>
    %8 = arith.addf %5, %7 : vector<2x10xf32>
    %c0_8 = arith.constant 0 : index
    %c0_9 = arith.constant 0 : index
    %9 = vector.load %arg3[%c0_8, %c0_9] : memref<2x10xf32, #tpu.memory_space<vmem>>, vector<2x10xf32>
    tpu.vector_store %arg3[%c0_8, %c0_9], %8 {strides = array<i32>} : memref<2x10xf32, #tpu.memory_space<vmem>>, vector<2x10xf32>,
    return
  }
}

</mosaic_0001>

<llo_original>
// kernel: resnet_forward.12
$region0: #{resnet_forward.12}
  #allocation0 [shape = 'u32[]', space=smem, size = 0x4, offset = 0x4, fixed_abs, tag = 'smem constant byte address 0x4 - core index']
  #allocation1 [shape = 'u32[144,128]{1,0:T(1,128)}', space=vmem, size = 0x12000, scoped, tag = 'internal scratch']
  %s0 = inlined_call_operand.vmem [shape: f32[128,8], index: 0, kind: input, shape index: {}]
  %s1 = inlined_call_operand.vmem [shape: f32[128,8], index: 1, kind: input, shape index: {}]
  %s2 = inlined_call_operand.vmem [shape: f32[128,8], index: 2, kind: input, shape index: {}]
  %s3 = inlined_call_operand.vmem [shape: f32[128,8], index: 3, kind: input, shape index: {}]
  %s4 = inlined_call_operand.vmem [shape: f32[128,8], index: 4, kind: input, shape index: {}]
  %s5 = inlined_call_operand.vmem [shape: f32[128,8], index: 5, kind: input, shape index: {}]
  %s6 = inlined_call_operand.vmem [shape: f32[128,8], index: 6, kind: input, shape index: {}]
  %s7 = inlined_call_operand.vmem [shape: f32[128,8], index: 7, kind: input, shape index: {}]
  %s8 = inlined_call_operand.vmem [shape: f32[128,8], index: 8, kind: input, shape index: {}]
  %s9 = inlined_call_operand.vmem [shape: f32[128,8], index: 9, kind: output, shape index: {}]
  %s10 = sld [smem:[#allocation0]]
  $region46: #{resnet_forward.12} parent=0
    _
  %s12 = ssub.s32 1, %s10
  %s13 = scalar_select 0, %s12, %s10
  // Predicated region
  $region2: #{resnet_forward.12} parent=0 // pred_check
    _
  $region3: #{resnet_forward.12} parent=0 // pred_check_branch
    %15 = sbr.rel (0) target = $region5
  $region4: #{resnet_forward.12} parent=0 // pred_region
    _
  $region5: #{resnet_forward.12} parent=0 // pred_fallthru
    _
  // Predicated region
  $region6: #{resnet_forward.12} parent=0 // pred_check
    _
  $region7: #{resnet_forward.12} parent=0 // pred_check_branch
    %17 = sbr.rel (0) target = $region9
  $region8: #{resnet_forward.12} parent=0 // pred_region
    _
  $region9: #{resnet_forward.12} parent=0 // pred_fallthru
    _
  // Predicated region
  $region10: #{resnet_forward.12} parent=0 // pred_check
    _
  $region11: #{resnet_forward.12} parent=0 // pred_check_branch
    %19 = sbr.rel (0) target = $region13
  $region12: #{resnet_forward.12} parent=0 // pred_region
    _
  $region13: #{resnet_forward.12} parent=0 // pred_fallthru
    _
  // Predicated region
  $region14: #{resnet_forward.12} parent=0 // pred_check
    _
  $region15: #{resnet_forward.12} parent=0 // pred_check_branch
    %21 = sbr.rel (0) target = $region17
  $region16: #{resnet_forward.12} parent=0 // pred_region
    _
  $region17: #{resnet_forward.12} parent=0 // pred_fallthru
    _
  // Predicated region
  $region18: #{resnet_forward.12} parent=0 // pred_check
    _
  $region19: #{resnet_forward.12} parent=0 // pred_check_branch
    %23 = sbr.rel (0) target = $region21
  $region20: #{resnet_forward.12} parent=0 // pred_region
    _
  $region21: #{resnet_forward.12} parent=0 // pred_fallthru
    _
  // Predicated region
  $region22: #{resnet_forward.12} parent=0 // pred_check
    _
  $region23: #{resnet_forward.12} parent=0 // pred_check_branch
    %25 = sbr.rel (0) target = $region25
  $region24: #{resnet_forward.12} parent=0 // pred_region
    _
  $region25: #{resnet_forward.12} parent=0 // pred_fallthru
    _
  // Predicated region
  $region26: #{resnet_forward.12} parent=0 // pred_check
    _
  $region27: #{resnet_forward.12} parent=0 // pred_check_branch
    %27 = sbr.rel (0) target = $region29
  $region28: #{resnet_forward.12} parent=0 // pred_region
    _
  $region29: #{resnet_forward.12} parent=0 // pred_fallthru
    _
  // Predicated region
  $region30: #{resnet_forward.12} parent=0 // pred_check
    _
  $region31: #{resnet_forward.12} parent=0 // pred_check_branch
    %29 = sbr.rel (0) target = $region33
  $region32: #{resnet_forward.12} parent=0 // pred_region
    _
  $region33: #{resnet_forward.12} parent=0 // pred_fallthru
    _
  // Predicated region
  $region34: #{resnet_forward.12} parent=0 // pred_check
    _
  $region35: #{resnet_forward.12} parent=0 // pred_check_branch
    %31 = sbr.rel (0) target = $region37
  $region36: #{resnet_forward.12} parent=0 // pred_region
    _
  $region37: #{resnet_forward.12} parent=0 // pred_fallthru
    _
  %v32 = vld [vmem:[%s0] sm:$0xff]
  %v33 = vld [vmem:[%s0 + $0x8] sm:$0xff]
  %v34 = vld [vmem:[%s0 + $0x10] sm:$0xff]
  %v35 = vld [vmem:[%s0 + $0x18] sm:$0xff]
  %v36 = vld [vmem:[%s0 + $0x20] sm:$0xff]
  %v37 = vld [vmem:[%s0 + $0x28] sm:$0xff]
  %v38 = vld [vmem:[%s0 + $0x30] sm:$0xff]
  %v39 = vld [vmem:[%s0 + $0x38] sm:$0xff]
  %v40 = vld [vmem:[%s0 + $0x40] sm:$0xff]
  %v41 = vld [vmem:[%s0 + $0x48] sm:$0xff]
  %v42 = vld [vmem:[%s0 + $0x50] sm:$0xff]
  %v43 = vld [vmem:[%s0 + $0x58] sm:$0xff]
  %v44 = vld [vmem:[%s0 + $0x60] sm:$0xff]
  %v45 = vld [vmem:[%s0 + $0x68] sm:$0xff]
  %v46 = vld [vmem:[%s0 + $0x70] sm:$0xff]
  %v47 = vld [vmem:[%s0 + $0x78] sm:$0xff]
  %v48 = vld [vmem:[%s1] sm:$0xff]
  %v49 = vld [vmem:[%s1 + $0x8] sm:$0xff]
  %v50 = vld [vmem:[%s1 + $0x10] sm:$0xff]
  %v51 = vld [vmem:[%s1 + $0x18] sm:$0xff]
  %v52 = vld [vmem:[%s1 + $0x20] sm:$0xff]
  %v53 = vld [vmem:[%s1 + $0x28] sm:$0xff]
  %v54 = vld [vmem:[%s1 + $0x30] sm:$0xff]
  %v55 = vld [vmem:[%s1 + $0x38] sm:$0xff]
  %v56 = vld [vmem:[%s1 + $0x40] sm:$0xff]
  %v57 = vld [vmem:[%s1 + $0x48] sm:$0xff]
  %v58 = vld [vmem:[%s1 + $0x50] sm:$0xff]
  %v59 = vld [vmem:[%s1 + $0x58] sm:$0xff]
  %v60 = vld [vmem:[%s1 + $0x60] sm:$0xff]
  %v61 = vld [vmem:[%s1 + $0x68] sm:$0xff]
  %v62 = vld [vmem:[%s1 + $0x70] sm:$0xff]
  %v63 = vld [vmem:[%s1 + $0x78] sm:$0xff]
  %v64 = vmax.f32 %v32, %v48
  %v65 = vmax.f32 %v33, %v49
  %v66 = vmax.f32 %v34, %v50
  %v67 = vmax.f32 %v35, %v51
  %v68 = vmax.f32 %v36, %v52
  %v69 = vmax.f32 %v37, %v53
  %v70 = vmax.f32 %v38, %v54
  %v71 = vmax.f32 %v39, %v55
  %v72 = vmax.f32 %v40, %v56
  %v73 = vmax.f32 %v41, %v57
  %v74 = vmax.f32 %v42, %v58
  %v75 = vmax.f32 %v43, %v59
  %v76 = vmax.f32 %v44, %v60
  %v77 = vmax.f32 %v45, %v61
  %v78 = vmax.f32 %v46, %v62
  %v79 = vmax.f32 %v47, %v63
  %v80 = vld [vmem:[%s2] sm:$0xff]
  %v81 = vld [vmem:[%s2 + $0x8] sm:$0xff]
  %v82 = vld [vmem:[%s2 + $0x10] sm:$0xff]
  %v83 = vld [vmem:[%s2 + $0x18] sm:$0xff]
  %v84 = vld [vmem:[%s2 + $0x20] sm:$0xff]
  %v85 = vld [vmem:[%s2 + $0x28] sm:$0xff]
  %v86 = vld [vmem:[%s2 + $0x30] sm:$0xff]
  %v87 = vld [vmem:[%s2 + $0x38] sm:$0xff]
  %v88 = vld [vmem:[%s2 + $0x40] sm:$0xff]
  %v89 = vld [vmem:[%s2 + $0x48] sm:$0xff]
  %v90 = vld [vmem:[%s2 + $0x50] sm:$0xff]
  %v91 = vld [vmem:[%s2 + $0x58] sm:$0xff]
  %v92 = vld [vmem:[%s2 + $0x60] sm:$0xff]
  %v93 = vld [vmem:[%s2 + $0x68] sm:$0xff]
  %v94 = vld [vmem:[%s2 + $0x70] sm:$0xff]
  %v95 = vld [vmem:[%s2 + $0x78] sm:$0xff]
  %v96 = vmax.f32 %v64, %v80
  %v97 = vmax.f32 %v65, %v81
  %v98 = vmax.f32 %v66, %v82
  %v99 = vmax.f32 %v67, %v83
  %v100 = vmax.f32 %v68, %v84
  %v101 = vmax.f32 %v69, %v85
  %v102 = vmax.f32 %v70, %v86
  %v103 = vmax.f32 %v71, %v87
  %v104 = vmax.f32 %v72, %v88
  %v105 = vmax.f32 %v73, %v89
  %v106 = vmax.f32 %v74, %v90
  %v107 = vmax.f32 %v75, %v91
  %v108 = vmax.f32 %v76, %v92
  %v109 = vmax.f32 %v77, %v93
  %v110 = vmax.f32 %v78, %v94
  %v111 = vmax.f32 %v79, %v95
  %v112 = vld [vmem:[%s3] sm:$0xff]
  %v113 = vld [vmem:[%s3 + $0x8] sm:$0xff]
  %v114 = vld [vmem:[%s3 + $0x10] sm:$0xff]
  %v115 = vld [vmem:[%s3 + $0x18] sm:$0xff]
  %v116 = vld [vmem:[%s3 + $0x20] sm:$0xff]
  %v117 = vld [vmem:[%s3 + $0x28] sm:$0xff]
  %v118 = vld [vmem:[%s3 + $0x30] sm:$0xff]
  %v119 = vld [vmem:[%s3 + $0x38] sm:$0xff]
  %v120 = vld [vmem:[%s3 + $0x40] sm:$0xff]
  %v121 = vld [vmem:[%s3 + $0x48] sm:$0xff]
  %v122 = vld [vmem:[%s3 + $0x50] sm:$0xff]
  %v123 = vld [vmem:[%s3 + $0x58] sm:$0xff]
  %v124 = vld [vmem:[%s3 + $0x60] sm:$0xff]
  %v125 = vld [vmem:[%s3 + $0x68] sm:$0xff]
  %v126 = vld [vmem:[%s3 + $0x70] sm:$0xff]
  %v127 = vld [vmem:[%s3 + $0x78] sm:$0xff]
  %v128 = vmax.f32 %v96, %v112
  %v129 = vmax.f32 %v97, %v113
  %v130 = vmax.f32 %v98, %v114
  %v131 = vmax.f32 %v99, %v115
  %v132 = vmax.f32 %v100, %v116
  %v133 = vmax.f32 %v101, %v117
  %v134 = vmax.f32 %v102, %v118
  %v135 = vmax.f32 %v103, %v119
  %v136 = vmax.f32 %v104, %v120
  %v137 = vmax.f32 %v105, %v121
  %v138 = vmax.f32 %v106, %v122
  %v139 = vmax.f32 %v107, %v123
  %v140 = vmax.f32 %v108, %v124
  %v141 = vmax.f32 %v109, %v125
  %v142 = vmax.f32 %v110, %v126
  %v143 = vmax.f32 %v111, %v127
  %v144 = vld [vmem:[%s4] sm:$0xff]
  %v145 = vld [vmem:[%s4 + $0x8] sm:$0xff]
  %v146 = vld [vmem:[%s4 + $0x10] sm:$0xff]
  %v147 = vld [vmem:[%s4 + $0x18] sm:$0xff]
  %v148 = vld [vmem:[%s4 + $0x20] sm:$0xff]
  %v149 = vld [vmem:[%s4 + $0x28] sm:$0xff]
  %v150 = vld [vmem:[%s4 + $0x30] sm:$0xff]
  %v151 = vld [vmem:[%s4 + $0x38] sm:$0xff]
  %v152 = vld [vmem:[%s4 + $0x40] sm:$0xff]
  %v153 = vld [vmem:[%s4 + $0x48] sm:$0xff]
  %v154 = vld [vmem:[%s4 + $0x50] sm:$0xff]
  %v155 = vld [vmem:[%s4 + $0x58] sm:$0xff]
  %v156 = vld [vmem:[%s4 + $0x60] sm:$0xff]
  %v157 = vld [vmem:[%s4 + $0x68] sm:$0xff]
  %v158 = vld [vmem:[%s4 + $0x70] sm:$0xff]
  %v159 = vld [vmem:[%s4 + $0x78] sm:$0xff]
  %v160 = vmax.f32 %v128, %v144
  %v161 = vmax.f32 %v129, %v145
  %v162 = vmax.f32 %v130, %v146
  %v163 = vmax.f32 %v131, %v147
  %v164 = vmax.f32 %v132, %v148
  %v165 = vmax.f32 %v133, %v149
  %v166 = vmax.f32 %v134, %v150
  %v167 = vmax.f32 %v135, %v151
  %v168 = vmax.f32 %v136, %v152
  %v169 = vmax.f32 %v137, %v153
  %v170 = vmax.f32 %v138, %v154
  %v171 = vmax.f32 %v139, %v155
  %v172 = vmax.f32 %v140, %v156
  %v173 = vmax.f32 %v141, %v157
  %v174 = vmax.f32 %v142, %v158
  %v175 = vmax.f32 %v143, %v159
  %v176 = vld [vmem:[%s5] sm:$0xff]
  %v177 = vld [vmem:[%s5 + $0x8] sm:$0xff]
  %v178 = vld [vmem:[%s5 + $0x10] sm:$0xff]
  %v179 = vld [vmem:[%s5 + $0x18] sm:$0xff]
  %v180 = vld [vmem:[%s5 + $0x20] sm:$0xff]
  %v181 = vld [vmem:[%s5 + $0x28] sm:$0xff]
  %v182 = vld [vmem:[%s5 + $0x30] sm:$0xff]
  %v183 = vld [vmem:[%s5 + $0x38] sm:$0xff]
  %v184 = vld [vmem:[%s5 + $0x40] sm:$0xff]
  %v185 = vld [vmem:[%s5 + $0x48] sm:$0xff]
  %v186 = vld [vmem:[%s5 + $0x50] sm:$0xff]
  %v187 = vld [vmem:[%s5 + $0x58] sm:$0xff]
  %v188 = vld [vmem:[%s5 + $0x60] sm:$0xff]
  %v189 = vld [vmem:[%s5 + $0x68] sm:$0xff]
  %v190 = vld [vmem:[%s5 + $0x70] sm:$0xff]
  %v191 = vld [vmem:[%s5 + $0x78] sm:$0xff]
  %v192 = vmax.f32 %v160, %v176
  %v193 = vmax.f32 %v161, %v177
  %v194 = vmax.f32 %v162, %v178
  %v195 = vmax.f32 %v163, %v179
  %v196 = vmax.f32 %v164, %v180
  %v197 = vmax.f32 %v165, %v181
  %v198 = vmax.f32 %v166, %v182
  %v199 = vmax.f32 %v167, %v183
  %v200 = vmax.f32 %v168, %v184
  %v201 = vmax.f32 %v169, %v185
  %v202 = vmax.f32 %v170, %v186
  %v203 = vmax.f32 %v171, %v187
  %v204 = vmax.f32 %v172, %v188
  %v205 = vmax.f32 %v173, %v189
  %v206 = vmax.f32 %v174, %v190
  %v207 = vmax.f32 %v175, %v191
  %v208 = vld [vmem:[%s6] sm:$0xff]
  %v209 = vld [vmem:[%s6 + $0x8] sm:$0xff]
  %v210 = vld [vmem:[%s6 + $0x10] sm:$0xff]
  %v211 = vld [vmem:[%s6 + $0x18] sm:$0xff]
  %v212 = vld [vmem:[%s6 + $0x20] sm:$0xff]
  %v213 = vld [vmem:[%s6 + $0x28] sm:$0xff]
  %v214 = vld [vmem:[%s6 + $0x30] sm:$0xff]
  %v215 = vld [vmem:[%s6 + $0x38] sm:$0xff]
  %v216 = vld [vmem:[%s6 + $0x40] sm:$0xff]
  %v217 = vld [vmem:[%s6 + $0x48] sm:$0xff]
  %v218 = vld [vmem:[%s6 + $0x50] sm:$0xff]
  %v219 = vld [vmem:[%s6 + $0x58] sm:$0xff]
  %v220 = vld [vmem:[%s6 + $0x60] sm:$0xff]
  %v221 = vld [vmem:[%s6 + $0x68] sm:$0xff]
  %v222 = vld [vmem:[%s6 + $0x70] sm:$0xff]
  %v223 = vld [vmem:[%s6 + $0x78] sm:$0xff]
  %v224 = vmax.f32 %v192, %v208
  %v225 = vmax.f32 %v193, %v209
  %v226 = vmax.f32 %v194, %v210
  %v227 = vmax.f32 %v195, %v211
  %v228 = vmax.f32 %v196, %v212
  %v229 = vmax.f32 %v197, %v213
  %v230 = vmax.f32 %v198, %v214
  %v231 = vmax.f32 %v199, %v215
  %v232 = vmax.f32 %v200, %v216
  %v233 = vmax.f32 %v201, %v217
  %v234 = vmax.f32 %v202, %v218
  %v235 = vmax.f32 %v203, %v219
  %v236 = vmax.f32 %v204, %v220
  %v237 = vmax.f32 %v205, %v221
  %v238 = vmax.f32 %v206, %v222
  %v239 = vmax.f32 %v207, %v223
  %v240 = vld [vmem:[%s7] sm:$0xff]
  %v241 = vld [vmem:[%s7 + $0x8] sm:$0xff]
  %v242 = vld [vmem:[%s7 + $0x10] sm:$0xff]
  %v243 = vld [vmem:[%s7 + $0x18] sm:$0xff]
  %v244 = vld [vmem:[%s7 + $0x20] sm:$0xff]
  %v245 = vld [vmem:[%s7 + $0x28] sm:$0xff]
  %v246 = vld [vmem:[%s7 + $0x30] sm:$0xff]
  %v247 = vld [vmem:[%s7 + $0x38] sm:$0xff]
  %v248 = vld [vmem:[%s7 + $0x40] sm:$0xff]
  %v249 = vld [vmem:[%s7 + $0x48] sm:$0xff]
  %v250 = vld [vmem:[%s7 + $0x50] sm:$0xff]
  %v251 = vld [vmem:[%s7 + $0x58] sm:$0xff]
  %v252 = vld [vmem:[%s7 + $0x60] sm:$0xff]
  %v253 = vld [vmem:[%s7 + $0x68] sm:$0xff]
  %v254 = vld [vmem:[%s7 + $0x70] sm:$0xff]
  %v255 = vld [vmem:[%s7 + $0x78] sm:$0xff]
  %v256 = vmax.f32 %v224, %v240
  %v257 = vmax.f32 %v225, %v241
  %v258 = vmax.f32 %v226, %v242
  %v259 = vmax.f32 %v227, %v243
  %v260 = vmax.f32 %v228, %v244
  %v261 = vmax.f32 %v229, %v245
  %v262 = vmax.f32 %v230, %v246
  %v263 = vmax.f32 %v231, %v247
  %v264 = vmax.f32 %v232, %v248
  %v265 = vmax.f32 %v233, %v249
  %v266 = vmax.f32 %v234, %v250
  %v267 = vmax.f32 %v235, %v251
  %v268 = vmax.f32 %v236, %v252
  %v269 = vmax.f32 %v237, %v253
  %v270 = vmax.f32 %v238, %v254
  %v271 = vmax.f32 %v239, %v255
  %v272 = vld [vmem:[%s8] sm:$0xff]
  %v273 = vld [vmem:[%s8 + $0x8] sm:$0xff]
  %v274 = vld [vmem:[%s8 + $0x10] sm:$0xff]
  %v275 = vld [vmem:[%s8 + $0x18] sm:$0xff]
  %v276 = vld [vmem:[%s8 + $0x20] sm:$0xff]
  %v277 = vld [vmem:[%s8 + $0x28] sm:$0xff]
  %v278 = vld [vmem:[%s8 + $0x30] sm:$0xff]
  %v279 = vld [vmem:[%s8 + $0x38] sm:$0xff]
  %v280 = vld [vmem:[%s8 + $0x40] sm:$0xff]
  %v281 = vld [vmem:[%s8 + $0x48] sm:$0xff]
  %v282 = vld [vmem:[%s8 + $0x50] sm:$0xff]
  %v283 = vld [vmem:[%s8 + $0x58] sm:$0xff]
  %v284 = vld [vmem:[%s8 + $0x60] sm:$0xff]
  %v285 = vld [vmem:[%s8 + $0x68] sm:$0xff]
  %v286 = vld [vmem:[%s8 + $0x70] sm:$0xff]
  %v287 = vld [vmem:[%s8 + $0x78] sm:$0xff]
  %v288 = vmax.f32 %v256, %v272
  %v289 = vmax.f32 %v257, %v273
  %v290 = vmax.f32 %v258, %v274
  %v291 = vmax.f32 %v259, %v275
  %v292 = vmax.f32 %v260, %v276
  %v293 = vmax.f32 %v261, %v277
  %v294 = vmax.f32 %v262, %v278
  %v295 = vmax.f32 %v263, %v279
  %v296 = vmax.f32 %v264, %v280
  %v297 = vmax.f32 %v265, %v281
  %v298 = vmax.f32 %v266, %v282
  %v299 = vmax.f32 %v267, %v283
  %v300 = vmax.f32 %v268, %v284
  %v301 = vmax.f32 %v269, %v285
  %v302 = vmax.f32 %v270, %v286
  %v303 = vmax.f32 %v271, %v287
  %vm304 = vcmask 64512
  %305 = vst.msk [vmem:[%s9] sm:$0xff] %vm304, %v288
  %306 = vst.msk [vmem:[%s9 + $0x8] sm:$0xff] %vm304, %v289
  %307 = vst.msk [vmem:[%s9 + $0x10] sm:$0xff] %vm304, %v290
  %308 = vst.msk [vmem:[%s9 + $0x18] sm:$0xff] %vm304, %v291
  %309 = vst.msk [vmem:[%s9 + $0x20] sm:$0xff] %vm304, %v292
  %310 = vst.msk [vmem:[%s9 + $0x28] sm:$0xff] %vm304, %v293
  %311 = vst.msk [vmem:[%s9 + $0x30] sm:$0xff] %vm304, %v294
  %312 = vst.msk [vmem:[%s9 + $0x38] sm:$0xff] %vm304, %v295
  %313 = vst.msk [vmem:[%s9 + $0x40] sm:$0xff] %vm304, %v296
  %314 = vst.msk [vmem:[%s9 + $0x48] sm:$0xff] %vm304, %v297
  %315 = vst.msk [vmem:[%s9 + $0x50] sm:$0xff] %vm304, %v298
  %316 = vst.msk [vmem:[%s9 + $0x58] sm:$0xff] %vm304, %v299
  %317 = vst.msk [vmem:[%s9 + $0x60] sm:$0xff] %vm304, %v300
  %318 = vst.msk [vmem:[%s9 + $0x68] sm:$0xff] %vm304, %v301
  %319 = vst.msk [vmem:[%s9 + $0x70] sm:$0xff] %vm304, %v302
  %320 = vst.msk [vmem:[%s9 + $0x78] sm:$0xff] %vm304, %v303
  // Predicated region
  $region38: #{resnet_forward.12} parent=0 // pred_check
    _
  $region39: #{resnet_forward.12} parent=0 // pred_check_branch
    %322 = sbr.rel (0) target = $region41
  $region40: #{resnet_forward.12} parent=0 // pred_region
    _
  $region41: #{resnet_forward.12} parent=0 // pred_fallthru
    _
  // Predicated region
  $region42: #{resnet_forward.12} parent=0 // pred_check
    _
  $region43: #{resnet_forward.12} parent=0 // pred_check_branch
    %324 = sbr.rel (0) target = $region45
  $region44: #{resnet_forward.12} parent=0 // pred_region
    _
  $region45: #{resnet_forward.12} parent=0 // pred_fallthru
    _

// kernel: resnet_forward.13
$region0: #{resnet_forward.13}
  #allocation0 [shape = 'u32[]', space=smem, size = 0x4, offset = 0x4, fixed_abs, tag = 'smem constant byte address 0x4 - core index']
  #allocation1 [shape = 'u32[144,128]{1,0:T(1,128)}', space=vmem, size = 0x12000, scoped, tag = 'internal scratch']
  %s0 = inlined_call_operand.vmem [shape: f32[128,72], index: 0, kind: input, shape index: {}]
  %s1 = inlined_call_operand.vmem [shape: f32[72,8], index: 1, kind: input, shape index: {}]
  %s2 = inlined_call_operand.vmem [shape: f32[1,8], index: 2, kind: input, shape index: {}]
  %s3 = inlined_call_operand.vmem [shape: f32[1,8], index: 3, kind: input, shape index: {}]
  %s4 = inlined_call_operand.vmem [shape: f32[128,8], index: 4, kind: output, shape index: {}]
  %s5 = sld [smem:[#allocation0]]
  $region26: #{resnet_forward.13} parent=0
    _
  %s7 = ssub.s32 1, %s5
  %s8 = scalar_select 0, %s7, %s5
  // Predicated region
  $region2: #{resnet_forward.13} parent=0 // pred_check
    _
  $region3: #{resnet_forward.13} parent=0 // pred_check_branch
    %10 = sbr.rel (0) target = $region5
  $region4: #{resnet_forward.13} parent=0 // pred_region
    _
  $region5: #{resnet_forward.13} parent=0 // pred_fallthru
    _
  // Predicated region
  $region6: #{resnet_forward.13} parent=0 // pred_check
    _
  $region7: #{resnet_forward.13} parent=0 // pred_check_branch
    %12 = sbr.rel (0) target = $region9
  $region8: #{resnet_forward.13} parent=0 // pred_region
    _
  $region9: #{resnet_forward.13} parent=0 // pred_fallthru
    _
  // Predicated region
  $region10: #{resnet_forward.13} parent=0 // pred_check
    _
  $region11: #{resnet_forward.13} parent=0 // pred_check_branch
    %14 = sbr.rel (0) target = $region13
  $region12: #{resnet_forward.13} parent=0 // pred_region
    _
  $region13: #{resnet_forward.13} parent=0 // pred_fallthru
    _
  // Predicated region
  $region14: #{resnet_forward.13} parent=0 // pred_check
    _
  $region15: #{resnet_forward.13} parent=0 // pred_check_branch
    %16 = sbr.rel (0) target = $region17
  $region16: #{resnet_forward.13} parent=0 // pred_region
    _
  $region17: #{resnet_forward.13} parent=0 // pred_fallthru
    _
  %v17 = vld [vmem:[%s0] sm:$0xff]
  %v18 = vld [vmem:[%s0 + $0x8] sm:$0xff]
  %v19 = vld [vmem:[%s0 + $0x10] sm:$0xff]
  %v20 = vld [vmem:[%s0 + $0x18] sm:$0xff]
  %v21 = vld [vmem:[%s0 + $0x20] sm:$0xff]
  %v22 = vld [vmem:[%s0 + $0x28] sm:$0xff]
  %v23 = vld [vmem:[%s0 + $0x30] sm:$0xff]
  %v24 = vld [vmem:[%s0 + $0x38] sm:$0xff]
  %v25 = vld [vmem:[%s0 + $0x40] sm:$0xff]
  %v26 = vld [vmem:[%s0 + $0x48] sm:$0xff]
  %v27 = vld [vmem:[%s0 + $0x50] sm:$0xff]
  %v28 = vld [vmem:[%s0 + $0x58] sm:$0xff]
  %v29 = vld [vmem:[%s0 + $0x60] sm:$0xff]
  %v30 = vld [vmem:[%s0 + $0x68] sm:$0xff]
  %v31 = vld [vmem:[%s0 + $0x70] sm:$0xff]
  %v32 = vld [vmem:[%s0 + $0x78] sm:$0xff]
  %v33 = vld [vmem:[%s1] sm:$0xff]
  %v34 = vld [vmem:[%s1 + $0x8] sm:$0xff]
  %v35 = vld [vmem:[%s1 + $0x10] sm:$0xff]
  %v36 = vld [vmem:[%s1 + $0x18] sm:$0xff]
  %v37 = vld [vmem:[%s1 + $0x20] sm:$0xff]
  %v38 = vld [vmem:[%s1 + $0x28] sm:$0xff]
  %v39 = vld [vmem:[%s1 + $0x30] sm:$0xff]
  %v40 = vld [vmem:[%s1 + $0x38] sm:$0xff]
  %v41 = vld [vmem:[%s1 + $0x40] sm:$0xff]
  %vm42 = vcmask 588800
  %v44 = vsel %vm42, %v17, 0
  %v47 = vsel %vm42, %v18, 0
  %v50 = vsel %vm42, %v19, 0
  %v53 = vsel %vm42, %v20, 0
  %v56 = vsel %vm42, %v21, 0
  %v59 = vsel %vm42, %v22, 0
  %v62 = vsel %vm42, %v23, 0
  %v65 = vsel %vm42, %v24, 0
  %v68 = vsel %vm42, %v25, 0
  %v71 = vsel %vm42, %v26, 0
  %v74 = vsel %vm42, %v27, 0
  %v77 = vsel %vm42, %v28, 0
  %v80 = vsel %vm42, %v29, 0
  %v83 = vsel %vm42, %v30, 0
  %v86 = vsel %vm42, %v31, 0
  %v89 = vsel %vm42, %v32, 0
  %91 = vmatprep.subr.mxu0 0.0
  %92 = vmatpush1.msra.mxu0 %v33
  %93 = vmatprep.subr.mxu0 0.0
  %94 = vmatpush1.msra.mxu0 %v34
  %95 = vmatprep.subr.mxu0 0.0
  %96 = vmatpush1.msra.mxu0 %v35
  %97 = vmatprep.subr.mxu0 0.0
  %98 = vmatpush1.msra.mxu0 %v36
  %99 = vmatprep.subr.mxu0 0.0
  %100 = vmatpush1.msra.mxu0 %v37
  %101 = vmatprep.subr.mxu0 0.0
  %102 = vmatpush1.msra.mxu0 %v38
  %103 = vmatprep.subr.mxu0 0.0
  %104 = vmatpush1.msra.mxu0 %v39
  %105 = vmatprep.subr.mxu0 0.0
  %106 = vmatpush1.msra.mxu0 %v40
  %107 = vmatprep.subr.mxu0 0.0
  %108 = vmatpush1.msra.mxu0 %v41
  %109 = vmatprep.subr.mxu0 0.0
  %110 = vmatpush1.msra.mxu0 0.0
  %111 = vmatprep.subr.mxu0 0.0
  %112 = vmatpush1.msra.mxu0 0.0
  %113 = vmatprep.subr.mxu0 0.0
  %114 = vmatpush1.msra.mxu0 0.0
  %115 = vmatprep.subr.mxu0 0.0
  %116 = vmatpush1.msra.mxu0 0.0
  %117 = vmatprep.subr.mxu0 0.0
  %118 = vmatpush1.msra.mxu0 0.0
  %119 = vmatprep.subr.mxu0 0.0
  %120 = vmatpush1.msra.mxu0 0.0
  %121 = vmatprep.subr.mxu0 0.0
  %122 = vmatpush1.msra.mxu0 0.0
  %123 = vmatprep.subr.mxu0 0.0
  %124 = vmatpush1.msra.mxu0 0.0
  %125 = vmatprep.subr.mxu0 0.0
  %126 = vmatpush1.msra.mxu0 0.0
  %127 = vmatprep.subr.mxu0 0.0
  %128 = vmatpush1.msra.mxu0 0.0
  %129 = vmatprep.subr.mxu0 0.0
  %130 = vmatpush1.msra.mxu0 0.0
  %131 = vmatprep.subr.mxu0 0.0
  %132 = vmatpush1.msra.mxu0 0.0
  %133 = vmatprep.subr.mxu0 0.0
  %134 = vmatpush1.msra.mxu0 0.0
  %135 = vmatprep.subr.mxu0 0.0
  %136 = vmatpush1.msra.mxu0 0.0
  %137 = vmatprep.subr.mxu0 0.0
  %138 = vmatpush1.msra.mxu0 0.0
  %139 = vmatprep.subr.mxu0 0.0
  %140 = vmatpush1.msra.mxu0 0.0
  %141 = vmatprep.subr.mxu0 0.0
  %142 = vmatpush1.msra.mxu0 0.0
  %143 = vmatprep.subr.mxu0 0.0
  %144 = vmatpush1.msra.mxu0 0.0
  %145 = vmatprep.subr.mxu0 0.0
  %146 = vmatpush1.msra.mxu0 0.0
  %147 = vmatprep.subr.mxu0 0.0
  %148 = vmatpush1.msra.mxu0 0.0
  %149 = vmatprep.subr.mxu0 0.0
  %150 = vmatpush1.msra.mxu0 0.0
  %151 = vmatprep.subr.mxu0 0.0
  %152 = vmatpush1.msra.mxu0 0.0
  %153 = vmatprep.subr.mxu0 0.0
  %154 = vmatpush1.msra.mxu0 0.0
  %155 = vmatprep.mubr.f32.mxu0 0.0
  %156 = vmatmul.mubr.f32.gmra.mrb[0].mxu0 %v44
  %v157 = vpop.f32.mrb[0].mxu0
  %v158 = vadd.f32 0.0, %v157
  %v159 = vpop.f32.mrb[0].mxu0
  %160 = vmatprep.mubr.f32.mxu0 0.0
  %161 = vmatmul.mubr.f32.gmra.mrb[0].mxu0 %v47
  %v162 = vpop.f32.mrb[0].mxu0
  %v163 = vadd.f32 0.0, %v162
  %v164 = vpop.f32.mrb[0].mxu0
  %165 = vmatprep.mubr.f32.mxu0 0.0
  %166 = vmatmul.mubr.f32.gmra.mrb[0].mxu0 %v50
  %v167 = vpop.f32.mrb[0].mxu0
  %v168 = vadd.f32 0.0, %v167
  %v169 = vpop.f32.mrb[0].mxu0
  %170 = vmatprep.mubr.f32.mxu0 0.0
  %171 = vmatmul.mubr.f32.gmra.mrb[0].mxu0 %v53
  %v172 = vpop.f32.mrb[0].mxu0
  %v173 = vadd.f32 0.0, %v172
  %v174 = vpop.f32.mrb[0].mxu0
  %175 = vmatprep.mubr.f32.mxu0 0.0
  %176 = vmatmul.mubr.f32.gmra.mrb[0].mxu0 %v56
  %v177 = vpop.f32.mrb[0].mxu0
  %v178 = vadd.f32 0.0, %v177
  %v179 = vpop.f32.mrb[0].mxu0
  %180 = vmatprep.mubr.f32.mxu0 0.0
  %181 = vmatmul.mubr.f32.gmra.mrb[0].mxu0 %v59
  %v182 = vpop.f32.mrb[0].mxu0
  %v183 = vadd.f32 0.0, %v182
  %v184 = vpop.f32.mrb[0].mxu0
  %185 = vmatprep.mubr.f32.mxu0 0.0
  %186 = vmatmul.mubr.f32.gmra.mrb[0].mxu0 %v62
  %v187 = vpop.f32.mrb[0].mxu0
  %v188 = vadd.f32 0.0, %v187
  %v189 = vpop.f32.mrb[0].mxu0
  %190 = vmatprep.mubr.f32.mxu0 0.0
  %191 = vmatmul.mubr.f32.gmra.mrb[0].mxu0 %v65
  %v192 = vpop.f32.mrb[0].mxu0
  %v193 = vadd.f32 0.0, %v192
  %v194 = vpop.f32.mrb[0].mxu0
  %195 = vmatprep.mubr.f32.mxu0 0.0
  %196 = vmatmul.mubr.f32.gmra.mrb[0].mxu0 %v68
  %v197 = vpop.f32.mrb[0].mxu0
  %v198 = vadd.f32 0.0, %v197
  %v199 = vpop.f32.mrb[0].mxu0
  %200 = vmatprep.mubr.f32.mxu0 0.0
  %201 = vmatmul.mubr.f32.gmra.mrb[0].mxu0 %v71
  %v202 = vpop.f32.mrb[0].mxu0
  %v203 = vadd.f32 0.0, %v202
  %v204 = vpop.f32.mrb[0].mxu0
  %205 = vmatprep.mubr.f32.mxu0 0.0
  %206 = vmatmul.mubr.f32.gmra.mrb[0].mxu0 %v74
  %v207 = vpop.f32.mrb[0].mxu0
  %v208 = vadd.f32 0.0, %v207
  %v209 = vpop.f32.mrb[0].mxu0
  %210 = vmatprep.mubr.f32.mxu0 0.0
  %211 = vmatmul.mubr.f32.gmra.mrb[0].mxu0 %v77
  %v212 = vpop.f32.mrb[0].mxu0
  %v213 = vadd.f32 0.0, %v212
  %v214 = vpop.f32.mrb[0].mxu0
  %215 = vmatprep.mubr.f32.mxu0 0.0
  %216 = vmatmul.mubr.f32.gmra.mrb[0].mxu0 %v80
  %v217 = vpop.f32.mrb[0].mxu0
  %v218 = vadd.f32 0.0, %v217
  %v219 = vpop.f32.mrb[0].mxu0
  %220 = vmatprep.mubr.f32.mxu0 0.0
  %221 = vmatmul.mubr.f32.gmra.mrb[0].mxu0 %v83
  %v222 = vpop.f32.mrb[0].mxu0
  %v223 = vadd.f32 0.0, %v222
  %v224 = vpop.f32.mrb[0].mxu0
  %225 = vmatprep.mubr.f32.mxu0 0.0
  %226 = vmatmul.mubr.f32.gmra.mrb[0].mxu0 %v86
  %v227 = vpop.f32.mrb[0].mxu0
  %v228 = vadd.f32 0.0, %v227
  %v229 = vpop.f32.mrb[0].mxu0
  %230 = vmatprep.mubr.f32.mxu0 0.0
  %231 = vmatmul.mubr.f32.gmra.mrb[0].mxu0 %v89
  %v232 = vpop.f32.mrb[0].mxu0
  %v233 = vadd.f32 0.0, %v232
  %v234 = vpop.f32.mrb[0].mxu0
  %235 = vdwg.mxu0
  %vm236 = vcmask 64512
  %v237 = vsel %vm236, %v158, 0.0
  %v238 = vsel %vm236, %v163, 0.0
  %v239 = vadd.f32 %v237, %v238
  %v240 = vsel %vm236, %v168, 0.0
  %v241 = vadd.f32 %v239, %v240
  %v242 = vsel %vm236, %v173, 0.0
  %v243 = vadd.f32 %v241, %v242
  %v244 = vsel %vm236, %v178, 0.0
  %v245 = vadd.f32 %v243, %v244
  %v246 = vsel %vm236, %v183, 0.0
  %v247 = vadd.f32 %v245, %v246
  %v248 = vsel %vm236, %v188, 0.0
  %v249 = vadd.f32 %v247, %v248
  %v250 = vsel %vm236, %v193, 0.0
  %v251 = vadd.f32 %v249, %v250
  %v252 = vsel %vm236, %v198, 0.0
  %v253 = vadd.f32 %v251, %v252
  %v254 = vsel %vm236, %v203, 0.0
  %v255 = vadd.f32 %v253, %v254
  %v256 = vsel %vm236, %v208, 0.0
  %v257 = vadd.f32 %v255, %v256
  %v258 = vsel %vm236, %v213, 0.0
  %v259 = vadd.f32 %v257, %v258
  %v260 = vsel %vm236, %v218, 0.0
  %v261 = vadd.f32 %v259, %v260
  %v262 = vsel %vm236, %v223, 0.0
  %v263 = vadd.f32 %v261, %v262
  %v264 = vsel %vm236, %v228, 0.0
  %v265 = vadd.f32 %v263, %v264
  %v266 = vsel %vm236, %v233, 0.0
  %v267 = vadd.f32 %v265, %v266
  %v268 = vrot.slane %v267, 4
  %v269 = vadd.f32 %v267, %v268
  %v270 = vrot.slane %v269, 2
  %v271 = vadd.f32 %v269, %v270
  %v272 = vrot.slane %v271, 1
  %v273 = vadd.f32 %v271, %v272
  %v274 = vrcp.pop 128.0
  %v275 = vmul.f32 %v273, %v274
  %v276 = vsub.f32 %v158, %v275
  %v277 = vsub.f32 %v163, %v275
  %v278 = vsub.f32 %v168, %v275
  %v279 = vsub.f32 %v173, %v275
  %v280 = vsub.f32 %v178, %v275
  %v281 = vsub.f32 %v183, %v275
  %v282 = vsub.f32 %v188, %v275
  %v283 = vsub.f32 %v193, %v275
  %v284 = vsub.f32 %v198, %v275
  %v285 = vsub.f32 %v203, %v275
  %v286 = vsub.f32 %v208, %v275
  %v287 = vsub.f32 %v213, %v275
  %v288 = vsub.f32 %v218, %v275
  %v289 = vsub.f32 %v223, %v275
  %v290 = vsub.f32 %v228, %v275
  %v291 = vsub.f32 %v233, %v275
  %v292 = vmul.f32 %v276, %v276
  %v293 = vmul.f32 %v277, %v277
  %v294 = vmul.f32 %v278, %v278
  %v295 = vmul.f32 %v279, %v279
  %v296 = vmul.f32 %v280, %v280
  %v297 = vmul.f32 %v281, %v281
  %v298 = vmul.f32 %v282, %v282
  %v299 = vmul.f32 %v283, %v283
  %v300 = vmul.f32 %v284, %v284
  %v301 = vmul.f32 %v285, %v285
  %v302 = vmul.f32 %v286, %v286
  %v303 = vmul.f32 %v287, %v287
  %v304 = vmul.f32 %v288, %v288
  %v305 = vmul.f32 %v289, %v289
  %v306 = vmul.f32 %v290, %v290
  %v307 = vmul.f32 %v291, %v291
  %v308 = vsel %vm236, %v292, 0.0
  %v309 = vsel %vm236, %v293, 0.0
  %v310 = vadd.f32 %v308, %v309
  %v311 = vsel %vm236, %v294, 0.0
  %v312 = vadd.f32 %v310, %v311
  %v313 = vsel %vm236, %v295, 0.0
  %v314 = vadd.f32 %v312, %v313
  %v315 = vsel %vm236, %v296, 0.0
  %v316 = vadd.f32 %v314, %v315
  %v317 = vsel %vm236, %v297, 0.0
  %v318 = vadd.f32 %v316, %v317
  %v319 = vsel %vm236, %v298, 0.0
  %v320 = vadd.f32 %v318, %v319
  %v321 = vsel %vm236, %v299, 0.0
  %v322 = vadd.f32 %v320, %v321
  %v323 = vsel %vm236, %v300, 0.0
  %v324 = vadd.f32 %v322, %v323
  %v325 = vsel %vm236, %v301, 0.0
  %v326 = vadd.f32 %v324, %v325
  %v327 = vsel %vm236, %v302, 0.0
  %v328 = vadd.f32 %v326, %v327
  %v329 = vsel %vm236, %v303, 0.0
  %v330 = vadd.f32 %v328, %v329
  %v331 = vsel %vm236, %v304, 0.0
  %v332 = vadd.f32 %v330, %v331
  %v333 = vsel %vm236, %v305, 0.0
  %v334 = vadd.f32 %v332, %v333
  %v335 = vsel %vm236, %v306, 0.0
  %v336 = vadd.f32 %v334, %v335
  %v337 = vsel %vm236, %v307, 0.0
  %v338 = vadd.f32 %v336, %v337
  %v339 = vrot.slane %v338, 4
  %v340 = vadd.f32 %v338, %v339
  %v341 = vrot.slane %v340, 2
  %v342 = vadd.f32 %v340, %v341
  %v343 = vrot.slane %v342, 1
  %v344 = vadd.f32 %v342, %v343
  %v345 = vmul.f32 %v344, %v274
  %v346 = vld [vmem:[%s2] sm:$0x1]
  %v347 = vadd.f32 %v345, 1e-05
  %v348 = vrsqrt.pop %v347
  %v349 = vmul.f32 %v346, %v348
  %v351 = vlaneseq
  %v352 = vshrl.u32 %v351, 7
  %v353 = vsub.s32 0, %v352
  %v354 = vrot.slane %v349, %v353
  %v356 = vmul.f32 %v276, %v354
  %v357 = vmul.f32 %v277, %v354
  %v358 = vmul.f32 %v278, %v354
  %v359 = vmul.f32 %v279, %v354
  %v360 = vmul.f32 %v280, %v354
  %v361 = vmul.f32 %v281, %v354
  %v362 = vmul.f32 %v282, %v354
  %v363 = vmul.f32 %v283, %v354
  %v364 = vmul.f32 %v284, %v354
  %v365 = vmul.f32 %v285, %v354
  %v366 = vmul.f32 %v286, %v354
  %v367 = vmul.f32 %v287, %v354
  %v368 = vmul.f32 %v288, %v354
  %v369 = vmul.f32 %v289, %v354
  %v370 = vmul.f32 %v290, %v354
  %v371 = vmul.f32 %v291, %v354
  %v372 = vld [vmem:[%s3] sm:$0x1]
  %v374 = vlaneseq
  %v375 = vshrl.u32 %v374, 7
  %v376 = vsub.s32 0, %v375
  %v377 = vrot.slane %v372, %v376
  %v379 = vadd.f32 %v356, %v377
  %v380 = vadd.f32 %v357, %v377
  %v381 = vadd.f32 %v358, %v377
  %v382 = vadd.f32 %v359, %v377
  %v383 = vadd.f32 %v360, %v377
  %v384 = vadd.f32 %v361, %v377
  %v385 = vadd.f32 %v362, %v377
  %v386 = vadd.f32 %v363, %v377
  %v387 = vadd.f32 %v364, %v377
  %v388 = vadd.f32 %v365, %v377
  %v389 = vadd.f32 %v366, %v377
  %v390 = vadd.f32 %v367, %v377
  %v391 = vadd.f32 %v368, %v377
  %v392 = vadd.f32 %v369, %v377
  %v393 = vadd.f32 %v370, %v377
  %v394 = vadd.f32 %v371, %v377
  %v395 = vmax.f32 %v379, 0.0
  %v396 = vmax.f32 %v380, 0.0
  %v397 = vmax.f32 %v381, 0.0
  %v398 = vmax.f32 %v382, 0.0
  %v399 = vmax.f32 %v383, 0.0
  %v400 = vmax.f32 %v384, 0.0
  %v401 = vmax.f32 %v385, 0.0
  %v402 = vmax.f32 %v386, 0.0
  %v403 = vmax.f32 %v387, 0.0
  %v404 = vmax.f32 %v388, 0.0
  %v405 = vmax.f32 %v389, 0.0
  %v406 = vmax.f32 %v390, 0.0
  %v407 = vmax.f32 %v391, 0.0
  %v408 = vmax.f32 %v392, 0.0
  %v409 = vmax.f32 %v393, 0.0
  %v410 = vmax.f32 %v394, 0.0
  %411 = vst.msk [vmem:[%s4] sm:$0xff] %vm236, %v395
  %412 = vst.msk [vmem:[%s4 + $0x8] sm:$0xff] %vm236, %v396
  %413 = vst.msk [vmem:[%s4 + $0x10] sm:$0xff] %vm236, %v397
  %414 = vst.msk [vmem:[%s4 + $0x18] sm:$0xff] %vm236, %v398
  %415 = vst.msk [vmem:[%s4 + $0x20] sm:$0xff] %vm236, %v399
  %416 = vst.msk [vmem:[%s4 + $0x28] sm:$0xff] %vm236, %v400
  %417 = vst.msk [vmem:[%s4 + $0x30] sm:$0xff] %vm236, %v401
  %418 = vst.msk [vmem:[%s4 + $0x38] sm:$0xff] %vm236, %v402
  %419 = vst.msk [vmem:[%s4 + $0x40] sm:$0xff] %vm236, %v403
  %420 = vst.msk [vmem:[%s4 + $0x48] sm:$0xff] %vm236, %v404
  %421 = vst.msk [vmem:[%s4 + $0x50] sm:$0xff] %vm236, %v405
  %422 = vst.msk [vmem:[%s4 + $0x58] sm:$0xff] %vm236, %v406
  %423 = vst.msk [vmem:[%s4 + $0x60] sm:$0xff] %vm236, %v407
  %424 = vst.msk [vmem:[%s4 + $0x68] sm:$0xff] %vm236, %v408
  %425 = vst.msk [vmem:[%s4 + $0x70] sm:$0xff] %vm236, %v409
  %426 = vst.msk [vmem:[%s4 + $0x78] sm:$0xff] %vm236, %v410
  // Predicated region
  $region18: #{resnet_forward.13} parent=0 // pred_check
    _
  $region19: #{resnet_forward.13} parent=0 // pred_check_branch
    %428 = sbr.rel (0) target = $region21
  $region20: #{resnet_forward.13} parent=0 // pred_region
    _
  $region21: #{resnet_forward.13} parent=0 // pred_fallthru
    _
  // Predicated region
  $region22: #{resnet_forward.13} parent=0 // pred_check
    _
  $region23: #{resnet_forward.13} parent=0 // pred_check_branch
    %430 = sbr.rel (0) target = $region25
  $region24: #{resnet_forward.13} parent=0 // pred_region
    _
  $region25: #{resnet_forward.13} parent=0 // pred_fallthru
    _

// kernel: resnet_forward.14
$region0: #{resnet_forward.14}
  #allocation0 [shape = 'u32[]', space=smem, size = 0x4, offset = 0x4, fixed_abs, tag = 'smem constant byte address 0x4 - core index']
  #allocation1 [shape = 'u32[144,128]{1,0:T(1,128)}', space=vmem, size = 0x12000, scoped, tag = 'internal scratch']
  %s0 = inlined_call_operand.vmem [shape: f32[128,72], index: 0, kind: input, shape index: {}]
  %s1 = inlined_call_operand.vmem [shape: f32[72,8], index: 1, kind: input, shape index: {}]
  %s2 = inlined_call_operand.vmem [shape: f32[1,8], index: 2, kind: input, shape index: {}]
  %s3 = inlined_call_operand.vmem [shape: f32[1,8], index: 3, kind: input, shape index: {}]
  %s4 = inlined_call_operand.vmem [shape: f32[128,8], index: 4, kind: input, shape index: {}]
  %s5 = inlined_call_operand.vmem [shape: f32[128,8], index: 5, kind: output, shape index: {}]
  %s6 = sld [smem:[#allocation0]]
  $region30: #{resnet_forward.14} parent=0
    _
  %s8 = ssub.s32 1, %s6
  %s9 = scalar_select 0, %s8, %s6
  // Predicated region
  $region2: #{resnet_forward.14} parent=0 // pred_check
    _
  $region3: #{resnet_forward.14} parent=0 // pred_check_branch
    %11 = sbr.rel (0) target = $region5
  $region4: #{resnet_forward.14} parent=0 // pred_region
    _
  $region5: #{resnet_forward.14} parent=0 // pred_fallthru
    _
  // Predicated region
  $region6: #{resnet_forward.14} parent=0 // pred_check
    _
  $region7: #{resnet_forward.14} parent=0 // pred_check_branch
    %13 = sbr.rel (0) target = $region9
  $region8: #{resnet_forward.14} parent=0 // pred_region
    _
  $region9: #{resnet_forward.14} parent=0 // pred_fallthru
    _
  // Predicated region
  $region10: #{resnet_forward.14} parent=0 // pred_check
    _
  $region11: #{resnet_forward.14} parent=0 // pred_check_branch
    %15 = sbr.rel (0) target = $region13
  $region12: #{resnet_forward.14} parent=0 // pred_region
    _
  $region13: #{resnet_forward.14} parent=0 // pred_fallthru
    _
  // Predicated region
  $region14: #{resnet_forward.14} parent=0 // pred_check
    _
  $region15: #{resnet_forward.14} parent=0 // pred_check_branch
    %17 = sbr.rel (0) target = $region17
  $region16: #{resnet_forward.14} parent=0 // pred_region
    _
  $region17: #{resnet_forward.14} parent=0 // pred_fallthru
    _
  // Predicated region
  $region18: #{resnet_forward.14} parent=0 // pred_check
    _
  $region19: #{resnet_forward.14} parent=0 // pred_check_branch
    %19 = sbr.rel (0) target = $region21
  $region20: #{resnet_forward.14} parent=0 // pred_region
    _
  $region21: #{resnet_forward.14} parent=0 // pred_fallthru
    _
  %v20 = vld [vmem:[%s0] sm:$0xff]
  %v21 = vld [vmem:[%s0 + $0x8] sm:$0xff]
  %v22 = vld [vmem:[%s0 + $0x10] sm:$0xff]
  %v23 = vld [vmem:[%s0 + $0x18] sm:$0xff]
  %v24 = vld [vmem:[%s0 + $0x20] sm:$0xff]
  %v25 = vld [vmem:[%s0 + $0x28] sm:$0xff]
  %v26 = vld [vmem:[%s0 + $0x30] sm:$0xff]
  %v27 = vld [vmem:[%s0 + $0x38] sm:$0xff]
  %v28 = vld [vmem:[%s0 + $0x40] sm:$0xff]
  %v29 = vld [vmem:[%s0 + $0x48] sm:$0xff]
  %v30 = vld [vmem:[%s0 + $0x50] sm:$0xff]
  %v31 = vld [vmem:[%s0 + $0x58] sm:$0xff]
  %v32 = vld [vmem:[%s0 + $0x60] sm:$0xff]
  %v33 = vld [vmem:[%s0 + $0x68] sm:$0xff]
  %v34 = vld [vmem:[%s0 + $0x70] sm:$0xff]
  %v35 = vld [vmem:[%s0 + $0x78] sm:$0xff]
  %v36 = vld [vmem:[%s1] sm:$0xff]
  %v37 = vld [vmem:[%s1 + $0x8] sm:$0xff]
  %v38 = vld [vmem:[%s1 + $0x10] sm:$0xff]
  %v39 = vld [vmem:[%s1 + $0x18] sm:$0xff]
  %v40 = vld [vmem:[%s1 + $0x20] sm:$0xff]
  %v41 = vld [vmem:[%s1 + $0x28] sm:$0xff]
  %v42 = vld [vmem:[%s1 + $0x30] sm:$0xff]
  %v43 = vld [vmem:[%s1 + $0x38] sm:$0xff]
  %v44 = vld [vmem:[%s1 + $0x40] sm:$0xff]
  %vm45 = vcmask 588800
  %v47 = vsel %vm45, %v20, 0
  %v50 = vsel %vm45, %v21, 0
  %v53 = vsel %vm45, %v22, 0
  %v56 = vsel %vm45, %v23, 0
  %v59 = vsel %vm45, %v24, 0
  %v62 = vsel %vm45, %v25, 0
  %v65 = vsel %vm45, %v26, 0
  %v68 = vsel %vm45, %v27, 0
  %v71 = vsel %vm45, %v28, 0
  %v74 = vsel %vm45, %v29, 0
  %v77 = vsel %vm45, %v30, 0
  %v80 = vsel %vm45, %v31, 0
  %v83 = vsel %vm45, %v32, 0
  %v86 = vsel %vm45, %v33, 0
  %v89 = vsel %vm45, %v34, 0
  %v92 = vsel %vm45, %v35, 0
  %94 = vmatprep.subr.mxu0 0.0
  %95 = vmatpush1.msra.mxu0 %v36
  %96 = vmatprep.subr.mxu0 0.0
  %97 = vmatpush1.msra.mxu0 %v37
  %98 = vmatprep.subr.mxu0 0.0
  %99 = vmatpush1.msra.mxu0 %v38
  %100 = vmatprep.subr.mxu0 0.0
  %101 = vmatpush1.msra.mxu0 %v39
  %102 = vmatprep.subr.mxu0 0.0
  %103 = vmatpush1.msra.mxu0 %v40
  %104 = vmatprep.subr.mxu0 0.0
  %105 = vmatpush1.msra.mxu0 %v41
  %106 = vmatprep.subr.mxu0 0.0
  %107 = vmatpush1.msra.mxu0 %v42
  %108 = vmatprep.subr.mxu0 0.0
  %109 = vmatpush1.msra.mxu0 %v43
  %110 = vmatprep.subr.mxu0 0.0
  %111 = vmatpush1.msra.mxu0 %v44
  %112 = vmatprep.subr.mxu0 0.0
  %113 = vmatpush1.msra.mxu0 0.0
  %114 = vmatprep.subr.mxu0 0.0
  %115 = vmatpush1.msra.mxu0 0.0
  %116 = vmatprep.subr.mxu0 0.0
  %117 = vmatpush1.msra.mxu0 0.0
  %118 = vmatprep.subr.mxu0 0.0
  %119 = vmatpush1.msra.mxu0 0.0
  %120 = vmatprep.subr.mxu0 0.0
  %121 = vmatpush1.msra.mxu0 0.0
  %122 = vmatprep.subr.mxu0 0.0
  %123 = vmatpush1.msra.mxu0 0.0
  %124 = vmatprep.subr.mxu0 0.0
  %125 = vmatpush1.msra.mxu0 0.0
  %126 = vmatprep.subr.mxu0 0.0
  %127 = vmatpush1.msra.mxu0 0.0
  %128 = vmatprep.subr.mxu0 0.0
  %129 = vmatpush1.msra.mxu0 0.0
  %130 = vmatprep.subr.mxu0 0.0
  %131 = vmatpush1.msra.mxu0 0.0
  %132 = vmatprep.subr.mxu0 0.0
  %133 = vmatpush1.msra.mxu0 0.0
  %134 = vmatprep.subr.mxu0 0.0
  %135 = vmatpush1.msra.mxu0 0.0
  %136 = vmatprep.subr.mxu0 0.0
  %137 = vmatpush1.msra.mxu0 0.0
  %138 = vmatprep.subr.mxu0 0.0
  %139 = vmatpush1.msra.mxu0 0.0
  %140 = vmatprep.subr.mxu0 0.0
  %141 = vmatpush1.msra.mxu0 0.0
  %142 = vmatprep.subr.mxu0 0.0
  %143 = vmatpush1.msra.mxu0 0.0
  %144 = vmatprep.subr.mxu0 0.0
  %145 = vmatpush1.msra.mxu0 0.0
  %146 = vmatprep.subr.mxu0 0.0
  %147 = vmatpush1.msra.mxu0 0.0
  %148 = vmatprep.subr.mxu0 0.0
  %149 = vmatpush1.msra.mxu0 0.0
  %150 = vmatprep.subr.mxu0 0.0
  %151 = vmatpush1.msra.mxu0 0.0
  %152 = vmatprep.subr.mxu0 0.0
  %153 = vmatpush1.msra.mxu0 0.0
  %154 = vmatprep.subr.mxu0 0.0
  %155 = vmatpush1.msra.mxu0 0.0
  %156 = vmatprep.subr.mxu0 0.0
  %157 = vmatpush1.msra.mxu0 0.0
  %158 = vmatprep.mubr.f32.mxu0 0.0
  %159 = vmatmul.mubr.f32.gmra.mrb[0].mxu0 %v47
  %v160 = vpop.f32.mrb[0].mxu0
  %v161 = vadd.f32 0.0, %v160
  %v162 = vpop.f32.mrb[0].mxu0
  %163 = vmatprep.mubr.f32.mxu0 0.0
  %164 = vmatmul.mubr.f32.gmra.mrb[0].mxu0 %v50
  %v165 = vpop.f32.mrb[0].mxu0
  %v166 = vadd.f32 0.0, %v165
  %v167 = vpop.f32.mrb[0].mxu0
  %168 = vmatprep.mubr.f32.mxu0 0.0
  %169 = vmatmul.mubr.f32.gmra.mrb[0].mxu0 %v53
  %v170 = vpop.f32.mrb[0].mxu0
  %v171 = vadd.f32 0.0, %v170
  %v172 = vpop.f32.mrb[0].mxu0
  %173 = vmatprep.mubr.f32.mxu0 0.0
  %174 = vmatmul.mubr.f32.gmra.mrb[0].mxu0 %v56
  %v175 = vpop.f32.mrb[0].mxu0
  %v176 = vadd.f32 0.0, %v175
  %v177 = vpop.f32.mrb[0].mxu0
  %178 = vmatprep.mubr.f32.mxu0 0.0
  %179 = vmatmul.mubr.f32.gmra.mrb[0].mxu0 %v59
  %v180 = vpop.f32.mrb[0].mxu0
  %v181 = vadd.f32 0.0, %v180
  %v182 = vpop.f32.mrb[0].mxu0
  %183 = vmatprep.mubr.f32.mxu0 0.0
  %184 = vmatmul.mubr.f32.gmra.mrb[0].mxu0 %v62
  %v185 = vpop.f32.mrb[0].mxu0
  %v186 = vadd.f32 0.0, %v185
  %v187 = vpop.f32.mrb[0].mxu0
  %188 = vmatprep.mubr.f32.mxu0 0.0
  %189 = vmatmul.mubr.f32.gmra.mrb[0].mxu0 %v65
  %v190 = vpop.f32.mrb[0].mxu0
  %v191 = vadd.f32 0.0, %v190
  %v192 = vpop.f32.mrb[0].mxu0
  %193 = vmatprep.mubr.f32.mxu0 0.0
  %194 = vmatmul.mubr.f32.gmra.mrb[0].mxu0 %v68
  %v195 = vpop.f32.mrb[0].mxu0
  %v196 = vadd.f32 0.0, %v195
  %v197 = vpop.f32.mrb[0].mxu0
  %198 = vmatprep.mubr.f32.mxu0 0.0
  %199 = vmatmul.mubr.f32.gmra.mrb[0].mxu0 %v71
  %v200 = vpop.f32.mrb[0].mxu0
  %v201 = vadd.f32 0.0, %v200
  %v202 = vpop.f32.mrb[0].mxu0
  %203 = vmatprep.mubr.f32.mxu0 0.0
  %204 = vmatmul.mubr.f32.gmra.mrb[0].mxu0 %v74
  %v205 = vpop.f32.mrb[0].mxu0
  %v206 = vadd.f32 0.0, %v205
  %v207 = vpop.f32.mrb[0].mxu0
  %208 = vmatprep.mubr.f32.mxu0 0.0
  %209 = vmatmul.mubr.f32.gmra.mrb[0].mxu0 %v77
  %v210 = vpop.f32.mrb[0].mxu0
  %v211 = vadd.f32 0.0, %v210
  %v212 = vpop.f32.mrb[0].mxu0
  %213 = vmatprep.mubr.f32.mxu0 0.0
  %214 = vmatmul.mubr.f32.gmra.mrb[0].mxu0 %v80
  %v215 = vpop.f32.mrb[0].mxu0
  %v216 = vadd.f32 0.0, %v215
  %v217 = vpop.f32.mrb[0].mxu0
  %218 = vmatprep.mubr.f32.mxu0 0.0
  %219 = vmatmul.mubr.f32.gmra.mrb[0].mxu0 %v83
  %v220 = vpop.f32.mrb[0].mxu0
  %v221 = vadd.f32 0.0, %v220
  %v222 = vpop.f32.mrb[0].mxu0
  %223 = vmatprep.mubr.f32.mxu0 0.0
  %224 = vmatmul.mubr.f32.gmra.mrb[0].mxu0 %v86
  %v225 = vpop.f32.mrb[0].mxu0
  %v226 = vadd.f32 0.0, %v225
  %v227 = vpop.f32.mrb[0].mxu0
  %228 = vmatprep.mubr.f32.mxu0 0.0
  %229 = vmatmul.mubr.f32.gmra.mrb[0].mxu0 %v89
  %v230 = vpop.f32.mrb[0].mxu0
  %v231 = vadd.f32 0.0, %v230
  %v232 = vpop.f32.mrb[0].mxu0
  %233 = vmatprep.mubr.f32.mxu0 0.0
  %234 = vmatmul.mubr.f32.gmra.mrb[0].mxu0 %v92
  %v235 = vpop.f32.mrb[0].mxu0
  %v236 = vadd.f32 0.0, %v235
  %v237 = vpop.f32.mrb[0].mxu0
  %238 = vdwg.mxu0
  %vm239 = vcmask 64512
  %v240 = vsel %vm239, %v161, 0.0
  %v241 = vsel %vm239, %v166, 0.0
  %v242 = vadd.f32 %v240, %v241
  %v243 = vsel %vm239, %v171, 0.0
  %v244 = vadd.f32 %v242, %v243
  %v245 = vsel %vm239, %v176, 0.0
  %v246 = vadd.f32 %v244, %v245
  %v247 = vsel %vm239, %v181, 0.0
  %v248 = vadd.f32 %v246, %v247
  %v249 = vsel %vm239, %v186, 0.0
  %v250 = vadd.f32 %v248, %v249
  %v251 = vsel %vm239, %v191, 0.0
  %v252 = vadd.f32 %v250, %v251
  %v253 = vsel %vm239, %v196, 0.0
  %v254 = vadd.f32 %v252, %v253
  %v255 = vsel %vm239, %v201, 0.0
  %v256 = vadd.f32 %v254, %v255
  %v257 = vsel %vm239, %v206, 0.0
  %v258 = vadd.f32 %v256, %v257
  %v259 = vsel %vm239, %v211, 0.0
  %v260 = vadd.f32 %v258, %v259
  %v261 = vsel %vm239, %v216, 0.0
  %v262 = vadd.f32 %v260, %v261
  %v263 = vsel %vm239, %v221, 0.0
  %v264 = vadd.f32 %v262, %v263
  %v265 = vsel %vm239, %v226, 0.0
  %v266 = vadd.f32 %v264, %v265
  %v267 = vsel %vm239, %v231, 0.0
  %v268 = vadd.f32 %v266, %v267
  %v269 = vsel %vm239, %v236, 0.0
  %v270 = vadd.f32 %v268, %v269
  %v271 = vrot.slane %v270, 4
  %v272 = vadd.f32 %v270, %v271
  %v273 = vrot.slane %v272, 2
  %v274 = vadd.f32 %v272, %v273
  %v275 = vrot.slane %v274, 1
  %v276 = vadd.f32 %v274, %v275
  %v277 = vrcp.pop 128.0
  %v278 = vmul.f32 %v276, %v277
  %v279 = vsub.f32 %v161, %v278
  %v280 = vsub.f32 %v166, %v278
  %v281 = vsub.f32 %v171, %v278
  %v282 = vsub.f32 %v176, %v278
  %v283 = vsub.f32 %v181, %v278
  %v284 = vsub.f32 %v186, %v278
  %v285 = vsub.f32 %v191, %v278
  %v286 = vsub.f32 %v196, %v278
  %v287 = vsub.f32 %v201, %v278
  %v288 = vsub.f32 %v206, %v278
  %v289 = vsub.f32 %v211, %v278
  %v290 = vsub.f32 %v216, %v278
  %v291 = vsub.f32 %v221, %v278
  %v292 = vsub.f32 %v226, %v278
  %v293 = vsub.f32 %v231, %v278
  %v294 = vsub.f32 %v236, %v278
  %v295 = vmul.f32 %v279, %v279
  %v296 = vmul.f32 %v280, %v280
  %v297 = vmul.f32 %v281, %v281
  %v298 = vmul.f32 %v282, %v282
  %v299 = vmul.f32 %v283, %v283
  %v300 = vmul.f32 %v284, %v284
  %v301 = vmul.f32 %v285, %v285
  %v302 = vmul.f32 %v286, %v286
  %v303 = vmul.f32 %v287, %v287
  %v304 = vmul.f32 %v288, %v288
  %v305 = vmul.f32 %v289, %v289
  %v306 = vmul.f32 %v290, %v290
  %v307 = vmul.f32 %v291, %v291
  %v308 = vmul.f32 %v292, %v292
  %v309 = vmul.f32 %v293, %v293
  %v310 = vmul.f32 %v294, %v294
  %v311 = vsel %vm239, %v295, 0.0
  %v312 = vsel %vm239, %v296, 0.0
  %v313 = vadd.f32 %v311, %v312
  %v314 = vsel %vm239, %v297, 0.0
  %v315 = vadd.f32 %v313, %v314
  %v316 = vsel %vm239, %v298, 0.0
  %v317 = vadd.f32 %v315, %v316
  %v318 = vsel %vm239, %v299, 0.0
  %v319 = vadd.f32 %v317, %v318
  %v320 = vsel %vm239, %v300, 0.0
  %v321 = vadd.f32 %v319, %v320
  %v322 = vsel %vm239, %v301, 0.0
  %v323 = vadd.f32 %v321, %v322
  %v324 = vsel %vm239, %v302, 0.0
  %v325 = vadd.f32 %v323, %v324
  %v326 = vsel %vm239, %v303, 0.0
  %v327 = vadd.f32 %v325, %v326
  %v328 = vsel %vm239, %v304, 0.0
  %v329 = vadd.f32 %v327, %v328
  %v330 = vsel %vm239, %v305, 0.0
  %v331 = vadd.f32 %v329, %v330
  %v332 = vsel %vm239, %v306, 0.0
  %v333 = vadd.f32 %v331, %v332
  %v334 = vsel %vm239, %v307, 0.0
  %v335 = vadd.f32 %v333, %v334
  %v336 = vsel %vm239, %v308, 0.0
  %v337 = vadd.f32 %v335, %v336
  %v338 = vsel %vm239, %v309, 0.0
  %v339 = vadd.f32 %v337, %v338
  %v340 = vsel %vm239, %v310, 0.0
  %v341 = vadd.f32 %v339, %v340
  %v342 = vrot.slane %v341, 4
  %v343 = vadd.f32 %v341, %v342
  %v344 = vrot.slane %v343, 2
  %v345 = vadd.f32 %v343, %v344
  %v346 = vrot.slane %v345, 1
  %v347 = vadd.f32 %v345, %v346
  %v348 = vmul.f32 %v347, %v277
  %v349 = vld [vmem:[%s2] sm:$0x1]
  %v350 = vadd.f32 %v348, 1e-05
  %v351 = vrsqrt.pop %v350
  %v352 = vmul.f32 %v349, %v351
  %v354 = vlaneseq
  %v355 = vshrl.u32 %v354, 7
  %v356 = vsub.s32 0, %v355
  %v357 = vrot.slane %v352, %v356
  %v359 = vmul.f32 %v279, %v357
  %v360 = vmul.f32 %v280, %v357
  %v361 = vmul.f32 %v281, %v357
  %v362 = vmul.f32 %v282, %v357
  %v363 = vmul.f32 %v283, %v357
  %v364 = vmul.f32 %v284, %v357
  %v365 = vmul.f32 %v285, %v357
  %v366 = vmul.f32 %v286, %v357
  %v367 = vmul.f32 %v287, %v357
  %v368 = vmul.f32 %v288, %v357
  %v369 = vmul.f32 %v289, %v357
  %v370 = vmul.f32 %v290, %v357
  %v371 = vmul.f32 %v291, %v357
  %v372 = vmul.f32 %v292, %v357
  %v373 = vmul.f32 %v293, %v357
  %v374 = vmul.f32 %v294, %v357
  %v375 = vld [vmem:[%s3] sm:$0x1]
  %v377 = vlaneseq
  %v378 = vshrl.u32 %v377, 7
  %v379 = vsub.s32 0, %v378
  %v380 = vrot.slane %v375, %v379
  %v382 = vadd.f32 %v359, %v380
  %v383 = vadd.f32 %v360, %v380
  %v384 = vadd.f32 %v361, %v380
  %v385 = vadd.f32 %v362, %v380
  %v386 = vadd.f32 %v363, %v380
  %v387 = vadd.f32 %v364, %v380
  %v388 = vadd.f32 %v365, %v380
  %v389 = vadd.f32 %v366, %v380
  %v390 = vadd.f32 %v367, %v380
  %v391 = vadd.f32 %v368, %v380
  %v392 = vadd.f32 %v369, %v380
  %v393 = vadd.f32 %v370, %v380
  %v394 = vadd.f32 %v371, %v380
  %v395 = vadd.f32 %v372, %v380
  %v396 = vadd.f32 %v373, %v380
  %v397 = vadd.f32 %v374, %v380
  %v398 = vld [vmem:[%s4] sm:$0xff]
  %v399 = vld [vmem:[%s4 + $0x8] sm:$0xff]
  %v400 = vld [vmem:[%s4 + $0x10] sm:$0xff]
  %v401 = vld [vmem:[%s4 + $0x18] sm:$0xff]
  %v402 = vld [vmem:[%s4 + $0x20] sm:$0xff]
  %v403 = vld [vmem:[%s4 + $0x28] sm:$0xff]
  %v404 = vld [vmem:[%s4 + $0x30] sm:$0xff]
  %v405 = vld [vmem:[%s4 + $0x38] sm:$0xff]
  %v406 = vld [vmem:[%s4 + $0x40] sm:$0xff]
  %v407 = vld [vmem:[%s4 + $0x48] sm:$0xff]
  %v408 = vld [vmem:[%s4 + $0x50] sm:$0xff]
  %v409 = vld [vmem:[%s4 + $0x58] sm:$0xff]
  %v410 = vld [vmem:[%s4 + $0x60] sm:$0xff]
  %v411 = vld [vmem:[%s4 + $0x68] sm:$0xff]
  %v412 = vld [vmem:[%s4 + $0x70] sm:$0xff]
  %v413 = vld [vmem:[%s4 + $0x78] sm:$0xff]
  %v414 = vadd.f32 %v382, %v398
  %v415 = vadd.f32 %v383, %v399
  %v416 = vadd.f32 %v384, %v400
  %v417 = vadd.f32 %v385, %v401
  %v418 = vadd.f32 %v386, %v402
  %v419 = vadd.f32 %v387, %v403
  %v420 = vadd.f32 %v388, %v404
  %v421 = vadd.f32 %v389, %v405
  %v422 = vadd.f32 %v390, %v406
  %v423 = vadd.f32 %v391, %v407
  %v424 = vadd.f32 %v392, %v408
  %v425 = vadd.f32 %v393, %v409
  %v426 = vadd.f32 %v394, %v410
  %v427 = vadd.f32 %v395, %v411
  %v428 = vadd.f32 %v396, %v412
  %v429 = vadd.f32 %v397, %v413
  %430 = vst.msk [vmem:[%s5] sm:$0xff] %vm239, %v414
  %431 = vst.msk [vmem:[%s5 + $0x8] sm:$0xff] %vm239, %v415
  %432 = vst.msk [vmem:[%s5 + $0x10] sm:$0xff] %vm239, %v416
  %433 = vst.msk [vmem:[%s5 + $0x18] sm:$0xff] %vm239, %v417
  %434 = vst.msk [vmem:[%s5 + $0x20] sm:$0xff] %vm239, %v418
  %435 = vst.msk [vmem:[%s5 + $0x28] sm:$0xff] %vm239, %v419
  %436 = vst.msk [vmem:[%s5 + $0x30] sm:$0xff] %vm239, %v420
  %437 = vst.msk [vmem:[%s5 + $0x38] sm:$0xff] %vm239, %v421
  %438 = vst.msk [vmem:[%s5 + $0x40] sm:$0xff] %vm239, %v422
  %439 = vst.msk [vmem:[%s5 + $0x48] sm:$0xff] %vm239, %v423
  %440 = vst.msk [vmem:[%s5 + $0x50] sm:$0xff] %vm239, %v424
  %441 = vst.msk [vmem:[%s5 + $0x58] sm:$0xff] %vm239, %v425
  %442 = vst.msk [vmem:[%s5 + $0x60] sm:$0xff] %vm239, %v426
  %443 = vst.msk [vmem:[%s5 + $0x68] sm:$0xff] %vm239, %v427
  %444 = vst.msk [vmem:[%s5 + $0x70] sm:$0xff] %vm239, %v428
  %445 = vst.msk [vmem:[%s5 + $0x78] sm:$0xff] %vm239, %v429
  // Predicated region
  $region22: #{resnet_forward.14} parent=0 // pred_check
    _
  $region23: #{resnet_forward.14} parent=0 // pred_check_branch
    %447 = sbr.rel (0) target = $region25
  $region24: #{resnet_forward.14} parent=0 // pred_region
    _
  $region25: #{resnet_forward.14} parent=0 // pred_fallthru
    _
  // Predicated region
  $region26: #{resnet_forward.14} parent=0 // pred_check
    _
  $region27: #{resnet_forward.14} parent=0 // pred_check_branch
    %449 = sbr.rel (0) target = $region29
  $region28: #{resnet_forward.14} parent=0 // pred_region
    _
  $region29: #{resnet_forward.14} parent=0 // pred_fallthru
    _

// kernel: resnet_forward.11
$region0: #{resnet_forward.11}
  #allocation0 [shape = 'u32[]', space=smem, size = 0x4, offset = 0x4, fixed_abs, tag = 'smem constant byte address 0x4 - core index']
  #allocation1 [shape = 'u32[144,128]{1,0:T(1,128)}', space=vmem, size = 0x12000, scoped, tag = 'internal scratch']
  %s0 = inlined_call_operand.vmem [shape: f32[512,147], index: 0, kind: input, shape index: {}]
  %s1 = inlined_call_operand.vmem [shape: f32[147,8], index: 1, kind: input, shape index: {}]
  %s2 = inlined_call_operand.vmem [shape: f32[1,8], index: 2, kind: input, shape index: {}]
  %s3 = inlined_call_operand.vmem [shape: f32[1,8], index: 3, kind: input, shape index: {}]
  %s4 = inlined_call_operand.vmem [shape: f32[512,8], index: 4, kind: output, shape index: {}]
  %s5 = sld [smem:[#allocation0]]
  $region26: #{resnet_forward.11} parent=0
    _
  %s7 = ssub.s32 1, %s5
  %s8 = scalar_select 0, %s7, %s5
  // Predicated region
  $region2: #{resnet_forward.11} parent=0 // pred_check
    _
  $region3: #{resnet_forward.11} parent=0 // pred_check_branch
    %10 = sbr.rel (0) target = $region5
  $region4: #{resnet_forward.11} parent=0 // pred_region
    _
  $region5: #{resnet_forward.11} parent=0 // pred_fallthru
    _
  // Predicated region
  $region6: #{resnet_forward.11} parent=0 // pred_check
    _
  $region7: #{resnet_forward.11} parent=0 // pred_check_branch
    %12 = sbr.rel (0) target = $region9
  $region8: #{resnet_forward.11} parent=0 // pred_region
    _
  $region9: #{resnet_forward.11} parent=0 // pred_fallthru
    _
  // Predicated region
  $region10: #{resnet_forward.11} parent=0 // pred_check
    _
  $region11: #{resnet_forward.11} parent=0 // pred_check_branch
    %14 = sbr.rel (0) target = $region13
  $region12: #{resnet_forward.11} parent=0 // pred_region
    _
  $region13: #{resnet_forward.11} parent=0 // pred_fallthru
    _
  // Predicated region
  $region14: #{resnet_forward.11} parent=0 // pred_check
    _
  $region15: #{resnet_forward.11} parent=0 // pred_check_branch
    %16 = sbr.rel (0) target = $region17
  $region16: #{resnet_forward.11} parent=0 // pred_region
    _
  $region17: #{resnet_forward.11} parent=0 // pred_fallthru
    _
  %v17 = vld [vmem:[%s0] sm:$0xff]
  %v18 = vld [vmem:[%s0 + $0x8] sm:$0xff]
  %v19 = vld [vmem:[%s0 + $0x10] sm:$0xff]
  %v20 = vld [vmem:[%s0 + $0x18] sm:$0xff]
  %v21 = vld [vmem:[%s0 + $0x20] sm:$0xff]
  %v22 = vld [vmem:[%s0 + $0x28] sm:$0xff]
  %v23 = vld [vmem:[%s0 + $0x30] sm:$0xff]
  %v24 = vld [vmem:[%s0 + $0x38] sm:$0xff]
  %v25 = vld [vmem:[%s0 + $0x40] sm:$0xff]
  %v26 = vld [vmem:[%s0 + $0x48] sm:$0xff]
  %v27 = vld [vmem:[%s0 + $0x50] sm:$0xff]
  %v28 = vld [vmem:[%s0 + $0x58] sm:$0xff]
  %v29 = vld [vmem:[%s0 + $0x60] sm:$0xff]
  %v30 = vld [vmem:[%s0 + $0x68] sm:$0xff]
  %v31 = vld [vmem:[%s0 + $0x70] sm:$0xff]
  %v32 = vld [vmem:[%s0 + $0x78] sm:$0xff]
  %v33 = vld [vmem:[%s0 + $0x80] sm:$0xff]
  %v34 = vld [vmem:[%s0 + $0x88] sm:$0xff]
  %v35 = vld [vmem:[%s0 + $0x90] sm:$0xff]
  %v36 = vld [vmem:[%s0 + $0x98] sm:$0xff]
  %v37 = vld [vmem:[%s0 + $0xa0] sm:$0xff]
  %v38 = vld [vmem:[%s0 + $0xa8] sm:$0xff]
  %v39 = vld [vmem:[%s0 + $0xb0] sm:$0xff]
  %v40 = vld [vmem:[%s0 + $0xb8] sm:$0xff]
  %v41 = vld [vmem:[%s0 + $0xc0] sm:$0xff]
  %v42 = vld [vmem:[%s0 + $0xc8] sm:$0xff]
  %v43 = vld [vmem:[%s0 + $0xd0] sm:$0xff]
  %v44 = vld [vmem:[%s0 + $0xd8] sm:$0xff]
  %v45 = vld [vmem:[%s0 + $0xe0] sm:$0xff]
  %v46 = vld [vmem:[%s0 + $0xe8] sm:$0xff]
  %v47 = vld [vmem:[%s0 + $0xf0] sm:$0xff]
  %v48 = vld [vmem:[%s0 + $0xf8] sm:$0xff]
  %v49 = vld [vmem:[%s0 + $0x100] sm:$0xff]
  %v50 = vld [vmem:[%s0 + $0x108] sm:$0xff]
  %v51 = vld [vmem:[%s0 + $0x110] sm:$0xff]
  %v52 = vld [vmem:[%s0 + $0x118] sm:$0xff]
  %v53 = vld [vmem:[%s0 + $0x120] sm:$0xff]
  %v54 = vld [vmem:[%s0 + $0x128] sm:$0xff]
  %v55 = vld [vmem:[%s0 + $0x130] sm:$0xff]
  %v56 = vld [vmem:[%s0 + $0x138] sm:$0xff]
  %v57 = vld [vmem:[%s0 + $0x140] sm:$0xff]
  %v58 = vld [vmem:[%s0 + $0x148] sm:$0xff]
  %v59 = vld [vmem:[%s0 + $0x150] sm:$0xff]
  %v60 = vld [vmem:[%s0 + $0x158] sm:$0xff]
  %v61 = vld [vmem:[%s0 + $0x160] sm:$0xff]
  %v62 = vld [vmem:[%s0 + $0x168] sm:$0xff]
  %v63 = vld [vmem:[%s0 + $0x170] sm:$0xff]
  %v64 = vld [vmem:[%s0 + $0x178] sm:$0xff]
  %v65 = vld [vmem:[%s0 + $0x180] sm:$0xff]
  %v66 = vld [vmem:[%s0 + $0x188] sm:$0xff]
  %v67 = vld [vmem:[%s0 + $0x190] sm:$0xff]
  %v68 = vld [vmem:[%s0 + $0x198] sm:$0xff]
  %v69 = vld [vmem:[%s0 + $0x1a0] sm:$0xff]
  %v70 = vld [vmem:[%s0 + $0x1a8] sm:$0xff]
  %v71 = vld [vmem:[%s0 + $0x1b0] sm:$0xff]
  %v72 = vld [vmem:[%s0 + $0x1b8] sm:$0xff]
  %v73 = vld [vmem:[%s0 + $0x1c0] sm:$0xff]
  %v74 = vld [vmem:[%s0 + $0x1c8] sm:$0xff]
  %v75 = vld [vmem:[%s0 + $0x1d0] sm:$0xff]
  %v76 = vld [vmem:[%s0 + $0x1d8] sm:$0xff]
  %v77 = vld [vmem:[%s0 + $0x1e0] sm:$0xff]
  %v78 = vld [vmem:[%s0 + $0x1e8] sm:$0xff]
  %v79 = vld [vmem:[%s0 + $0x1f0] sm:$0xff]
  %v80 = vld [vmem:[%s0 + $0x1f8] sm:$0xff]
  %v81 = vld [vmem:[%s0 + $0x200] sm:$0xff]
  %v82 = vld [vmem:[%s0 + $0x208] sm:$0xff]
  %v83 = vld [vmem:[%s0 + $0x210] sm:$0xff]
  %v84 = vld [vmem:[%s0 + $0x218] sm:$0xff]
  %v85 = vld [vmem:[%s0 + $0x220] sm:$0xff]
  %v86 = vld [vmem:[%s0 + $0x228] sm:$0xff]
  %v87 = vld [vmem:[%s0 + $0x230] sm:$0xff]
  %v88 = vld [vmem:[%s0 + $0x238] sm:$0xff]
  %v89 = vld [vmem:[%s0 + $0x240] sm:$0xff]
  %v90 = vld [vmem:[%s0 + $0x248] sm:$0xff]
  %v91 = vld [vmem:[%s0 + $0x250] sm:$0xff]
  %v92 = vld [vmem:[%s0 + $0x258] sm:$0xff]
  %v93 = vld [vmem:[%s0 + $0x260] sm:$0xff]
  %v94 = vld [vmem:[%s0 + $0x268] sm:$0xff]
  %v95 = vld [vmem:[%s0 + $0x270] sm:$0xff]
  %v96 = vld [vmem:[%s0 + $0x278] sm:$0xff]
  %v97 = vld [vmem:[%s0 + $0x280] sm:$0xff]
  %v98 = vld [vmem:[%s0 + $0x288] sm:$0xff]
  %v99 = vld [vmem:[%s0 + $0x290] sm:$0xff]
  %v100 = vld [vmem:[%s0 + $0x298] sm:$0xff]
  %v101 = vld [vmem:[%s0 + $0x2a0] sm:$0xff]
  %v102 = vld [vmem:[%s0 + $0x2a8] sm:$0xff]
  %v103 = vld [vmem:[%s0 + $0x2b0] sm:$0xff]
  %v104 = vld [vmem:[%s0 + $0x2b8] sm:$0xff]
  %v105 = vld [vmem:[%s0 + $0x2c0] sm:$0xff]
  %v106 = vld [vmem:[%s0 + $0x2c8] sm:$0xff]
  %v107 = vld [vmem:[%s0 + $0x2d0] sm:$0xff]
  %v108 = vld [vmem:[%s0 + $0x2d8] sm:$0xff]
  %v109 = vld [vmem:[%s0 + $0x2e0] sm:$0xff]
  %v110 = vld [vmem:[%s0 + $0x2e8] sm:$0xff]
  %v111 = vld [vmem:[%s0 + $0x2f0] sm:$0xff]
  %v112 = vld [vmem:[%s0 + $0x2f8] sm:$0xff]
  %v113 = vld [vmem:[%s0 + $0x300] sm:$0xff]
  %v114 = vld [vmem:[%s0 + $0x308] sm:$0xff]
  %v115 = vld [vmem:[%s0 + $0x310] sm:$0xff]
  %v116 = vld [vmem:[%s0 + $0x318] sm:$0xff]
  %v117 = vld [vmem:[%s0 + $0x320] sm:$0xff]
  %v118 = vld [vmem:[%s0 + $0x328] sm:$0xff]
  %v119 = vld [vmem:[%s0 + $0x330] sm:$0xff]
  %v120 = vld [vmem:[%s0 + $0x338] sm:$0xff]
  %v121 = vld [vmem:[%s0 + $0x340] sm:$0xff]
  %v122 = vld [vmem:[%s0 + $0x348] sm:$0xff]
  %v123 = vld [vmem:[%s0 + $0x350] sm:$0xff]
  %v124 = vld [vmem:[%s0 + $0x358] sm:$0xff]
  %v125 = vld [vmem:[%s0 + $0x360] sm:$0xff]
  %v126 = vld [vmem:[%s0 + $0x368] sm:$0xff]
  %v127 = vld [vmem:[%s0 + $0x370] sm:$0xff]
  %v128 = vld [vmem:[%s0 + $0x378] sm:$0xff]
  %v129 = vld [vmem:[%s0 + $0x380] sm:$0xff]
  %v130 = vld [vmem:[%s0 + $0x388] sm:$0xff]
  %v131 = vld [vmem:[%s0 + $0x390] sm:$0xff]
  %v132 = vld [vmem:[%s0 + $0x398] sm:$0xff]
  %v133 = vld [vmem:[%s0 + $0x3a0] sm:$0xff]
  %v134 = vld [vmem:[%s0 + $0x3a8] sm:$0xff]
  %v135 = vld [vmem:[%s0 + $0x3b0] sm:$0xff]
  %v136 = vld [vmem:[%s0 + $0x3b8] sm:$0xff]
  %v137 = vld [vmem:[%s0 + $0x3c0] sm:$0xff]
  %v138 = vld [vmem:[%s0 + $0x3c8] sm:$0xff]
  %v139 = vld [vmem:[%s0 + $0x3d0] sm:$0xff]
  %v140 = vld [vmem:[%s0 + $0x3d8] sm:$0xff]
  %v141 = vld [vmem:[%s0 + $0x3e0] sm:$0xff]
  %v142 = vld [vmem:[%s0 + $0x3e8] sm:$0xff]
  %v143 = vld [vmem:[%s0 + $0x3f0] sm:$0xff]
  %v144 = vld [vmem:[%s0 + $0x3f8] sm:$0xff]
  %v145 = vld [vmem:[%s1] sm:$0xff]
  %v146 = vld [vmem:[%s1 + $0x8] sm:$0xff]
  %v147 = vld [vmem:[%s1 + $0x10] sm:$0xff]
  %v148 = vld [vmem:[%s1 + $0x18] sm:$0xff]
  %v149 = vld [vmem:[%s1 + $0x20] sm:$0xff]
  %v150 = vld [vmem:[%s1 + $0x28] sm:$0xff]
  %v151 = vld [vmem:[%s1 + $0x30] sm:$0xff]
  %v152 = vld [vmem:[%s1 + $0x38] sm:$0xff]
  %v153 = vld [vmem:[%s1 + $0x40] sm:$0xff]
  %v154 = vld [vmem:[%s1 + $0x48] sm:$0xff]
  %v155 = vld [vmem:[%s1 + $0x50] sm:$0xff]
  %v156 = vld [vmem:[%s1 + $0x58] sm:$0xff]
  %v157 = vld [vmem:[%s1 + $0x60] sm:$0xff]
  %v158 = vld [vmem:[%s1 + $0x68] sm:$0xff]
  %v159 = vld [vmem:[%s1 + $0x70] sm:$0xff]
  %v160 = vld [vmem:[%s1 + $0x78] sm:$0xff]
  %v161 = vld [vmem:[%s1 + $0x80] sm:$0xff]
  %v162 = vld [vmem:[%s1 + $0x88] sm:$0xff]
  %v163 = vld [vmem:[%s1 + $0x90] sm:$0x7]
  %vm164 = vcmask 154624
  %v166 = vsel %vm164, %v18, 0
  %v169 = vsel %vm164, %v20, 0
  %v172 = vsel %vm164, %v22, 0
  %v175 = vsel %vm164, %v24, 0
  %v178 = vsel %vm164, %v26, 0
  %v181 = vsel %vm164, %v28, 0
  %v184 = vsel %vm164, %v30, 0
  %v187 = vsel %vm164, %v32, 0
  %v190 = vsel %vm164, %v34, 0
  %v193 = vsel %vm164, %v36, 0
  %v196 = vsel %vm164, %v38, 0
  %v199 = vsel %vm164, %v40, 0
  %v202 = vsel %vm164, %v42, 0
  %v205 = vsel %vm164, %v44, 0
  %v208 = vsel %vm164, %v46, 0
  %v211 = vsel %vm164, %v48, 0
  %v214 = vsel %vm164, %v50, 0
  %v217 = vsel %vm164, %v52, 0
  %v220 = vsel %vm164, %v54, 0
  %v223 = vsel %vm164, %v56, 0
  %v226 = vsel %vm164, %v58, 0
  %v229 = vsel %vm164, %v60, 0
  %v232 = vsel %vm164, %v62, 0
  %v235 = vsel %vm164, %v64, 0
  %v238 = vsel %vm164, %v66, 0
  %v241 = vsel %vm164, %v68, 0
  %v244 = vsel %vm164, %v70, 0
  %v247 = vsel %vm164, %v72, 0
  %v250 = vsel %vm164, %v74, 0
  %v253 = vsel %vm164, %v76, 0
  %v256 = vsel %vm164, %v78, 0
  %v259 = vsel %vm164, %v80, 0
  %v262 = vsel %vm164, %v82, 0
  %v265 = vsel %vm164, %v84, 0
  %v268 = vsel %vm164, %v86, 0
  %v271 = vsel %vm164, %v88, 0
  %v274 = vsel %vm164, %v90, 0
  %v277 = vsel %vm164, %v92, 0
  %v280 = vsel %vm164, %v94, 0
  %v283 = vsel %vm164, %v96, 0
  %v286 = vsel %vm164, %v98, 0
  %v289 = vsel %vm164, %v100, 0
  %v292 = vsel %vm164, %v102, 0
  %v295 = vsel %vm164, %v104, 0
  %v298 = vsel %vm164, %v106, 0
  %v301 = vsel %vm164, %v108, 0
  %v304 = vsel %vm164, %v110, 0
  %v307 = vsel %vm164, %v112, 0
  %v310 = vsel %vm164, %v114, 0
  %v313 = vsel %vm164, %v116, 0
  %v316 = vsel %vm164, %v118, 0
  %v319 = vsel %vm164, %v120, 0
  %v322 = vsel %vm164, %v122, 0
  %v325 = vsel %vm164, %v124, 0
  %v328 = vsel %vm164, %v126, 0
  %v331 = vsel %vm164, %v128, 0
  %v334 = vsel %vm164, %v130, 0
  %v337 = vsel %vm164, %v132, 0
  %v340 = vsel %vm164, %v134, 0
  %v343 = vsel %vm164, %v136, 0
  %v346 = vsel %vm164, %v138, 0
  %v349 = vsel %vm164, %v140, 0
  %v352 = vsel %vm164, %v142, 0
  %v355 = vsel %vm164, %v144, 0
  %vm357 = vcmask 1042432
  %v359 = vsel %vm357, %v163, 0
  %361 = vmatprep.subr.mxu0 0.0
  %362 = vmatpush1.msra.mxu0 %v145
  %363 = vmatprep.subr.mxu0 0.0
  %364 = vmatpush1.msra.mxu0 %v146
  %365 = vmatprep.subr.mxu0 0.0
  %366 = vmatpush1.msra.mxu0 %v147
  %367 = vmatprep.subr.mxu0 0.0
  %368 = vmatpush1.msra.mxu0 %v148
  %369 = vmatprep.subr.mxu0 0.0
  %370 = vmatpush1.msra.mxu0 %v149
  %371 = vmatprep.subr.mxu0 0.0
  %372 = vmatpush1.msra.mxu0 %v150
  %373 = vmatprep.subr.mxu0 0.0
  %374 = vmatpush1.msra.mxu0 %v151
  %375 = vmatprep.subr.mxu0 0.0
  %376 = vmatpush1.msra.mxu0 %v152
  %377 = vmatprep.subr.mxu0 0.0
  %378 = vmatpush1.msra.mxu0 %v153
  %379 = vmatprep.subr.mxu0 0.0
  %380 = vmatpush1.msra.mxu0 %v154
  %381 = vmatprep.subr.mxu0 0.0
  %382 = vmatpush1.msra.mxu0 %v155
  %383 = vmatprep.subr.mxu0 0.0
  %384 = vmatpush1.msra.mxu0 %v156
  %385 = vmatprep.subr.mxu0 0.0
  %386 = vmatpush1.msra.mxu0 %v157
  %387 = vmatprep.subr.mxu0 0.0
  %388 = vmatpush1.msra.mxu0 %v158
  %389 = vmatprep.subr.mxu0 0.0
  %390 = vmatpush1.msra.mxu0 %v159
  %391 = vmatprep.subr.mxu0 0.0
  %392 = vmatpush1.msra.mxu0 %v160
  %393 = vmatprep.subr.mxu0 0.0
  %394 = vmatpush1.msra.mxu0 %v161
  %395 = vmatprep.subr.mxu0 0.0
  %396 = vmatpush1.msra.mxu0 %v162
  %397 = vmatprep.subr.mxu0 0.0
  %398 = vmatpush1.msra.mxu0 %v359
  %399 = vmatprep.subr.mxu0 0.0
  %400 = vmatpush1.msra.mxu0 0.0
  %401 = vmatprep.subr.mxu0 0.0
  %402 = vmatpush1.msra.mxu0 0.0
  %403 = vmatprep.subr.mxu0 0.0
  %404 = vmatpush1.msra.mxu0 0.0
  %405 = vmatprep.subr.mxu0 0.0
  %406 = vmatpush1.msra.mxu0 0.0
  %407 = vmatprep.subr.mxu0 0.0
  %408 = vmatpush1.msra.mxu0 0.0
  %409 = vmatprep.subr.mxu0 0.0
  %410 = vmatpush1.msra.mxu0 0.0
  %411 = vmatprep.subr.mxu0 0.0
  %412 = vmatpush1.msra.mxu0 0.0
  %413 = vmatprep.subr.mxu0 0.0
  %414 = vmatpush1.msra.mxu0 0.0
  %415 = vmatprep.subr.mxu0 0.0
  %416 = vmatpush1.msra.mxu0 0.0
  %417 = vmatprep.subr.mxu0 0.0
  %418 = vmatpush1.msra.mxu0 0.0
  %419 = vmatprep.subr.mxu0 0.0
  %420 = vmatpush1.msra.mxu0 0.0
  %421 = vmatprep.subr.mxu0 0.0
  %422 = vmatpush1.msra.mxu0 0.0
  %423 = vmatprep.subr.mxu0 0.0
  %424 = vmatpush1.msra.mxu0 0.0
  %425 = vmatprep.mubr.f32.mxu0 %v166
  %426 = vmatmul.mubr.f32.gmra.mrb[0].mxu0 %v17
  %v427 = vpop.f32.mrb[0].mxu0
  %v428 = vadd.f32 0.0, %v427
  %v429 = vpop.f32.mrb[0].mxu0
  %430 = vmatprep.mubr.f32.mxu0 %v169
  %431 = vmatmul.mubr.f32.gmra.mrb[0].mxu0 %v19
  %v432 = vpop.f32.mrb[0].mxu0
  %v433 = vadd.f32 0.0, %v432
  %v434 = vpop.f32.mrb[0].mxu0
  %435 = vmatprep.mubr.f32.mxu0 %v172
  %436 = vmatmul.mubr.f32.gmra.mrb[0].mxu0 %v21
  %v437 = vpop.f32.mrb[0].mxu0
  %v438 = vadd.f32 0.0, %v437
  %v439 = vpop.f32.mrb[0].mxu0
  %440 = vmatprep.mubr.f32.mxu0 %v175
  %441 = vmatmul.mubr.f32.gmra.mrb[0].mxu0 %v23
  %v442 = vpop.f32.mrb[0].mxu0
  %v443 = vadd.f32 0.0, %v442
  %v444 = vpop.f32.mrb[0].mxu0
  %445 = vmatprep.mubr.f32.mxu0 %v178
  %446 = vmatmul.mubr.f32.gmra.mrb[0].mxu0 %v25
  %v447 = vpop.f32.mrb[0].mxu0
  %v448 = vadd.f32 0.0, %v447
  %v449 = vpop.f32.mrb[0].mxu0
  %450 = vmatprep.mubr.f32.mxu0 %v181
  %451 = vmatmul.mubr.f32.gmra.mrb[0].mxu0 %v27
  %v452 = vpop.f32.mrb[0].mxu0
  %v453 = vadd.f32 0.0, %v452
  %v454 = vpop.f32.mrb[0].mxu0
  %455 = vmatprep.mubr.f32.mxu0 %v184
  %456 = vmatmul.mubr.f32.gmra.mrb[0].mxu0 %v29
  %v457 = vpop.f32.mrb[0].mxu0
  %v458 = vadd.f32 0.0, %v457
  %v459 = vpop.f32.mrb[0].mxu0
  %460 = vmatprep.mubr.f32.mxu0 %v187
  %461 = vmatmul.mubr.f32.gmra.mrb[0].mxu0 %v31
  %v462 = vpop.f32.mrb[0].mxu0
  %v463 = vadd.f32 0.0, %v462
  %v464 = vpop.f32.mrb[0].mxu0
  %465 = vmatprep.mubr.f32.mxu0 %v190
  %466 = vmatmul.mubr.f32.gmra.mrb[0].mxu0 %v33
  %v467 = vpop.f32.mrb[0].mxu0
  %v468 = vadd.f32 0.0, %v467
  %v469 = vpop.f32.mrb[0].mxu0
  %470 = vmatprep.mubr.f32.mxu0 %v193
  %471 = vmatmul.mubr.f32.gmra.mrb[0].mxu0 %v35
  %v472 = vpop.f32.mrb[0].mxu0
  %v473 = vadd.f32 0.0, %v472
  %v474 = vpop.f32.mrb[0].mxu0
  %475 = vmatprep.mubr.f32.mxu0 %v196
  %476 = vmatmul.mubr.f32.gmra.mrb[0].mxu0 %v37
  %v477 = vpop.f32.mrb[0].mxu0
  %v478 = vadd.f32 0.0, %v477
  %v479 = vpop.f32.mrb[0].mxu0
  %480 = vmatprep.mubr.f32.mxu0 %v199
  %481 = vmatmul.mubr.f32.gmra.mrb[0].mxu0 %v39
  %v482 = vpop.f32.mrb[0].mxu0
  %v483 = vadd.f32 0.0, %v482
  %v484 = vpop.f32.mrb[0].mxu0
  %485 = vmatprep.mubr.f32.mxu0 %v202
  %486 = vmatmul.mubr.f32.gmra.mrb[0].mxu0 %v41
  %v487 = vpop.f32.mrb[0].mxu0
  %v488 = vadd.f32 0.0, %v487
  %v489 = vpop.f32.mrb[0].mxu0
  %490 = vmatprep.mubr.f32.mxu0 %v205
  %491 = vmatmul.mubr.f32.gmra.mrb[0].mxu0 %v43
  %v492 = vpop.f32.mrb[0].mxu0
  %v493 = vadd.f32 0.0, %v492
  %v494 = vpop.f32.mrb[0].mxu0
  %495 = vmatprep.mubr.f32.mxu0 %v208
  %496 = vmatmul.mubr.f32.gmra.mrb[0].mxu0 %v45
  %v497 = vpop.f32.mrb[0].mxu0
  %v498 = vadd.f32 0.0, %v497
  %v499 = vpop.f32.mrb[0].mxu0
  %500 = vmatprep.mubr.f32.mxu0 %v211
  %501 = vmatmul.mubr.f32.gmra.mrb[0].mxu0 %v47
  %v502 = vpop.f32.mrb[0].mxu0
  %v503 = vadd.f32 0.0, %v502
  %v504 = vpop.f32.mrb[0].mxu0
  %505 = vmatprep.mubr.f32.mxu0 %v214
  %506 = vmatmul.mubr.f32.gmra.mrb[0].mxu0 %v49
  %v507 = vpop.f32.mrb[0].mxu0
  %v508 = vadd.f32 0.0, %v507
  %v509 = vpop.f32.mrb[0].mxu0
  %510 = vmatprep.mubr.f32.mxu0 %v217
  %511 = vmatmul.mubr.f32.gmra.mrb[0].mxu0 %v51
  %v512 = vpop.f32.mrb[0].mxu0
  %v513 = vadd.f32 0.0, %v512
  %v514 = vpop.f32.mrb[0].mxu0
  %515 = vmatprep.mubr.f32.mxu0 %v220
  %516 = vmatmul.mubr.f32.gmra.mrb[0].mxu0 %v53
  %v517 = vpop.f32.mrb[0].mxu0
  %v518 = vadd.f32 0.0, %v517
  %v519 = vpop.f32.mrb[0].mxu0
  %520 = vmatprep.mubr.f32.mxu0 %v223
  %521 = vmatmul.mubr.f32.gmra.mrb[0].mxu0 %v55
  %v522 = vpop.f32.mrb[0].mxu0
  %v523 = vadd.f32 0.0, %v522
  %v524 = vpop.f32.mrb[0].mxu0
  %525 = vmatprep.mubr.f32.mxu0 %v226
  %526 = vmatmul.mubr.f32.gmra.mrb[0].mxu0 %v57
  %v527 = vpop.f32.mrb[0].mxu0
  %v528 = vadd.f32 0.0, %v527
  %v529 = vpop.f32.mrb[0].mxu0
  %530 = vmatprep.mubr.f32.mxu0 %v229
  %531 = vmatmul.mubr.f32.gmra.mrb[0].mxu0 %v59
  %v532 = vpop.f32.mrb[0].mxu0
  %v533 = vadd.f32 0.0, %v532
  %v534 = vpop.f32.mrb[0].mxu0
  %535 = vmatprep.mubr.f32.mxu0 %v232
  %536 = vmatmul.mubr.f32.gmra.mrb[0].mxu0 %v61
  %v537 = vpop.f32.mrb[0].mxu0
  %v538 = vadd.f32 0.0, %v537
  %v539 = vpop.f32.mrb[0].mxu0
  %540 = vmatprep.mubr.f32.mxu0 %v235
  %541 = vmatmul.mubr.f32.gmra.mrb[0].mxu0 %v63
  %v542 = vpop.f32.mrb[0].mxu0
  %v543 = vadd.f32 0.0, %v542
  %v544 = vpop.f32.mrb[0].mxu0
  %545 = vmatprep.mubr.f32.mxu0 %v238
  %546 = vmatmul.mubr.f32.gmra.mrb[0].mxu0 %v65
  %v547 = vpop.f32.mrb[0].mxu0
  %v548 = vadd.f32 0.0, %v547
  %v549 = vpop.f32.mrb[0].mxu0
  %550 = vmatprep.mubr.f32.mxu0 %v241
  %551 = vmatmul.mubr.f32.gmra.mrb[0].mxu0 %v67
  %v552 = vpop.f32.mrb[0].mxu0
  %v553 = vadd.f32 0.0, %v552
  %v554 = vpop.f32.mrb[0].mxu0
  %555 = vmatprep.mubr.f32.mxu0 %v244
  %556 = vmatmul.mubr.f32.gmra.mrb[0].mxu0 %v69
  %v557 = vpop.f32.mrb[0].mxu0
  %v558 = vadd.f32 0.0, %v557
  %v559 = vpop.f32.mrb[0].mxu0
  %560 = vmatprep.mubr.f32.mxu0 %v247
  %561 = vmatmul.mubr.f32.gmra.mrb[0].mxu0 %v71
  %v562 = vpop.f32.mrb[0].mxu0
  %v563 = vadd.f32 0.0, %v562
  %v564 = vpop.f32.mrb[0].mxu0
  %565 = vmatprep.mubr.f32.mxu0 %v250
  %566 = vmatmul.mubr.f32.gmra.mrb[0].mxu0 %v73
  %v567 = vpop.f32.mrb[0].mxu0
  %v568 = vadd.f32 0.0, %v567
  %v569 = vpop.f32.mrb[0].mxu0
  %570 = vmatprep.mubr.f32.mxu0 %v253
  %571 = vmatmul.mubr.f32.gmra.mrb[0].mxu0 %v75
  %v572 = vpop.f32.mrb[0].mxu0
  %v573 = vadd.f32 0.0, %v572
  %v574 = vpop.f32.mrb[0].mxu0
  %575 = vmatprep.mubr.f32.mxu0 %v256
  %576 = vmatmul.mubr.f32.gmra.mrb[0].mxu0 %v77
  %v577 = vpop.f32.mrb[0].mxu0
  %v578 = vadd.f32 0.0, %v577
  %v579 = vpop.f32.mrb[0].mxu0
  %580 = vmatprep.mubr.f32.mxu0 %v259
  %581 = vmatmul.mubr.f32.gmra.mrb[0].mxu0 %v79
  %v582 = vpop.f32.mrb[0].mxu0
  %v583 = vadd.f32 0.0, %v582
  %v584 = vpop.f32.mrb[0].mxu0
  %585 = vmatprep.mubr.f32.mxu0 %v262
  %586 = vmatmul.mubr.f32.gmra.mrb[0].mxu0 %v81
  %v587 = vpop.f32.mrb[0].mxu0
  %v588 = vadd.f32 0.0, %v587
  %v589 = vpop.f32.mrb[0].mxu0
  %590 = vmatprep.mubr.f32.mxu0 %v265
  %591 = vmatmul.mubr.f32.gmra.mrb[0].mxu0 %v83
  %v592 = vpop.f32.mrb[0].mxu0
  %v593 = vadd.f32 0.0, %v592
  %v594 = vpop.f32.mrb[0].mxu0
  %595 = vmatprep.mubr.f32.mxu0 %v268
  %596 = vmatmul.mubr.f32.gmra.mrb[0].mxu0 %v85
  %v597 = vpop.f32.mrb[0].mxu0
  %v598 = vadd.f32 0.0, %v597
  %v599 = vpop.f32.mrb[0].mxu0
  %600 = vmatprep.mubr.f32.mxu0 %v271
  %601 = vmatmul.mubr.f32.gmra.mrb[0].mxu0 %v87
  %v602 = vpop.f32.mrb[0].mxu0
  %v603 = vadd.f32 0.0, %v602
  %v604 = vpop.f32.mrb[0].mxu0
  %605 = vmatprep.mubr.f32.mxu0 %v274
  %606 = vmatmul.mubr.f32.gmra.mrb[0].mxu0 %v89
  %v607 = vpop.f32.mrb[0].mxu0
  %v608 = vadd.f32 0.0, %v607
  %v609 = vpop.f32.mrb[0].mxu0
  %610 = vmatprep.mubr.f32.mxu0 %v277
  %611 = vmatmul.mubr.f32.gmra.mrb[0].mxu0 %v91
  %v612 = vpop.f32.mrb[0].mxu0
  %v613 = vadd.f32 0.0, %v612
  %v614 = vpop.f32.mrb[0].mxu0
  %615 = vmatprep.mubr.f32.mxu0 %v280
  %616 = vmatmul.mubr.f32.gmra.mrb[0].mxu0 %v93
  %v617 = vpop.f32.mrb[0].mxu0
  %v618 = vadd.f32 0.0, %v617
  %v619 = vpop.f32.mrb[0].mxu0
  %620 = vmatprep.mubr.f32.mxu0 %v283
  %621 = vmatmul.mubr.f32.gmra.mrb[0].mxu0 %v95
  %v622 = vpop.f32.mrb[0].mxu0
  %v623 = vadd.f32 0.0, %v622
  %v624 = vpop.f32.mrb[0].mxu0
  %625 = vmatprep.mubr.f32.mxu0 %v286
  %626 = vmatmul.mubr.f32.gmra.mrb[0].mxu0 %v97
  %v627 = vpop.f32.mrb[0].mxu0
  %v628 = vadd.f32 0.0, %v627
  %v629 = vpop.f32.mrb[0].mxu0
  %630 = vmatprep.mubr.f32.mxu0 %v289
  %631 = vmatmul.mubr.f32.gmra.mrb[0].mxu0 %v99
  %v632 = vpop.f32.mrb[0].mxu0
  %v633 = vadd.f32 0.0, %v632
  %v634 = vpop.f32.mrb[0].mxu0
  %635 = vmatprep.mubr.f32.mxu0 %v292
  %636 = vmatmul.mubr.f32.gmra.mrb[0].mxu0 %v101
  %v637 = vpop.f32.mrb[0].mxu0
  %v638 = vadd.f32 0.0, %v637
  %v639 = vpop.f32.mrb[0].mxu0
  %640 = vmatprep.mubr.f32.mxu0 %v295
  %641 = vmatmul.mubr.f32.gmra.mrb[0].mxu0 %v103
  %v642 = vpop.f32.mrb[0].mxu0
  %v643 = vadd.f32 0.0, %v642
  %v644 = vpop.f32.mrb[0].mxu0
  %645 = vmatprep.mubr.f32.mxu0 %v298
  %646 = vmatmul.mubr.f32.gmra.mrb[0].mxu0 %v105
  %v647 = vpop.f32.mrb[0].mxu0
  %v648 = vadd.f32 0.0, %v647
  %v649 = vpop.f32.mrb[0].mxu0
  %650 = vmatprep.mubr.f32.mxu0 %v301
  %651 = vmatmul.mubr.f32.gmra.mrb[0].mxu0 %v107
  %v652 = vpop.f32.mrb[0].mxu0
  %v653 = vadd.f32 0.0, %v652
  %v654 = vpop.f32.mrb[0].mxu0
  %655 = vmatprep.mubr.f32.mxu0 %v304
  %656 = vmatmul.mubr.f32.gmra.mrb[0].mxu0 %v109
  %v657 = vpop.f32.mrb[0].mxu0
  %v658 = vadd.f32 0.0, %v657
  %v659 = vpop.f32.mrb[0].mxu0
  %660 = vmatprep.mubr.f32.mxu0 %v307
  %661 = vmatmul.mubr.f32.gmra.mrb[0].mxu0 %v111
  %v662 = vpop.f32.mrb[0].mxu0
  %v663 = vadd.f32 0.0, %v662
  %v664 = vpop.f32.mrb[0].mxu0
  %665 = vmatprep.mubr.f32.mxu0 %v310
  %666 = vmatmul.mubr.f32.gmra.mrb[0].mxu0 %v113
  %v667 = vpop.f32.mrb[0].mxu0
  %v668 = vadd.f32 0.0, %v667
  %v669 = vpop.f32.mrb[0].mxu0
  %670 = vmatprep.mubr.f32.mxu0 %v313
  %671 = vmatmul.mubr.f32.gmra.mrb[0].mxu0 %v115
  %v672 = vpop.f32.mrb[0].mxu0
  %v673 = vadd.f32 0.0, %v672
  %v674 = vpop.f32.mrb[0].mxu0
  %675 = vmatprep.mubr.f32.mxu0 %v316
  %676 = vmatmul.mubr.f32.gmra.mrb[0].mxu0 %v117
  %v677 = vpop.f32.mrb[0].mxu0
  %v678 = vadd.f32 0.0, %v677
  %v679 = vpop.f32.mrb[0].mxu0
  %680 = vmatprep.mubr.f32.mxu0 %v319
  %681 = vmatmul.mubr.f32.gmra.mrb[0].mxu0 %v119
  %v682 = vpop.f32.mrb[0].mxu0
  %v683 = vadd.f32 0.0, %v682
  %v684 = vpop.f32.mrb[0].mxu0
  %685 = vmatprep.mubr.f32.mxu0 %v322
  %686 = vmatmul.mubr.f32.gmra.mrb[0].mxu0 %v121
  %v687 = vpop.f32.mrb[0].mxu0
  %v688 = vadd.f32 0.0, %v687
  %v689 = vpop.f32.mrb[0].mxu0
  %690 = vmatprep.mubr.f32.mxu0 %v325
  %691 = vmatmul.mubr.f32.gmra.mrb[0].mxu0 %v123
  %v692 = vpop.f32.mrb[0].mxu0
  %v693 = vadd.f32 0.0, %v692
  %v694 = vpop.f32.mrb[0].mxu0
  %695 = vmatprep.mubr.f32.mxu0 %v328
  %696 = vmatmul.mubr.f32.gmra.mrb[0].mxu0 %v125
  %v697 = vpop.f32.mrb[0].mxu0
  %v698 = vadd.f32 0.0, %v697
  %v699 = vpop.f32.mrb[0].mxu0
  %700 = vmatprep.mubr.f32.mxu0 %v331
  %701 = vmatmul.mubr.f32.gmra.mrb[0].mxu0 %v127
  %v702 = vpop.f32.mrb[0].mxu0
  %v703 = vadd.f32 0.0, %v702
  %v704 = vpop.f32.mrb[0].mxu0
  %705 = vmatprep.mubr.f32.mxu0 %v334
  %706 = vmatmul.mubr.f32.gmra.mrb[0].mxu0 %v129
  %v707 = vpop.f32.mrb[0].mxu0
  %v708 = vadd.f32 0.0, %v707
  %v709 = vpop.f32.mrb[0].mxu0
  %710 = vmatprep.mubr.f32.mxu0 %v337
  %711 = vmatmul.mubr.f32.gmra.mrb[0].mxu0 %v131
  %v712 = vpop.f32.mrb[0].mxu0
  %v713 = vadd.f32 0.0, %v712
  %v714 = vpop.f32.mrb[0].mxu0
  %715 = vmatprep.mubr.f32.mxu0 %v340
  %716 = vmatmul.mubr.f32.gmra.mrb[0].mxu0 %v133
  %v717 = vpop.f32.mrb[0].mxu0
  %v718 = vadd.f32 0.0, %v717
  %v719 = vpop.f32.mrb[0].mxu0
  %720 = vmatprep.mubr.f32.mxu0 %v343
  %721 = vmatmul.mubr.f32.gmra.mrb[0].mxu0 %v135
  %v722 = vpop.f32.mrb[0].mxu0
  %v723 = vadd.f32 0.0, %v722
  %v724 = vpop.f32.mrb[0].mxu0
  %725 = vmatprep.mubr.f32.mxu0 %v346
  %726 = vmatmul.mubr.f32.gmra.mrb[0].mxu0 %v137
  %v727 = vpop.f32.mrb[0].mxu0
  %v728 = vadd.f32 0.0, %v727
  %v729 = vpop.f32.mrb[0].mxu0
  %730 = vmatprep.mubr.f32.mxu0 %v349
  %731 = vmatmul.mubr.f32.gmra.mrb[0].mxu0 %v139
  %v732 = vpop.f32.mrb[0].mxu0
  %v733 = vadd.f32 0.0, %v732
  %v734 = vpop.f32.mrb[0].mxu0
  %735 = vmatprep.mubr.f32.mxu0 %v352
  %736 = vmatmul.mubr.f32.gmra.mrb[0].mxu0 %v141
  %v737 = vpop.f32.mrb[0].mxu0
  %v738 = vadd.f32 0.0, %v737
  %v739 = vpop.f32.mrb[0].mxu0
  %740 = vmatprep.mubr.f32.mxu0 %v355
  %741 = vmatmul.mubr.f32.gmra.mrb[0].mxu0 %v143
  %v742 = vpop.f32.mrb[0].mxu0
  %v743 = vadd.f32 0.0, %v742
  %v744 = vpop.f32.mrb[0].mxu0
  %745 = vdwg.mxu0
  %vm746 = vcmask 64512
  %v747 = vsel %vm746, %v428, 0.0
  %v748 = vsel %vm746, %v433, 0.0
  %v749 = vadd.f32 %v747, %v748
  %v750 = vsel %vm746, %v438, 0.0
  %v751 = vadd.f32 %v749, %v750
  %v752 = vsel %vm746, %v443, 0.0
  %v753 = vadd.f32 %v751, %v752
  %v754 = vsel %vm746, %v448, 0.0
  %v755 = vadd.f32 %v753, %v754
  %v756 = vsel %vm746, %v453, 0.0
  %v757 = vadd.f32 %v755, %v756
  %v758 = vsel %vm746, %v458, 0.0
  %v759 = vadd.f32 %v757, %v758
  %v760 = vsel %vm746, %v463, 0.0
  %v761 = vadd.f32 %v759, %v760
  %v762 = vsel %vm746, %v468, 0.0
  %v763 = vadd.f32 %v761, %v762
  %v764 = vsel %vm746, %v473, 0.0
  %v765 = vadd.f32 %v763, %v764
  %v766 = vsel %vm746, %v478, 0.0
  %v767 = vadd.f32 %v765, %v766
  %v768 = vsel %vm746, %v483, 0.0
  %v769 = vadd.f32 %v767, %v768
  %v770 = vsel %vm746, %v488, 0.0
  %v771 = vadd.f32 %v769, %v770
  %v772 = vsel %vm746, %v493, 0.0
  %v773 = vadd.f32 %v771, %v772
  %v774 = vsel %vm746, %v498, 0.0
  %v775 = vadd.f32 %v773, %v774
  %v776 = vsel %vm746, %v503, 0.0
  %v777 = vadd.f32 %v775, %v776
  %v778 = vsel %vm746, %v508, 0.0
  %v779 = vadd.f32 %v777, %v778
  %v780 = vsel %vm746, %v513, 0.0
  %v781 = vadd.f32 %v779, %v780
  %v782 = vsel %vm746, %v518, 0.0
  %v783 = vadd.f32 %v781, %v782
  %v784 = vsel %vm746, %v523, 0.0
  %v785 = vadd.f32 %v783, %v784
  %v786 = vsel %vm746, %v528, 0.0
  %v787 = vadd.f32 %v785, %v786
  %v788 = vsel %vm746, %v533, 0.0
  %v789 = vadd.f32 %v787, %v788
  %v790 = vsel %vm746, %v538, 0.0
  %v791 = vadd.f32 %v789, %v790
  %v792 = vsel %vm746, %v543, 0.0
  %v793 = vadd.f32 %v791, %v792
  %v794 = vsel %vm746, %v548, 0.0
  %v795 = vadd.f32 %v793, %v794
  %v796 = vsel %vm746, %v553, 0.0
  %v797 = vadd.f32 %v795, %v796
  %v798 = vsel %vm746, %v558, 0.0
  %v799 = vadd.f32 %v797, %v798
  %v800 = vsel %vm746, %v563, 0.0
  %v801 = vadd.f32 %v799, %v800
  %v802 = vsel %vm746, %v568, 0.0
  %v803 = vadd.f32 %v801, %v802
  %v804 = vsel %vm746, %v573, 0.0
  %v805 = vadd.f32 %v803, %v804
  %v806 = vsel %vm746, %v578, 0.0
  %v807 = vadd.f32 %v805, %v806
  %v808 = vsel %vm746, %v583, 0.0
  %v809 = vadd.f32 %v807, %v808
  %v810 = vsel %vm746, %v588, 0.0
  %v811 = vadd.f32 %v809, %v810
  %v812 = vsel %vm746, %v593, 0.0
  %v813 = vadd.f32 %v811, %v812
  %v814 = vsel %vm746, %v598, 0.0
  %v815 = vadd.f32 %v813, %v814
  %v816 = vsel %vm746, %v603, 0.0
  %v817 = vadd.f32 %v815, %v816
  %v818 = vsel %vm746, %v608, 0.0
  %v819 = vadd.f32 %v817, %v818
  %v820 = vsel %vm746, %v613, 0.0
  %v821 = vadd.f32 %v819, %v820
  %v822 = vsel %vm746, %v618, 0.0
  %v823 = vadd.f32 %v821, %v822
  %v824 = vsel %vm746, %v623, 0.0
  %v825 = vadd.f32 %v823, %v824
  %v826 = vsel %vm746, %v628, 0.0
  %v827 = vadd.f32 %v825, %v826
  %v828 = vsel %vm746, %v633, 0.0
  %v829 = vadd.f32 %v827, %v828
  %v830 = vsel %vm746, %v638, 0.0
  %v831 = vadd.f32 %v829, %v830
  %v832 = vsel %vm746, %v643, 0.0
  %v833 = vadd.f32 %v831, %v832
  %v834 = vsel %vm746, %v648, 0.0
  %v835 = vadd.f32 %v833, %v834
  %v836 = vsel %vm746, %v653, 0.0
  %v837 = vadd.f32 %v835, %v836
  %v838 = vsel %vm746, %v658, 0.0
  %v839 = vadd.f32 %v837, %v838
  %v840 = vsel %vm746, %v663, 0.0
  %v841 = vadd.f32 %v839, %v840
  %v842 = vsel %vm746, %v668, 0.0
  %v843 = vadd.f32 %v841, %v842
  %v844 = vsel %vm746, %v673, 0.0
  %v845 = vadd.f32 %v843, %v844
  %v846 = vsel %vm746, %v678, 0.0
  %v847 = vadd.f32 %v845, %v846
  %v848 = vsel %vm746, %v683, 0.0
  %v849 = vadd.f32 %v847, %v848
  %v850 = vsel %vm746, %v688, 0.0
  %v851 = vadd.f32 %v849, %v850
  %v852 = vsel %vm746, %v693, 0.0
  %v853 = vadd.f32 %v851, %v852
  %v854 = vsel %vm746, %v698, 0.0
  %v855 = vadd.f32 %v853, %v854
  %v856 = vsel %vm746, %v703, 0.0
  %v857 = vadd.f32 %v855, %v856
  %v858 = vsel %vm746, %v708, 0.0
  %v859 = vadd.f32 %v857, %v858
  %v860 = vsel %vm746, %v713, 0.0
  %v861 = vadd.f32 %v859, %v860
  %v862 = vsel %vm746, %v718, 0.0
  %v863 = vadd.f32 %v861, %v862
  %v864 = vsel %vm746, %v723, 0.0
  %v865 = vadd.f32 %v863, %v864
  %v866 = vsel %vm746, %v728, 0.0
  %v867 = vadd.f32 %v865, %v866
  %v868 = vsel %vm746, %v733, 0.0
  %v869 = vadd.f32 %v867, %v868
  %v870 = vsel %vm746, %v738, 0.0
  %v871 = vadd.f32 %v869, %v870
  %v872 = vsel %vm746, %v743, 0.0
  %v873 = vadd.f32 %v871, %v872
  %v874 = vrot.slane %v873, 4
  %v875 = vadd.f32 %v873, %v874
  %v876 = vrot.slane %v875, 2
  %v877 = vadd.f32 %v875, %v876
  %v878 = vrot.slane %v877, 1
  %v879 = vadd.f32 %v877, %v878
  %v880 = vrcp.pop 512.0
  %v881 = vmul.f32 %v879, %v880
  %v882 = vsub.f32 %v428, %v881
  %v883 = vsub.f32 %v433, %v881
  %v884 = vsub.f32 %v438, %v881
  %v885 = vsub.f32 %v443, %v881
  %v886 = vsub.f32 %v448, %v881
  %v887 = vsub.f32 %v453, %v881
  %v888 = vsub.f32 %v458, %v881
  %v889 = vsub.f32 %v463, %v881
  %v890 = vsub.f32 %v468, %v881
  %v891 = vsub.f32 %v473, %v881
  %v892 = vsub.f32 %v478, %v881
  %v893 = vsub.f32 %v483, %v881
  %v894 = vsub.f32 %v488, %v881
  %v895 = vsub.f32 %v493, %v881
  %v896 = vsub.f32 %v498, %v881
  %v897 = vsub.f32 %v503, %v881
  %v898 = vsub.f32 %v508, %v881
  %v899 = vsub.f32 %v513, %v881
  %v900 = vsub.f32 %v518, %v881
  %v901 = vsub.f32 %v523, %v881
  %v902 = vsub.f32 %v528, %v881
  %v903 = vsub.f32 %v533, %v881
  %v904 = vsub.f32 %v538, %v881
  %v905 = vsub.f32 %v543, %v881
  %v906 = vsub.f32 %v548, %v881
  %v907 = vsub.f32 %v553, %v881
  %v908 = vsub.f32 %v558, %v881
  %v909 = vsub.f32 %v563, %v881
  %v910 = vsub.f32 %v568, %v881
  %v911 = vsub.f32 %v573, %v881
  %v912 = vsub.f32 %v578, %v881
  %v913 = vsub.f32 %v583, %v881
  %v914 = vsub.f32 %v588, %v881
  %v915 = vsub.f32 %v593, %v881
  %v916 = vsub.f32 %v598, %v881
  %v917 = vsub.f32 %v603, %v881
  %v918 = vsub.f32 %v608, %v881
  %v919 = vsub.f32 %v613, %v881
  %v920 = vsub.f32 %v618, %v881
  %v921 = vsub.f32 %v623, %v881
  %v922 = vsub.f32 %v628, %v881
  %v923 = vsub.f32 %v633, %v881
  %v924 = vsub.f32 %v638, %v881
  %v925 = vsub.f32 %v643, %v881
  %v926 = vsub.f32 %v648, %v881
  %v927 = vsub.f32 %v653, %v881
  %v928 = vsub.f32 %v658, %v881
  %v929 = vsub.f32 %v663, %v881
  %v930 = vsub.f32 %v668, %v881
  %v931 = vsub.f32 %v673, %v881
  %v932 = vsub.f32 %v678, %v881
  %v933 = vsub.f32 %v683, %v881
  %v934 = vsub.f32 %v688, %v881
  %v935 = vsub.f32 %v693, %v881
  %v936 = vsub.f32 %v698, %v881
  %v937 = vsub.f32 %v703, %v881
  %v938 = vsub.f32 %v708, %v881
  %v939 = vsub.f32 %v713, %v881
  %v940 = vsub.f32 %v718, %v881
  %v941 = vsub.f32 %v723, %v881
  %v942 = vsub.f32 %v728, %v881
  %v943 = vsub.f32 %v733, %v881
  %v944 = vsub.f32 %v738, %v881
  %v945 = vsub.f32 %v743, %v881
  %v946 = vmul.f32 %v882, %v882
  %v947 = vmul.f32 %v883, %v883
  %v948 = vmul.f32 %v884, %v884
  %v949 = vmul.f32 %v885, %v885
  %v950 = vmul.f32 %v886, %v886
  %v951 = vmul.f32 %v887, %v887
  %v952 = vmul.f32 %v888, %v888
  %v953 = vmul.f32 %v889, %v889
  %v954 = vmul.f32 %v890, %v890
  %v955 = vmul.f32 %v891, %v891
  %v956 = vmul.f32 %v892, %v892
  %v957 = vmul.f32 %v893, %v893
  %v958 = vmul.f32 %v894, %v894
  %v959 = vmul.f32 %v895, %v895
  %v960 = vmul.f32 %v896, %v896
  %v961 = vmul.f32 %v897, %v897
  %v962 = vmul.f32 %v898, %v898
  %v963 = vmul.f32 %v899, %v899
  %v964 = vmul.f32 %v900, %v900
  %v965 = vmul.f32 %v901, %v901
  %v966 = vmul.f32 %v902, %v902
  %v967 = vmul.f32 %v903, %v903
  %v968 = vmul.f32 %v904, %v904
  %v969 = vmul.f32 %v905, %v905
  %v970 = vmul.f32 %v906, %v906
  %v971 = vmul.f32 %v907, %v907
  %v972 = vmul.f32 %v908, %v908
  %v973 = vmul.f32 %v909, %v909
  %v974 = vmul.f32 %v910, %v910
  %v975 = vmul.f32 %v911, %v911
  %v976 = vmul.f32 %v912, %v912
  %v977 = vmul.f32 %v913, %v913
  %v978 = vmul.f32 %v914, %v914
  %v979 = vmul.f32 %v915, %v915
  %v980 = vmul.f32 %v916, %v916
  %v981 = vmul.f32 %v917, %v917
  %v982 = vmul.f32 %v918, %v918
  %v983 = vmul.f32 %v919, %v919
  %v984 = vmul.f32 %v920, %v920
  %v985 = vmul.f32 %v921, %v921
  %v986 = vmul.f32 %v922, %v922
  %v987 = vmul.f32 %v923, %v923
  %v988 = vmul.f32 %v924, %v924
  %v989 = vmul.f32 %v925, %v925
  %v990 = vmul.f32 %v926, %v926
  %v991 = vmul.f32 %v927, %v927
  %v992 = vmul.f32 %v928, %v928
  %v993 = vmul.f32 %v929, %v929
  %v994 = vmul.f32 %v930, %v930
  %v995 = vmul.f32 %v931, %v931
  %v996 = vmul.f32 %v932, %v932
  %v997 = vmul.f32 %v933, %v933
  %v998 = vmul.f32 %v934, %v934
  %v999 = vmul.f32 %v935, %v935
  %v1000 = vmul.f32 %v936, %v936
  %v1001 = vmul.f32 %v937, %v937
  %v1002 = vmul.f32 %v938, %v938
  %v1003 = vmul.f32 %v939, %v939
  %v1004 = vmul.f32 %v940, %v940
  %v1005 = vmul.f32 %v941, %v941
  %v1006 = vmul.f32 %v942, %v942
  %v1007 = vmul.f32 %v943, %v943
  %v1008 = vmul.f32 %v944, %v944
  %v1009 = vmul.f32 %v945, %v945
  %v1010 = vsel %vm746, %v946, 0.0
  %v1011 = vsel %vm746, %v947, 0.0
  %v1012 = vadd.f32 %v1010, %v1011
  %v1013 = vsel %vm746, %v948, 0.0
  %v1014 = vadd.f32 %v1012, %v1013
  %v1015 = vsel %vm746, %v949, 0.0
  %v1016 = vadd.f32 %v1014, %v1015
  %v1017 = vsel %vm746, %v950, 0.0
  %v1018 = vadd.f32 %v1016, %v1017
  %v1019 = vsel %vm746, %v951, 0.0
  %v1020 = vadd.f32 %v1018, %v1019
  %v1021 = vsel %vm746, %v952, 0.0
  %v1022 = vadd.f32 %v1020, %v1021
  %v1023 = vsel %vm746, %v953, 0.0
  %v1024 = vadd.f32 %v1022, %v1023
  %v1025 = vsel %vm746, %v954, 0.0
  %v1026 = vadd.f32 %v1024, %v1025
  %v1027 = vsel %vm746, %v955, 0.0
  %v1028 = vadd.f32 %v1026, %v1027
  %v1029 = vsel %vm746, %v956, 0.0
  %v1030 = vadd.f32 %v1028, %v1029
  %v1031 = vsel %vm746, %v957, 0.0
  %v1032 = vadd.f32 %v1030, %v1031
  %v1033 = vsel %vm746, %v958, 0.0
  %v1034 = vadd.f32 %v1032, %v1033
  %v1035 = vsel %vm746, %v959, 0.0
  %v1036 = vadd.f32 %v1034, %v1035
  %v1037 = vsel %vm746, %v960, 0.0
  %v1038 = vadd.f32 %v1036, %v1037
  %v1039 = vsel %vm746, %v961, 0.0
  %v1040 = vadd.f32 %v1038, %v1039
  %v1041 = vsel %vm746, %v962, 0.0
  %v1042 = vadd.f32 %v1040, %v1041
  %v1043 = vsel %vm746, %v963, 0.0
  %v1044 = vadd.f32 %v1042, %v1043
  %v1045 = vsel %vm746, %v964, 0.0
  %v1046 = vadd.f32 %v1044, %v1045
  %v1047 = vsel %vm746, %v965, 0.0
  %v1048 = vadd.f32 %v1046, %v1047
  %v1049 = vsel %vm746, %v966, 0.0
  %v1050 = vadd.f32 %v1048, %v1049
  %v1051 = vsel %vm746, %v967, 0.0
  %v1052 = vadd.f32 %v1050, %v1051
  %v1053 = vsel %vm746, %v968, 0.0
  %v1054 = vadd.f32 %v1052, %v1053
  %v1055 = vsel %vm746, %v969, 0.0
  %v1056 = vadd.f32 %v1054, %v1055
  %v1057 = vsel %vm746, %v970, 0.0
  %v1058 = vadd.f32 %v1056, %v1057
  %v1059 = vsel %vm746, %v971, 0.0
  %v1060 = vadd.f32 %v1058, %v1059
  %v1061 = vsel %vm746, %v972, 0.0
  %v1062 = vadd.f32 %v1060, %v1061
  %v1063 = vsel %vm746, %v973, 0.0
  %v1064 = vadd.f32 %v1062, %v1063
  %v1065 = vsel %vm746, %v974, 0.0
  %v1066 = vadd.f32 %v1064, %v1065
  %v1067 = vsel %vm746, %v975, 0.0
  %v1068 = vadd.f32 %v1066, %v1067
  %v1069 = vsel %vm746, %v976, 0.0
  %v1070 = vadd.f32 %v1068, %v1069
  %v1071 = vsel %vm746, %v977, 0.0
  %v1072 = vadd.f32 %v1070, %v1071
  %v1073 = vsel %vm746, %v978, 0.0
  %v1074 = vadd.f32 %v1072, %v1073
  %v1075 = vsel %vm746, %v979, 0.0
  %v1076 = vadd.f32 %v1074, %v1075
  %v1077 = vsel %vm746, %v980, 0.0
  %v1078 = vadd.f32 %v1076, %v1077
  %v1079 = vsel %vm746, %v981, 0.0
  %v1080 = vadd.f32 %v1078, %v1079
  %v1081 = vsel %vm746, %v982, 0.0
  %v1082 = vadd.f32 %v1080, %v1081
  %v1083 = vsel %vm746, %v983, 0.0
  %v1084 = vadd.f32 %v1082, %v1083
  %v1085 = vsel %vm746, %v984, 0.0
  %v1086 = vadd.f32 %v1084, %v1085
  %v1087 = vsel %vm746, %v985, 0.0
  %v1088 = vadd.f32 %v1086, %v1087
  %v1089 = vsel %vm746, %v986, 0.0
  %v1090 = vadd.f32 %v1088, %v1089
  %v1091 = vsel %vm746, %v987, 0.0
  %v1092 = vadd.f32 %v1090, %v1091
  %v1093 = vsel %vm746, %v988, 0.0
  %v1094 = vadd.f32 %v1092, %v1093
  %v1095 = vsel %vm746, %v989, 0.0
  %v1096 = vadd.f32 %v1094, %v1095
  %v1097 = vsel %vm746, %v990, 0.0
  %v1098 = vadd.f32 %v1096, %v1097
  %v1099 = vsel %vm746, %v991, 0.0
  %v1100 = vadd.f32 %v1098, %v1099
  %v1101 = vsel %vm746, %v992, 0.0
  %v1102 = vadd.f32 %v1100, %v1101
  %v1103 = vsel %vm746, %v993, 0.0
  %v1104 = vadd.f32 %v1102, %v1103
  %v1105 = vsel %vm746, %v994, 0.0
  %v1106 = vadd.f32 %v1104, %v1105
  %v1107 = vsel %vm746, %v995, 0.0
  %v1108 = vadd.f32 %v1106, %v1107
  %v1109 = vsel %vm746, %v996, 0.0
  %v1110 = vadd.f32 %v1108, %v1109
  %v1111 = vsel %vm746, %v997, 0.0
  %v1112 = vadd.f32 %v1110, %v1111
  %v1113 = vsel %vm746, %v998, 0.0
  %v1114 = vadd.f32 %v1112, %v1113
  %v1115 = vsel %vm746, %v999, 0.0
  %v1116 = vadd.f32 %v1114, %v1115
  %v1117 = vsel %vm746, %v1000, 0.0
  %v1118 = vadd.f32 %v1116, %v1117
  %v1119 = vsel %vm746, %v1001, 0.0
  %v1120 = vadd.f32 %v1118, %v1119
  %v1121 = vsel %vm746, %v1002, 0.0
  %v1122 = vadd.f32 %v1120, %v1121
  %v1123 = vsel %vm746, %v1003, 0.0
  %v1124 = vadd.f32 %v1122, %v1123
  %v1125 = vsel %vm746, %v1004, 0.0
  %v1126 = vadd.f32 %v1124, %v1125
  %v1127 = vsel %vm746, %v1005, 0.0
  %v1128 = vadd.f32 %v1126, %v1127
  %v1129 = vsel %vm746, %v1006, 0.0
  %v1130 = vadd.f32 %v1128, %v1129
  %v1131 = vsel %vm746, %v1007, 0.0
  %v1132 = vadd.f32 %v1130, %v1131
  %v1133 = vsel %vm746, %v1008, 0.0
  %v1134 = vadd.f32 %v1132, %v1133
  %v1135 = vsel %vm746, %v1009, 0.0
  %v1136 = vadd.f32 %v1134, %v1135
  %v1137 = vrot.slane %v1136, 4
  %v1138 = vadd.f32 %v1136, %v1137
  %v1139 = vrot.slane %v1138, 2
  %v1140 = vadd.f32 %v1138, %v1139
  %v1141 = vrot.slane %v1140, 1
  %v1142 = vadd.f32 %v1140, %v1141
  %v1143 = vmul.f32 %v1142, %v880
  %v1144 = vld [vmem:[%s2] sm:$0x1]
  %v1145 = vadd.f32 %v1143, 1e-05
  %v1146 = vrsqrt.pop %v1145
  %v1147 = vmul.f32 %v1144, %v1146
  %v1149 = vlaneseq
  %v1150 = vshrl.u32 %v1149, 7
  %v1151 = vsub.s32 0, %v1150
  %v1152 = vrot.slane %v1147, %v1151
  %v1154 = vmul.f32 %v882, %v1152
  %v1155 = vmul.f32 %v883, %v1152
  %v1156 = vmul.f32 %v884, %v1152
  %v1157 = vmul.f32 %v885, %v1152
  %v1158 = vmul.f32 %v886, %v1152
  %v1159 = vmul.f32 %v887, %v1152
  %v1160 = vmul.f32 %v888, %v1152
  %v1161 = vmul.f32 %v889, %v1152
  %v1162 = vmul.f32 %v890, %v1152
  %v1163 = vmul.f32 %v891, %v1152
  %v1164 = vmul.f32 %v892, %v1152
  %v1165 = vmul.f32 %v893, %v1152
  %v1166 = vmul.f32 %v894, %v1152
  %v1167 = vmul.f32 %v895, %v1152
  %v1168 = vmul.f32 %v896, %v1152
  %v1169 = vmul.f32 %v897, %v1152
  %v1170 = vmul.f32 %v898, %v1152
  %v1171 = vmul.f32 %v899, %v1152
  %v1172 = vmul.f32 %v900, %v1152
  %v1173 = vmul.f32 %v901, %v1152
  %v1174 = vmul.f32 %v902, %v1152
  %v1175 = vmul.f32 %v903, %v1152
  %v1176 = vmul.f32 %v904, %v1152
  %v1177 = vmul.f32 %v905, %v1152
  %v1178 = vmul.f32 %v906, %v1152
  %v1179 = vmul.f32 %v907, %v1152
  %v1180 = vmul.f32 %v908, %v1152
  %v1181 = vmul.f32 %v909, %v1152
  %v1182 = vmul.f32 %v910, %v1152
  %v1183 = vmul.f32 %v911, %v1152
  %v1184 = vmul.f32 %v912, %v1152
  %v1185 = vmul.f32 %v913, %v1152
  %v1186 = vmul.f32 %v914, %v1152
  %v1187 = vmul.f32 %v915, %v1152
  %v1188 = vmul.f32 %v916, %v1152
  %v1189 = vmul.f32 %v917, %v1152
  %v1190 = vmul.f32 %v918, %v1152
  %v1191 = vmul.f32 %v919, %v1152
  %v1192 = vmul.f32 %v920, %v1152
  %v1193 = vmul.f32 %v921, %v1152
  %v1194 = vmul.f32 %v922, %v1152
  %v1195 = vmul.f32 %v923, %v1152
  %v1196 = vmul.f32 %v924, %v1152
  %v1197 = vmul.f32 %v925, %v1152
  %v1198 = vmul.f32 %v926, %v1152
  %v1199 = vmul.f32 %v927, %v1152
  %v1200 = vmul.f32 %v928, %v1152
  %v1201 = vmul.f32 %v929, %v1152
  %v1202 = vmul.f32 %v930, %v1152
  %v1203 = vmul.f32 %v931, %v1152
  %v1204 = vmul.f32 %v932, %v1152
  %v1205 = vmul.f32 %v933, %v1152
  %v1206 = vmul.f32 %v934, %v1152
  %v1207 = vmul.f32 %v935, %v1152
  %v1208 = vmul.f32 %v936, %v1152
  %v1209 = vmul.f32 %v937, %v1152
  %v1210 = vmul.f32 %v938, %v1152
  %v1211 = vmul.f32 %v939, %v1152
  %v1212 = vmul.f32 %v940, %v1152
  %v1213 = vmul.f32 %v941, %v1152
  %v1214 = vmul.f32 %v942, %v1152
  %v1215 = vmul.f32 %v943, %v1152
  %v1216 = vmul.f32 %v944, %v1152
  %v1217 = vmul.f32 %v945, %v1152
  %v1218 = vld [vmem:[%s3] sm:$0x1]
  %v1220 = vlaneseq
  %v1221 = vshrl.u32 %v1220, 7
  %v1222 = vsub.s32 0, %v1221
  %v1223 = vrot.slane %v1218, %v1222
  %v1225 = vadd.f32 %v1154, %v1223
  %v1226 = vadd.f32 %v1155, %v1223
  %v1227 = vadd.f32 %v1156, %v1223
  %v1228 = vadd.f32 %v1157, %v1223
  %v1229 = vadd.f32 %v1158, %v1223
  %v1230 = vadd.f32 %v1159, %v1223
  %v1231 = vadd.f32 %v1160, %v1223
  %v1232 = vadd.f32 %v1161, %v1223
  %v1233 = vadd.f32 %v1162, %v1223
  %v1234 = vadd.f32 %v1163, %v1223
  %v1235 = vadd.f32 %v1164, %v1223
  %v1236 = vadd.f32 %v1165, %v1223
  %v1237 = vadd.f32 %v1166, %v1223
  %v1238 = vadd.f32 %v1167, %v1223
  %v1239 = vadd.f32 %v1168, %v1223
  %v1240 = vadd.f32 %v1169, %v1223
  %v1241 = vadd.f32 %v1170, %v1223
  %v1242 = vadd.f32 %v1171, %v1223
  %v1243 = vadd.f32 %v1172, %v1223
  %v1244 = vadd.f32 %v1173, %v1223
  %v1245 = vadd.f32 %v1174, %v1223
  %v1246 = vadd.f32 %v1175, %v1223
  %v1247 = vadd.f32 %v1176, %v1223
  %v1248 = vadd.f32 %v1177, %v1223
  %v1249 = vadd.f32 %v1178, %v1223
  %v1250 = vadd.f32 %v1179, %v1223
  %v1251 = vadd.f32 %v1180, %v1223
  %v1252 = vadd.f32 %v1181, %v1223
  %v1253 = vadd.f32 %v1182, %v1223
  %v1254 = vadd.f32 %v1183, %v1223
  %v1255 = vadd.f32 %v1184, %v1223
  %v1256 = vadd.f32 %v1185, %v1223
  %v1257 = vadd.f32 %v1186, %v1223
  %v1258 = vadd.f32 %v1187, %v1223
  %v1259 = vadd.f32 %v1188, %v1223
  %v1260 = vadd.f32 %v1189, %v1223
  %v1261 = vadd.f32 %v1190, %v1223
  %v1262 = vadd.f32 %v1191, %v1223
  %v1263 = vadd.f32 %v1192, %v1223
  %v1264 = vadd.f32 %v1193, %v1223
  %v1265 = vadd.f32 %v1194, %v1223
  %v1266 = vadd.f32 %v1195, %v1223
  %v1267 = vadd.f32 %v1196, %v1223
  %v1268 = vadd.f32 %v1197, %v1223
  %v1269 = vadd.f32 %v1198, %v1223
  %v1270 = vadd.f32 %v1199, %v1223
  %v1271 = vadd.f32 %v1200, %v1223
  %v1272 = vadd.f32 %v1201, %v1223
  %v1273 = vadd.f32 %v1202, %v1223
  %v1274 = vadd.f32 %v1203, %v1223
  %v1275 = vadd.f32 %v1204, %v1223
  %v1276 = vadd.f32 %v1205, %v1223
  %v1277 = vadd.f32 %v1206, %v1223
  %v1278 = vadd.f32 %v1207, %v1223
  %v1279 = vadd.f32 %v1208, %v1223
  %v1280 = vadd.f32 %v1209, %v1223
  %v1281 = vadd.f32 %v1210, %v1223
  %v1282 = vadd.f32 %v1211, %v1223
  %v1283 = vadd.f32 %v1212, %v1223
  %v1284 = vadd.f32 %v1213, %v1223
  %v1285 = vadd.f32 %v1214, %v1223
  %v1286 = vadd.f32 %v1215, %v1223
  %v1287 = vadd.f32 %v1216, %v1223
  %v1288 = vadd.f32 %v1217, %v1223
  %v1289 = vmax.f32 %v1225, 0.0
  %v1290 = vmax.f32 %v1226, 0.0
  %v1291 = vmax.f32 %v1227, 0.0
  %v1292 = vmax.f32 %v1228, 0.0
  %v1293 = vmax.f32 %v1229, 0.0
  %v1294 = vmax.f32 %v1230, 0.0
  %v1295 = vmax.f32 %v1231, 0.0
  %v1296 = vmax.f32 %v1232, 0.0
  %v1297 = vmax.f32 %v1233, 0.0
  %v1298 = vmax.f32 %v1234, 0.0
  %v1299 = vmax.f32 %v1235, 0.0
  %v1300 = vmax.f32 %v1236, 0.0
  %v1301 = vmax.f32 %v1237, 0.0
  %v1302 = vmax.f32 %v1238, 0.0
  %v1303 = vmax.f32 %v1239, 0.0
  %v1304 = vmax.f32 %v1240, 0.0
  %v1305 = vmax.f32 %v1241, 0.0
  %v1306 = vmax.f32 %v1242, 0.0
  %v1307 = vmax.f32 %v1243, 0.0
  %v1308 = vmax.f32 %v1244, 0.0
  %v1309 = vmax.f32 %v1245, 0.0
  %v1310 = vmax.f32 %v1246, 0.0
  %v1311 = vmax.f32 %v1247, 0.0
  %v1312 = vmax.f32 %v1248, 0.0
  %v1313 = vmax.f32 %v1249, 0.0
  %v1314 = vmax.f32 %v1250, 0.0
  %v1315 = vmax.f32 %v1251, 0.0
  %v1316 = vmax.f32 %v1252, 0.0
  %v1317 = vmax.f32 %v1253, 0.0
  %v1318 = vmax.f32 %v1254, 0.0
  %v1319 = vmax.f32 %v1255, 0.0
  %v1320 = vmax.f32 %v1256, 0.0
  %v1321 = vmax.f32 %v1257, 0.0
  %v1322 = vmax.f32 %v1258, 0.0
  %v1323 = vmax.f32 %v1259, 0.0
  %v1324 = vmax.f32 %v1260, 0.0
  %v1325 = vmax.f32 %v1261, 0.0
  %v1326 = vmax.f32 %v1262, 0.0
  %v1327 = vmax.f32 %v1263, 0.0
  %v1328 = vmax.f32 %v1264, 0.0
  %v1329 = vmax.f32 %v1265, 0.0
  %v1330 = vmax.f32 %v1266, 0.0
  %v1331 = vmax.f32 %v1267, 0.0
  %v1332 = vmax.f32 %v1268, 0.0
  %v1333 = vmax.f32 %v1269, 0.0
  %v1334 = vmax.f32 %v1270, 0.0
  %v1335 = vmax.f32 %v1271, 0.0
  %v1336 = vmax.f32 %v1272, 0.0
  %v1337 = vmax.f32 %v1273, 0.0
  %v1338 = vmax.f32 %v1274, 0.0
  %v1339 = vmax.f32 %v1275, 0.0
  %v1340 = vmax.f32 %v1276, 0.0
  %v1341 = vmax.f32 %v1277, 0.0
  %v1342 = vmax.f32 %v1278, 0.0
  %v1343 = vmax.f32 %v1279, 0.0
  %v1344 = vmax.f32 %v1280, 0.0
  %v1345 = vmax.f32 %v1281, 0.0
  %v1346 = vmax.f32 %v1282, 0.0
  %v1347 = vmax.f32 %v1283, 0.0
  %v1348 = vmax.f32 %v1284, 0.0
  %v1349 = vmax.f32 %v1285, 0.0
  %v1350 = vmax.f32 %v1286, 0.0
  %v1351 = vmax.f32 %v1287, 0.0
  %v1352 = vmax.f32 %v1288, 0.0
  %1353 = vst.msk [vmem:[%s4] sm:$0xff] %vm746, %v1289
  %1354 = vst.msk [vmem:[%s4 + $0x8] sm:$0xff] %vm746, %v1290
  %1355 = vst.msk [vmem:[%s4 + $0x10] sm:$0xff] %vm746, %v1291
  %1356 = vst.msk [vmem:[%s4 + $0x18] sm:$0xff] %vm746, %v1292
  %1357 = vst.msk [vmem:[%s4 + $0x20] sm:$0xff] %vm746, %v1293
  %1358 = vst.msk [vmem:[%s4 + $0x28] sm:$0xff] %vm746, %v1294
  %1359 = vst.msk [vmem:[%s4 + $0x30] sm:$0xff] %vm746, %v1295
  %1360 = vst.msk [vmem:[%s4 + $0x38] sm:$0xff] %vm746, %v1296
  %1361 = vst.msk [vmem:[%s4 + $0x40] sm:$0xff] %vm746, %v1297
  %1362 = vst.msk [vmem:[%s4 + $0x48] sm:$0xff] %vm746, %v1298
  %1363 = vst.msk [vmem:[%s4 + $0x50] sm:$0xff] %vm746, %v1299
  %1364 = vst.msk [vmem:[%s4 + $0x58] sm:$0xff] %vm746, %v1300
  %1365 = vst.msk [vmem:[%s4 + $0x60] sm:$0xff] %vm746, %v1301
  %1366 = vst.msk [vmem:[%s4 + $0x68] sm:$0xff] %vm746, %v1302
  %1367 = vst.msk [vmem:[%s4 + $0x70] sm:$0xff] %vm746, %v1303
  %1368 = vst.msk [vmem:[%s4 + $0x78] sm:$0xff] %vm746, %v1304
  %1369 = vst.msk [vmem:[%s4 + $0x80] sm:$0xff] %vm746, %v1305
  %1370 = vst.msk [vmem:[%s4 + $0x88] sm:$0xff] %vm746, %v1306
  %1371 = vst.msk [vmem:[%s4 + $0x90] sm:$0xff] %vm746, %v1307
  %1372 = vst.msk [vmem:[%s4 + $0x98] sm:$0xff] %vm746, %v1308
  %1373 = vst.msk [vmem:[%s4 + $0xa0] sm:$0xff] %vm746, %v1309
  %1374 = vst.msk [vmem:[%s4 + $0xa8] sm:$0xff] %vm746, %v1310
  %1375 = vst.msk [vmem:[%s4 + $0xb0] sm:$0xff] %vm746, %v1311
  %1376 = vst.msk [vmem:[%s4 + $0xb8] sm:$0xff] %vm746, %v1312
  %1377 = vst.msk [vmem:[%s4 + $0xc0] sm:$0xff] %vm746, %v1313
  %1378 = vst.msk [vmem:[%s4 + $0xc8] sm:$0xff] %vm746, %v1314
  %1379 = vst.msk [vmem:[%s4 + $0xd0] sm:$0xff] %vm746, %v1315
  %1380 = vst.msk [vmem:[%s4 + $0xd8] sm:$0xff] %vm746, %v1316
  %1381 = vst.msk [vmem:[%s4 + $0xe0] sm:$0xff] %vm746, %v1317
  %1382 = vst.msk [vmem:[%s4 + $0xe8] sm:$0xff] %vm746, %v1318
  %1383 = vst.msk [vmem:[%s4 + $0xf0] sm:$0xff] %vm746, %v1319
  %1384 = vst.msk [vmem:[%s4 + $0xf8] sm:$0xff] %vm746, %v1320
  %1385 = vst.msk [vmem:[%s4 + $0x100] sm:$0xff] %vm746, %v1321
  %1386 = vst.msk [vmem:[%s4 + $0x108] sm:$0xff] %vm746, %v1322
  %1387 = vst.msk [vmem:[%s4 + $0x110] sm:$0xff] %vm746, %v1323
  %1388 = vst.msk [vmem:[%s4 + $0x118] sm:$0xff] %vm746, %v1324
  %1389 = vst.msk [vmem:[%s4 + $0x120] sm:$0xff] %vm746, %v1325
  %1390 = vst.msk [vmem:[%s4 + $0x128] sm:$0xff] %vm746, %v1326
  %1391 = vst.msk [vmem:[%s4 + $0x130] sm:$0xff] %vm746, %v1327
  %1392 = vst.msk [vmem:[%s4 + $0x138] sm:$0xff] %vm746, %v1328
  %1393 = vst.msk [vmem:[%s4 + $0x140] sm:$0xff] %vm746, %v1329
  %1394 = vst.msk [vmem:[%s4 + $0x148] sm:$0xff] %vm746, %v1330
  %1395 = vst.msk [vmem:[%s4 + $0x150] sm:$0xff] %vm746, %v1331
  %1396 = vst.msk [vmem:[%s4 + $0x158] sm:$0xff] %vm746, %v1332
  %1397 = vst.msk [vmem:[%s4 + $0x160] sm:$0xff] %vm746, %v1333
  %1398 = vst.msk [vmem:[%s4 + $0x168] sm:$0xff] %vm746, %v1334
  %1399 = vst.msk [vmem:[%s4 + $0x170] sm:$0xff] %vm746, %v1335
  %1400 = vst.msk [vmem:[%s4 + $0x178] sm:$0xff] %vm746, %v1336
  %1401 = vst.msk [vmem:[%s4 + $0x180] sm:$0xff] %vm746, %v1337
  %1402 = vst.msk [vmem:[%s4 + $0x188] sm:$0xff] %vm746, %v1338
  %1403 = vst.msk [vmem:[%s4 + $0x190] sm:$0xff] %vm746, %v1339
  %1404 = vst.msk [vmem:[%s4 + $0x198] sm:$0xff] %vm746, %v1340
  %1405 = vst.msk [vmem:[%s4 + $0x1a0] sm:$0xff] %vm746, %v1341
  %1406 = vst.msk [vmem:[%s4 + $0x1a8] sm:$0xff] %vm746, %v1342
  %1407 = vst.msk [vmem:[%s4 + $0x1b0] sm:$0xff] %vm746, %v1343
  %1408 = vst.msk [vmem:[%s4 + $0x1b8] sm:$0xff] %vm746, %v1344
  %1409 = vst.msk [vmem:[%s4 + $0x1c0] sm:$0xff] %vm746, %v1345
  %1410 = vst.msk [vmem:[%s4 + $0x1c8] sm:$0xff] %vm746, %v1346
  %1411 = vst.msk [vmem:[%s4 + $0x1d0] sm:$0xff] %vm746, %v1347
  %1412 = vst.msk [vmem:[%s4 + $0x1d8] sm:$0xff] %vm746, %v1348
  %1413 = vst.msk [vmem:[%s4 + $0x1e0] sm:$0xff] %vm746, %v1349
  %1414 = vst.msk [vmem:[%s4 + $0x1e8] sm:$0xff] %vm746, %v1350
  %1415 = vst.msk [vmem:[%s4 + $0x1f0] sm:$0xff] %vm746, %v1351
  %1416 = vst.msk [vmem:[%s4 + $0x1f8] sm:$0xff] %vm746, %v1352
  // Predicated region
  $region18: #{resnet_forward.11} parent=0 // pred_check
    _
  $region19: #{resnet_forward.11} parent=0 // pred_check_branch
    %1418 = sbr.rel (0) target = $region21
  $region20: #{resnet_forward.11} parent=0 // pred_region
    _
  $region21: #{resnet_forward.11} parent=0 // pred_fallthru
    _
  // Predicated region
  $region22: #{resnet_forward.11} parent=0 // pred_check
    _
  $region23: #{resnet_forward.11} parent=0 // pred_check_branch
    %1420 = sbr.rel (0) target = $region25
  $region24: #{resnet_forward.11} parent=0 // pred_region
    _
  $region25: #{resnet_forward.11} parent=0 // pred_fallthru
    _

// kernel: resnet_forward.15
$region0: #{resnet_forward.15}
  #allocation0 [shape = 'u32[]', space=smem, size = 0x4, offset = 0x4, fixed_abs, tag = 'smem constant byte address 0x4 - core index']
  #allocation1 [shape = 'u32[144,128]{1,0:T(1,128)}', space=vmem, size = 0x12000, scoped, tag = 'internal scratch']
  %s0 = inlined_call_operand.vmem [shape: f32[32,72], index: 0, kind: input, shape index: {}]
  %s1 = inlined_call_operand.vmem [shape: f32[72,16], index: 1, kind: input, shape index: {}]
  %s2 = inlined_call_operand.vmem [shape: f32[1,16], index: 2, kind: input, shape index: {}]
  %s3 = inlined_call_operand.vmem [shape: f32[1,16], index: 3, kind: input, shape index: {}]
  %s4 = inlined_call_operand.vmem [shape: f32[32,16], index: 4, kind: output, shape index: {}]
  %s5 = sld [smem:[#allocation0]]
  $region26: #{resnet_forward.15} parent=0
    _
  %s7 = ssub.s32 1, %s5
  %s8 = scalar_select 0, %s7, %s5
  // Predicated region
  $region2: #{resnet_forward.15} parent=0 // pred_check
    _
  $region3: #{resnet_forward.15} parent=0 // pred_check_branch
    %10 = sbr.rel (0) target = $region5
  $region4: #{resnet_forward.15} parent=0 // pred_region
    _
  $region5: #{resnet_forward.15} parent=0 // pred_fallthru
    _
  // Predicated region
  $region6: #{resnet_forward.15} parent=0 // pred_check
    _
  $region7: #{resnet_forward.15} parent=0 // pred_check_branch
    %12 = sbr.rel (0) target = $region9
  $region8: #{resnet_forward.15} parent=0 // pred_region
    _
  $region9: #{resnet_forward.15} parent=0 // pred_fallthru
    _
  // Predicated region
  $region10: #{resnet_forward.15} parent=0 // pred_check
    _
  $region11: #{resnet_forward.15} parent=0 // pred_check_branch
    %14 = sbr.rel (0) target = $region13
  $region12: #{resnet_forward.15} parent=0 // pred_region
    _
  $region13: #{resnet_forward.15} parent=0 // pred_fallthru
    _
  // Predicated region
  $region14: #{resnet_forward.15} parent=0 // pred_check
    _
  $region15: #{resnet_forward.15} parent=0 // pred_check_branch
    %16 = sbr.rel (0) target = $region17
  $region16: #{resnet_forward.15} parent=0 // pred_region
    _
  $region17: #{resnet_forward.15} parent=0 // pred_fallthru
    _
  %v17 = vld [vmem:[%s0] sm:$0xff]
  %v18 = vld [vmem:[%s0 + $0x8] sm:$0xff]
  %v19 = vld [vmem:[%s0 + $0x10] sm:$0xff]
  %v20 = vld [vmem:[%s0 + $0x18] sm:$0xff]
  %v21 = vld [vmem:[%s1] sm:$0xff]
  %v22 = vld [vmem:[%s1 + $0x8] sm:$0xff]
  %v23 = vld [vmem:[%s1 + $0x10] sm:$0xff]
  %v24 = vld [vmem:[%s1 + $0x18] sm:$0xff]
  %v25 = vld [vmem:[%s1 + $0x20] sm:$0xff]
  %v26 = vld [vmem:[%s1 + $0x28] sm:$0xff]
  %v27 = vld [vmem:[%s1 + $0x30] sm:$0xff]
  %v28 = vld [vmem:[%s1 + $0x38] sm:$0xff]
  %v29 = vld [vmem:[%s1 + $0x40] sm:$0xff]
  %vm30 = vcmask 588800
  %v32 = vsel %vm30, %v17, 0
  %v35 = vsel %vm30, %v18, 0
  %v38 = vsel %vm30, %v19, 0
  %v41 = vsel %vm30, %v20, 0
  %43 = vmatprep.subr.mxu0 0.0
  %44 = vmatpush1.msra.mxu0 %v21
  %45 = vmatprep.subr.mxu0 0.0
  %46 = vmatpush1.msra.mxu0 %v22
  %47 = vmatprep.subr.mxu0 0.0
  %48 = vmatpush1.msra.mxu0 %v23
  %49 = vmatprep.subr.mxu0 0.0
  %50 = vmatpush1.msra.mxu0 %v24
  %51 = vmatprep.subr.mxu0 0.0
  %52 = vmatpush1.msra.mxu0 %v25
  %53 = vmatprep.subr.mxu0 0.0
  %54 = vmatpush1.msra.mxu0 %v26
  %55 = vmatprep.subr.mxu0 0.0
  %56 = vmatpush1.msra.mxu0 %v27
  %57 = vmatprep.subr.mxu0 0.0
  %58 = vmatpush1.msra.mxu0 %v28
  %59 = vmatprep.subr.mxu0 0.0
  %60 = vmatpush1.msra.mxu0 %v29
  %61 = vmatprep.subr.mxu0 0.0
  %62 = vmatpush1.msra.mxu0 0.0
  %63 = vmatprep.subr.mxu0 0.0
  %64 = vmatpush1.msra.mxu0 0.0
  %65 = vmatprep.subr.mxu0 0.0
  %66 = vmatpush1.msra.mxu0 0.0
  %67 = vmatprep.subr.mxu0 0.0
  %68 = vmatpush1.msra.mxu0 0.0
  %69 = vmatprep.subr.mxu0 0.0
  %70 = vmatpush1.msra.mxu0 0.0
  %71 = vmatprep.subr.mxu0 0.0
  %72 = vmatpush1.msra.mxu0 0.0
  %73 = vmatprep.subr.mxu0 0.0
  %74 = vmatpush1.msra.mxu0 0.0
  %75 = vmatprep.subr.mxu0 0.0
  %76 = vmatpush1.msra.mxu0 0.0
  %77 = vmatprep.subr.mxu0 0.0
  %78 = vmatpush1.msra.mxu0 0.0
  %79 = vmatprep.subr.mxu0 0.0
  %80 = vmatpush1.msra.mxu0 0.0
  %81 = vmatprep.subr.mxu0 0.0
  %82 = vmatpush1.msra.mxu0 0.0
  %83 = vmatprep.subr.mxu0 0.0
  %84 = vmatpush1.msra.mxu0 0.0
  %85 = vmatprep.subr.mxu0 0.0
  %86 = vmatpush1.msra.mxu0 0.0
  %87 = vmatprep.subr.mxu0 0.0
  %88 = vmatpush1.msra.mxu0 0.0
  %89 = vmatprep.subr.mxu0 0.0
  %90 = vmatpush1.msra.mxu0 0.0
  %91 = vmatprep.subr.mxu0 0.0
  %92 = vmatpush1.msra.mxu0 0.0
  %93 = vmatprep.subr.mxu0 0.0
  %94 = vmatpush1.msra.mxu0 0.0
  %95 = vmatprep.subr.mxu0 0.0
  %96 = vmatpush1.msra.mxu0 0.0
  %97 = vmatprep.subr.mxu0 0.0
  %98 = vmatpush1.msra.mxu0 0.0
  %99 = vmatprep.subr.mxu0 0.0
  %100 = vmatpush1.msra.mxu0 0.0
  %101 = vmatprep.subr.mxu0 0.0
  %102 = vmatpush1.msra.mxu0 0.0
  %103 = vmatprep.subr.mxu0 0.0
  %104 = vmatpush1.msra.mxu0 0.0
  %105 = vmatprep.subr.mxu0 0.0
  %106 = vmatpush1.msra.mxu0 0.0
  %107 = vmatprep.mubr.f32.mxu0 0.0
  %108 = vmatmul.mubr.f32.gmra.mrb[0].mxu0 %v32
  %v109 = vpop.f32.mrb[0].mxu0
  %v110 = vadd.f32 0.0, %v109
  %v111 = vpop.f32.mrb[0].mxu0
  %112 = vmatprep.mubr.f32.mxu0 0.0
  %113 = vmatmul.mubr.f32.gmra.mrb[0].mxu0 %v35
  %v114 = vpop.f32.mrb[0].mxu0
  %v115 = vadd.f32 0.0, %v114
  %v116 = vpop.f32.mrb[0].mxu0
  %117 = vmatprep.mubr.f32.mxu0 0.0
  %118 = vmatmul.mubr.f32.gmra.mrb[0].mxu0 %v38
  %v119 = vpop.f32.mrb[0].mxu0
  %v120 = vadd.f32 0.0, %v119
  %v121 = vpop.f32.mrb[0].mxu0
  %122 = vmatprep.mubr.f32.mxu0 0.0
  %123 = vmatmul.mubr.f32.gmra.mrb[0].mxu0 %v41
  %v124 = vpop.f32.mrb[0].mxu0
  %v125 = vadd.f32 0.0, %v124
  %v126 = vpop.f32.mrb[0].mxu0
  %127 = vdwg.mxu0
  %vm128 = vcmask 130048
  %v129 = vsel %vm128, %v110, 0.0
  %v130 = vsel %vm128, %v115, 0.0
  %v131 = vadd.f32 %v129, %v130
  %v132 = vsel %vm128, %v120, 0.0
  %v133 = vadd.f32 %v131, %v132
  %v134 = vsel %vm128, %v125, 0.0
  %v135 = vadd.f32 %v133, %v134
  %v136 = vrot.slane %v135, 4
  %v137 = vadd.f32 %v135, %v136
  %v138 = vrot.slane %v137, 2
  %v139 = vadd.f32 %v137, %v138
  %v140 = vrot.slane %v139, 1
  %v141 = vadd.f32 %v139, %v140
  %v142 = vrcp.pop 32.0
  %v143 = vmul.f32 %v141, %v142
  %v144 = vsub.f32 %v110, %v143
  %v145 = vsub.f32 %v115, %v143
  %v146 = vsub.f32 %v120, %v143
  %v147 = vsub.f32 %v125, %v143
  %v148 = vmul.f32 %v144, %v144
  %v149 = vmul.f32 %v145, %v145
  %v150 = vmul.f32 %v146, %v146
  %v151 = vmul.f32 %v147, %v147
  %v152 = vsel %vm128, %v148, 0.0
  %v153 = vsel %vm128, %v149, 0.0
  %v154 = vadd.f32 %v152, %v153
  %v155 = vsel %vm128, %v150, 0.0
  %v156 = vadd.f32 %v154, %v155
  %v157 = vsel %vm128, %v151, 0.0
  %v158 = vadd.f32 %v156, %v157
  %v159 = vrot.slane %v158, 4
  %v160 = vadd.f32 %v158, %v159
  %v161 = vrot.slane %v160, 2
  %v162 = vadd.f32 %v160, %v161
  %v163 = vrot.slane %v162, 1
  %v164 = vadd.f32 %v162, %v163
  %v165 = vmul.f32 %v164, %v142
  %v166 = vld [vmem:[%s2] sm:$0x1]
  %v167 = vadd.f32 %v165, 1e-05
  %v168 = vrsqrt.pop %v167
  %v169 = vmul.f32 %v166, %v168
  %v171 = vlaneseq
  %v172 = vshrl.u32 %v171, 7
  %v173 = vsub.s32 0, %v172
  %v174 = vrot.slane %v169, %v173
  %v176 = vmul.f32 %v144, %v174
  %v177 = vmul.f32 %v145, %v174
  %v178 = vmul.f32 %v146, %v174
  %v179 = vmul.f32 %v147, %v174
  %v180 = vld [vmem:[%s3] sm:$0x1]
  %v182 = vlaneseq
  %v183 = vshrl.u32 %v182, 7
  %v184 = vsub.s32 0, %v183
  %v185 = vrot.slane %v180, %v184
  %v187 = vadd.f32 %v176, %v185
  %v188 = vadd.f32 %v177, %v185
  %v189 = vadd.f32 %v178, %v185
  %v190 = vadd.f32 %v179, %v185
  %v191 = vmax.f32 %v187, 0.0
  %v192 = vmax.f32 %v188, 0.0
  %v193 = vmax.f32 %v189, 0.0
  %v194 = vmax.f32 %v190, 0.0
  %195 = vst.msk [vmem:[%s4] sm:$0xff] %vm128, %v191
  %196 = vst.msk [vmem:[%s4 + $0x8] sm:$0xff] %vm128, %v192
  %197 = vst.msk [vmem:[%s4 + $0x10] sm:$0xff] %vm128, %v193
  %198 = vst.msk [vmem:[%s4 + $0x18] sm:$0xff] %vm128, %v194
  // Predicated region
  $region18: #{resnet_forward.15} parent=0 // pred_check
    _
  $region19: #{resnet_forward.15} parent=0 // pred_check_branch
    %200 = sbr.rel (0) target = $region21
  $region20: #{resnet_forward.15} parent=0 // pred_region
    _
  $region21: #{resnet_forward.15} parent=0 // pred_fallthru
    _
  // Predicated region
  $region22: #{resnet_forward.15} parent=0 // pred_check
    _
  $region23: #{resnet_forward.15} parent=0 // pred_check_branch
    %202 = sbr.rel (0) target = $region25
  $region24: #{resnet_forward.15} parent=0 // pred_region
    _
  $region25: #{resnet_forward.15} parent=0 // pred_fallthru
    _

// kernel: resnet_forward.16
$region0: #{resnet_forward.16}
  #allocation0 [shape = 'u32[]', space=smem, size = 0x4, offset = 0x4, fixed_abs, tag = 'smem constant byte address 0x4 - core index']
  #allocation1 [shape = 'u32[144,128]{1,0:T(1,128)}', space=vmem, size = 0x12000, scoped, tag = 'internal scratch']
  %s0 = inlined_call_operand.vmem [shape: f32[32,144], index: 0, kind: input, shape index: {}]
  %s1 = inlined_call_operand.vmem [shape: f32[144,16], index: 1, kind: input, shape index: {}]
  %s2 = inlined_call_operand.vmem [shape: f32[1,16], index: 2, kind: input, shape index: {}, may-alias: {2,6}]
  %s3 = inlined_call_operand.vmem [shape: f32[1,16], index: 3, kind: input, shape index: {}, may-alias: {3,7}]
  %s4 = inlined_call_operand.vmem [shape: f32[32,8], index: 4, kind: input, shape index: {}]
  %s5 = inlined_call_operand.vmem [shape: f32[8,16], index: 5, kind: input, shape index: {}]
  %s6 = inlined_call_operand.vmem [shape: f32[1,16], index: 6, kind: input, shape index: {}, may-alias: {2,6}]
  %s7 = inlined_call_operand.vmem [shape: f32[1,16], index: 7, kind: input, shape index: {}, may-alias: {3,7}]
  %s8 = inlined_call_operand.vmem [shape: f32[32,16], index: 8, kind: output, shape index: {}]
  %s9 = sld [smem:[#allocation0]]
  $region42: #{resnet_forward.16} parent=0
    _
  %s11 = ssub.s32 1, %s9
  %s12 = scalar_select 0, %s11, %s9
  // Predicated region
  $region2: #{resnet_forward.16} parent=0 // pred_check
    _
  $region3: #{resnet_forward.16} parent=0 // pred_check_branch
    %14 = sbr.rel (0) target = $region5
  $region4: #{resnet_forward.16} parent=0 // pred_region
    _
  $region5: #{resnet_forward.16} parent=0 // pred_fallthru
    _
  // Predicated region
  $region6: #{resnet_forward.16} parent=0 // pred_check
    _
  $region7: #{resnet_forward.16} parent=0 // pred_check_branch
    %16 = sbr.rel (0) target = $region9
  $region8: #{resnet_forward.16} parent=0 // pred_region
    _
  $region9: #{resnet_forward.16} parent=0 // pred_fallthru
    _
  // Predicated region
  $region10: #{resnet_forward.16} parent=0 // pred_check
    _
  $region11: #{resnet_forward.16} parent=0 // pred_check_branch
    %18 = sbr.rel (0) target = $region13
  $region12: #{resnet_forward.16} parent=0 // pred_region
    _
  $region13: #{resnet_forward.16} parent=0 // pred_fallthru
    _
  // Predicated region
  $region14: #{resnet_forward.16} parent=0 // pred_check
    _
  $region15: #{resnet_forward.16} parent=0 // pred_check_branch
    %20 = sbr.rel (0) target = $region17
  $region16: #{resnet_forward.16} parent=0 // pred_region
    _
  $region17: #{resnet_forward.16} parent=0 // pred_fallthru
    _
  // Predicated region
  $region18: #{resnet_forward.16} parent=0 // pred_check
    _
  $region19: #{resnet_forward.16} parent=0 // pred_check_branch
    %22 = sbr.rel (0) target = $region21
  $region20: #{resnet_forward.16} parent=0 // pred_region
    _
  $region21: #{resnet_forward.16} parent=0 // pred_fallthru
    _
  // Predicated region
  $region22: #{resnet_forward.16} parent=0 // pred_check
    _
  $region23: #{resnet_forward.16} parent=0 // pred_check_branch
    %24 = sbr.rel (0) target = $region25
  $region24: #{resnet_forward.16} parent=0 // pred_region
    _
  $region25: #{resnet_forward.16} parent=0 // pred_fallthru
    _
  // Predicated region
  $region26: #{resnet_forward.16} parent=0 // pred_check
    _
  $region27: #{resnet_forward.16} parent=0 // pred_check_branch
    %26 = sbr.rel (0) target = $region29
  $region28: #{resnet_forward.16} parent=0 // pred_region
    _
  $region29: #{resnet_forward.16} parent=0 // pred_fallthru
    _
  // Predicated region
  $region30: #{resnet_forward.16} parent=0 // pred_check
    _
  $region31: #{resnet_forward.16} parent=0 // pred_check_branch
    %28 = sbr.rel (0) target = $region33
  $region32: #{resnet_forward.16} parent=0 // pred_region
    _
  $region33: #{resnet_forward.16} parent=0 // pred_fallthru
    _
  %v29 = vld [vmem:[%s0] sm:$0xff]
  %v30 = vld [vmem:[%s0 + $0x8] sm:$0xff]
  %v31 = vld [vmem:[%s0 + $0x10] sm:$0xff]
  %v32 = vld [vmem:[%s0 + $0x18] sm:$0xff]
  %v33 = vld [vmem:[%s0 + $0x20] sm:$0xff]
  %v34 = vld [vmem:[%s0 + $0x28] sm:$0xff]
  %v35 = vld [vmem:[%s0 + $0x30] sm:$0xff]
  %v36 = vld [vmem:[%s0 + $0x38] sm:$0xff]
  %v37 = vld [vmem:[%s1] sm:$0xff]
  %v38 = vld [vmem:[%s1 + $0x8] sm:$0xff]
  %v39 = vld [vmem:[%s1 + $0x10] sm:$0xff]
  %v40 = vld [vmem:[%s1 + $0x18] sm:$0xff]
  %v41 = vld [vmem:[%s1 + $0x20] sm:$0xff]
  %v42 = vld [vmem:[%s1 + $0x28] sm:$0xff]
  %v43 = vld [vmem:[%s1 + $0x30] sm:$0xff]
  %v44 = vld [vmem:[%s1 + $0x38] sm:$0xff]
  %v45 = vld [vmem:[%s1 + $0x40] sm:$0xff]
  %v46 = vld [vmem:[%s1 + $0x48] sm:$0xff]
  %v47 = vld [vmem:[%s1 + $0x50] sm:$0xff]
  %v48 = vld [vmem:[%s1 + $0x58] sm:$0xff]
  %v49 = vld [vmem:[%s1 + $0x60] sm:$0xff]
  %v50 = vld [vmem:[%s1 + $0x68] sm:$0xff]
  %v51 = vld [vmem:[%s1 + $0x70] sm:$0xff]
  %v52 = vld [vmem:[%s1 + $0x78] sm:$0xff]
  %v53 = vld [vmem:[%s1 + $0x80] sm:$0xff]
  %v54 = vld [vmem:[%s1 + $0x88] sm:$0xff]
  %vm55 = vcmask 130048
  %v57 = vsel %vm55, %v30, 0
  %v60 = vsel %vm55, %v32, 0
  %v63 = vsel %vm55, %v34, 0
  %v66 = vsel %vm55, %v36, 0
  %68 = vmatprep.subr.mxu0 0.0
  %69 = vmatpush1.msra.mxu0 %v37
  %70 = vmatprep.subr.mxu0 0.0
  %71 = vmatpush1.msra.mxu0 %v38
  %72 = vmatprep.subr.mxu0 0.0
  %73 = vmatpush1.msra.mxu0 %v39
  %74 = vmatprep.subr.mxu0 0.0
  %75 = vmatpush1.msra.mxu0 %v40
  %76 = vmatprep.subr.mxu0 0.0
  %77 = vmatpush1.msra.mxu0 %v41
  %78 = vmatprep.subr.mxu0 0.0
  %79 = vmatpush1.msra.mxu0 %v42
  %80 = vmatprep.subr.mxu0 0.0
  %81 = vmatpush1.msra.mxu0 %v43
  %82 = vmatprep.subr.mxu0 0.0
  %83 = vmatpush1.msra.mxu0 %v44
  %84 = vmatprep.subr.mxu0 0.0
  %85 = vmatpush1.msra.mxu0 %v45
  %86 = vmatprep.subr.mxu0 0.0
  %87 = vmatpush1.msra.mxu0 %v46
  %88 = vmatprep.subr.mxu0 0.0
  %89 = vmatpush1.msra.mxu0 %v47
  %90 = vmatprep.subr.mxu0 0.0
  %91 = vmatpush1.msra.mxu0 %v48
  %92 = vmatprep.subr.mxu0 0.0
  %93 = vmatpush1.msra.mxu0 %v49
  %94 = vmatprep.subr.mxu0 0.0
  %95 = vmatpush1.msra.mxu0 %v50
  %96 = vmatprep.subr.mxu0 0.0
  %97 = vmatpush1.msra.mxu0 %v51
  %98 = vmatprep.subr.mxu0 0.0
  %99 = vmatpush1.msra.mxu0 %v52
  %100 = vmatprep.subr.mxu0 0.0
  %101 = vmatpush1.msra.mxu0 %v53
  %102 = vmatprep.subr.mxu0 0.0
  %103 = vmatpush1.msra.mxu0 %v54
  %104 = vmatprep.subr.mxu0 0.0
  %105 = vmatpush1.msra.mxu0 0.0
  %106 = vmatprep.subr.mxu0 0.0
  %107 = vmatpush1.msra.mxu0 0.0
  %108 = vmatprep.subr.mxu0 0.0
  %109 = vmatpush1.msra.mxu0 0.0
  %110 = vmatprep.subr.mxu0 0.0
  %111 = vmatpush1.msra.mxu0 0.0
  %112 = vmatprep.subr.mxu0 0.0
  %113 = vmatpush1.msra.mxu0 0.0
  %114 = vmatprep.subr.mxu0 0.0
  %115 = vmatpush1.msra.mxu0 0.0
  %116 = vmatprep.subr.mxu0 0.0
  %117 = vmatpush1.msra.mxu0 0.0
  %118 = vmatprep.subr.mxu0 0.0
  %119 = vmatpush1.msra.mxu0 0.0
  %120 = vmatprep.subr.mxu0 0.0
  %121 = vmatpush1.msra.mxu0 0.0
  %122 = vmatprep.subr.mxu0 0.0
  %123 = vmatpush1.msra.mxu0 0.0
  %124 = vmatprep.subr.mxu0 0.0
  %125 = vmatpush1.msra.mxu0 0.0
  %126 = vmatprep.subr.mxu0 0.0
  %127 = vmatpush1.msra.mxu0 0.0
  %128 = vmatprep.subr.mxu0 0.0
  %129 = vmatpush1.msra.mxu0 0.0
  %130 = vmatprep.subr.mxu0 0.0
  %131 = vmatpush1.msra.mxu0 0.0
  %132 = vmatprep.mubr.f32.mxu0 %v57
  %133 = vmatmul.mubr.f32.gmra.mrb[0].mxu0 %v29
  %v134 = vpop.f32.mrb[0].mxu0
  %v135 = vadd.f32 0.0, %v134
  %v136 = vpop.f32.mrb[0].mxu0
  %137 = vmatprep.mubr.f32.mxu0 %v60
  %138 = vmatmul.mubr.f32.gmra.mrb[0].mxu0 %v31
  %v139 = vpop.f32.mrb[0].mxu0
  %v140 = vadd.f32 0.0, %v139
  %v141 = vpop.f32.mrb[0].mxu0
  %142 = vmatprep.mubr.f32.mxu0 %v63
  %143 = vmatmul.mubr.f32.gmra.mrb[0].mxu0 %v33
  %v144 = vpop.f32.mrb[0].mxu0
  %v145 = vadd.f32 0.0, %v144
  %v146 = vpop.f32.mrb[0].mxu0
  %147 = vmatprep.mubr.f32.mxu0 %v66
  %148 = vmatmul.mubr.f32.gmra.mrb[0].mxu0 %v35
  %v149 = vpop.f32.mrb[0].mxu0
  %v150 = vadd.f32 0.0, %v149
  %v151 = vpop.f32.mrb[0].mxu0
  %152 = vdwg.mxu0
  %v153 = vsel %vm55, %v135, 0.0
  %v154 = vsel %vm55, %v140, 0.0
  %v155 = vadd.f32 %v153, %v154
  %v156 = vsel %vm55, %v145, 0.0
  %v157 = vadd.f32 %v155, %v156
  %v158 = vsel %vm55, %v150, 0.0
  %v159 = vadd.f32 %v157, %v158
  %v160 = vrot.slane %v159, 4
  %v161 = vadd.f32 %v159, %v160
  %v162 = vrot.slane %v161, 2
  %v163 = vadd.f32 %v161, %v162
  %v164 = vrot.slane %v163, 1
  %v165 = vadd.f32 %v163, %v164
  %v166 = vrcp.pop 32.0
  %v167 = vmul.f32 %v165, %v166
  %v168 = vsub.f32 %v135, %v167
  %v169 = vsub.f32 %v140, %v167
  %v170 = vsub.f32 %v145, %v167
  %v171 = vsub.f32 %v150, %v167
  %v172 = vmul.f32 %v168, %v168
  %v173 = vmul.f32 %v169, %v169
  %v174 = vmul.f32 %v170, %v170
  %v175 = vmul.f32 %v171, %v171
  %v176 = vsel %vm55, %v172, 0.0
  %v177 = vsel %vm55, %v173, 0.0
  %v178 = vadd.f32 %v176, %v177
  %v179 = vsel %vm55, %v174, 0.0
  %v180 = vadd.f32 %v178, %v179
  %v181 = vsel %vm55, %v175, 0.0
  %v182 = vadd.f32 %v180, %v181
  %v183 = vrot.slane %v182, 4
  %v184 = vadd.f32 %v182, %v183
  %v185 = vrot.slane %v184, 2
  %v186 = vadd.f32 %v184, %v185
  %v187 = vrot.slane %v186, 1
  %v188 = vadd.f32 %v186, %v187
  %v189 = vmul.f32 %v188, %v166
  %v190 = vld [vmem:[%s2] sm:$0x1]
  %v191 = vadd.f32 %v189, 1e-05
  %v192 = vrsqrt.pop %v191
  %v193 = vmul.f32 %v190, %v192
  %v195 = vlaneseq
  %v196 = vshrl.u32 %v195, 7
  %v197 = vsub.s32 0, %v196
  %v198 = vrot.slane %v193, %v197
  %v200 = vmul.f32 %v168, %v198
  %v201 = vmul.f32 %v169, %v198
  %v202 = vmul.f32 %v170, %v198
  %v203 = vmul.f32 %v171, %v198
  %v204 = vld [vmem:[%s3] sm:$0x1]
  %v206 = vlaneseq
  %v207 = vshrl.u32 %v206, 7
  %v208 = vsub.s32 0, %v207
  %v209 = vrot.slane %v204, %v208
  %v211 = vadd.f32 %v200, %v209
  %v212 = vadd.f32 %v201, %v209
  %v213 = vadd.f32 %v202, %v209
  %v214 = vadd.f32 %v203, %v209
  %v215 = vld [vmem:[%s4] sm:$0xff]
  %v216 = vld [vmem:[%s4 + $0x8] sm:$0xff]
  %v217 = vld [vmem:[%s4 + $0x10] sm:$0xff]
  %v218 = vld [vmem:[%s4 + $0x18] sm:$0xff]
  %v219 = vld [vmem:[%s5] sm:$0xff]
  %vm220 = vcmask 64512
  %v222 = vsel %vm220, %v215, 0
  %v225 = vsel %vm220, %v216, 0
  %v228 = vsel %vm220, %v217, 0
  %v231 = vsel %vm220, %v218, 0
  %233 = vmatprep.subr.mxu0 0.0
  %234 = vmatpush1.msra.mxu0 %v219
  %235 = vmatprep.subr.mxu0 0.0
  %236 = vmatpush1.msra.mxu0 0.0
  %237 = vmatprep.subr.mxu0 0.0
  %238 = vmatpush1.msra.mxu0 0.0
  %239 = vmatprep.subr.mxu0 0.0
  %240 = vmatpush1.msra.mxu0 0.0
  %241 = vmatprep.subr.mxu0 0.0
  %242 = vmatpush1.msra.mxu0 0.0
  %243 = vmatprep.subr.mxu0 0.0
  %244 = vmatpush1.msra.mxu0 0.0
  %245 = vmatprep.subr.mxu0 0.0
  %246 = vmatpush1.msra.mxu0 0.0
  %247 = vmatprep.subr.mxu0 0.0
  %248 = vmatpush1.msra.mxu0 0.0
  %249 = vmatprep.subr.mxu0 0.0
  %250 = vmatpush1.msra.mxu0 0.0
  %251 = vmatprep.subr.mxu0 0.0
  %252 = vmatpush1.msra.mxu0 0.0
  %253 = vmatprep.subr.mxu0 0.0
  %254 = vmatpush1.msra.mxu0 0.0
  %255 = vmatprep.subr.mxu0 0.0
  %256 = vmatpush1.msra.mxu0 0.0
  %257 = vmatprep.subr.mxu0 0.0
  %258 = vmatpush1.msra.mxu0 0.0
  %259 = vmatprep.subr.mxu0 0.0
  %260 = vmatpush1.msra.mxu0 0.0
  %261 = vmatprep.subr.mxu0 0.0
  %262 = vmatpush1.msra.mxu0 0.0
  %263 = vmatprep.subr.mxu0 0.0
  %264 = vmatpush1.msra.mxu0 0.0
  %265 = vmatprep.subr.mxu0 0.0
  %266 = vmatpush1.msra.mxu0 0.0
  %267 = vmatprep.subr.mxu0 0.0
  %268 = vmatpush1.msra.mxu0 0.0
  %269 = vmatprep.subr.mxu0 0.0
  %270 = vmatpush1.msra.mxu0 0.0
  %271 = vmatprep.subr.mxu0 0.0
  %272 = vmatpush1.msra.mxu0 0.0
  %273 = vmatprep.subr.mxu0 0.0
  %274 = vmatpush1.msra.mxu0 0.0
  %275 = vmatprep.subr.mxu0 0.0
  %276 = vmatpush1.msra.mxu0 0.0
  %277 = vmatprep.subr.mxu0 0.0
  %278 = vmatpush1.msra.mxu0 0.0
  %279 = vmatprep.subr.mxu0 0.0
  %280 = vmatpush1.msra.mxu0 0.0
  %281 = vmatprep.subr.mxu0 0.0
  %282 = vmatpush1.msra.mxu0 0.0
  %283 = vmatprep.subr.mxu0 0.0
  %284 = vmatpush1.msra.mxu0 0.0
  %285 = vmatprep.subr.mxu0 0.0
  %286 = vmatpush1.msra.mxu0 0.0
  %287 = vmatprep.subr.mxu0 0.0
  %288 = vmatpush1.msra.mxu0 0.0
  %289 = vmatprep.subr.mxu0 0.0
  %290 = vmatpush1.msra.mxu0 0.0
  %291 = vmatprep.subr.mxu0 0.0
  %292 = vmatpush1.msra.mxu0 0.0
  %293 = vmatprep.subr.mxu0 0.0
  %294 = vmatpush1.msra.mxu0 0.0
  %295 = vmatprep.subr.mxu0 0.0
  %296 = vmatpush1.msra.mxu0 0.0
  %297 = vmatprep.mubr.f32.mxu0 0.0
  %298 = vmatmul.mubr.f32.gmra.mrb[0].mxu0 %v222
  %v299 = vpop.f32.mrb[0].mxu0
  %v300 = vadd.f32 0.0, %v299
  %v301 = vpop.f32.mrb[0].mxu0
  %302 = vmatprep.mubr.f32.mxu0 0.0
  %303 = vmatmul.mubr.f32.gmra.mrb[0].mxu0 %v225
  %v304 = vpop.f32.mrb[0].mxu0
  %v305 = vadd.f32 0.0, %v304
  %v306 = vpop.f32.mrb[0].mxu0
  %307 = vmatprep.mubr.f32.mxu0 0.0
  %308 = vmatmul.mubr.f32.gmra.mrb[0].mxu0 %v228
  %v309 = vpop.f32.mrb[0].mxu0
  %v310 = vadd.f32 0.0, %v309
  %v311 = vpop.f32.mrb[0].mxu0
  %312 = vmatprep.mubr.f32.mxu0 0.0
  %313 = vmatmul.mubr.f32.gmra.mrb[0].mxu0 %v231
  %v314 = vpop.f32.mrb[0].mxu0
  %v315 = vadd.f32 0.0, %v314
  %v316 = vpop.f32.mrb[0].mxu0
  %317 = vdwg.mxu0
  %v318 = vsel %vm55, %v300, 0.0
  %v319 = vsel %vm55, %v305, 0.0
  %v320 = vadd.f32 %v318, %v319
  %v321 = vsel %vm55, %v310, 0.0
  %v322 = vadd.f32 %v320, %v321
  %v323 = vsel %vm55, %v315, 0.0
  %v324 = vadd.f32 %v322, %v323
  %v325 = vrot.slane %v324, 4
  %v326 = vadd.f32 %v324, %v325
  %v327 = vrot.slane %v326, 2
  %v328 = vadd.f32 %v326, %v327
  %v329 = vrot.slane %v328, 1
  %v330 = vadd.f32 %v328, %v329
  %v331 = vmul.f32 %v330, %v166
  %v332 = vsub.f32 %v300, %v331
  %v333 = vsub.f32 %v305, %v331
  %v334 = vsub.f32 %v310, %v331
  %v335 = vsub.f32 %v315, %v331
  %v336 = vmul.f32 %v332, %v332
  %v337 = vmul.f32 %v333, %v333
  %v338 = vmul.f32 %v334, %v334
  %v339 = vmul.f32 %v335, %v335
  %v340 = vsel %vm55, %v336, 0.0
  %v341 = vsel %vm55, %v337, 0.0
  %v342 = vadd.f32 %v340, %v341
  %v343 = vsel %vm55, %v338, 0.0
  %v344 = vadd.f32 %v342, %v343
  %v345 = vsel %vm55, %v339, 0.0
  %v346 = vadd.f32 %v344, %v345
  %v347 = vrot.slane %v346, 4
  %v348 = vadd.f32 %v346, %v347
  %v349 = vrot.slane %v348, 2
  %v350 = vadd.f32 %v348, %v349
  %v351 = vrot.slane %v350, 1
  %v352 = vadd.f32 %v350, %v351
  %v353 = vmul.f32 %v352, %v166
  %v354 = vld [vmem:[%s6] sm:$0x1]
  %v355 = vadd.f32 %v353, 1e-05
  %v356 = vrsqrt.pop %v355
  %v357 = vmul.f32 %v354, %v356
  %v359 = vlaneseq
  %v360 = vshrl.u32 %v359, 7
  %v361 = vsub.s32 0, %v360
  %v362 = vrot.slane %v357, %v361
  %v364 = vmul.f32 %v332, %v362
  %v365 = vmul.f32 %v333, %v362
  %v366 = vmul.f32 %v334, %v362
  %v367 = vmul.f32 %v335, %v362
  %v368 = vld [vmem:[%s7] sm:$0x1]
  %v370 = vlaneseq
  %v371 = vshrl.u32 %v370, 7
  %v372 = vsub.s32 0, %v371
  %v373 = vrot.slane %v368, %v372
  %v375 = vadd.f32 %v364, %v373
  %v376 = vadd.f32 %v365, %v373
  %v377 = vadd.f32 %v366, %v373
  %v378 = vadd.f32 %v367, %v373
  %v379 = vadd.f32 %v211, %v375
  %v380 = vadd.f32 %v212, %v376
  %v381 = vadd.f32 %v213, %v377
  %v382 = vadd.f32 %v214, %v378
  %383 = vst.msk [vmem:[%s8] sm:$0xff] %vm55, %v379
  %384 = vst.msk [vmem:[%s8 + $0x8] sm:$0xff] %vm55, %v380
  %385 = vst.msk [vmem:[%s8 + $0x10] sm:$0xff] %vm55, %v381
  %386 = vst.msk [vmem:[%s8 + $0x18] sm:$0xff] %vm55, %v382
  // Predicated region
  $region34: #{resnet_forward.16} parent=0 // pred_check
    _
  $region35: #{resnet_forward.16} parent=0 // pred_check_branch
    %388 = sbr.rel (0) target = $region37
  $region36: #{resnet_forward.16} parent=0 // pred_region
    _
  $region37: #{resnet_forward.16} parent=0 // pred_fallthru
    _
  // Predicated region
  $region38: #{resnet_forward.16} parent=0 // pred_check
    _
  $region39: #{resnet_forward.16} parent=0 // pred_check_branch
    %390 = sbr.rel (0) target = $region41
  $region40: #{resnet_forward.16} parent=0 // pred_region
    _
  $region41: #{resnet_forward.16} parent=0 // pred_fallthru
    _

// kernel: resnet_forward.17
$region0: #{resnet_forward.17}
  #allocation0 [shape = 'u32[]', space=smem, size = 0x4, offset = 0x4, fixed_abs, tag = 'smem constant byte address 0x4 - core index']
  #allocation1 [shape = 'u32[144,128]{1,0:T(1,128)}', space=vmem, size = 0x12000, scoped, tag = 'internal scratch']
  %s0 = inlined_call_operand.vmem [shape: f32[8,144], index: 0, kind: input, shape index: {}]
  %s1 = inlined_call_operand.vmem [shape: f32[144,32], index: 1, kind: input, shape index: {}]
  %s2 = inlined_call_operand.vmem [shape: f32[1,32], index: 2, kind: input, shape index: {}]
  %s3 = inlined_call_operand.vmem [shape: f32[1,32], index: 3, kind: input, shape index: {}]
  %s4 = inlined_call_operand.vmem [shape: f32[8,32], index: 4, kind: output, shape index: {}]
  %s5 = sld [smem:[#allocation0]]
  $region26: #{resnet_forward.17} parent=0
    _
  %s7 = ssub.s32 1, %s5
  %s8 = scalar_select 0, %s7, %s5
  // Predicated region
  $region2: #{resnet_forward.17} parent=0 // pred_check
    _
  $region3: #{resnet_forward.17} parent=0 // pred_check_branch
    %10 = sbr.rel (0) target = $region5
  $region4: #{resnet_forward.17} parent=0 // pred_region
    _
  $region5: #{resnet_forward.17} parent=0 // pred_fallthru
    _
  // Predicated region
  $region6: #{resnet_forward.17} parent=0 // pred_check
    _
  $region7: #{resnet_forward.17} parent=0 // pred_check_branch
    %12 = sbr.rel (0) target = $region9
  $region8: #{resnet_forward.17} parent=0 // pred_region
    _
  $region9: #{resnet_forward.17} parent=0 // pred_fallthru
    _
  // Predicated region
  $region10: #{resnet_forward.17} parent=0 // pred_check
    _
  $region11: #{resnet_forward.17} parent=0 // pred_check_branch
    %14 = sbr.rel (0) target = $region13
  $region12: #{resnet_forward.17} parent=0 // pred_region
    _
  $region13: #{resnet_forward.17} parent=0 // pred_fallthru
    _
  // Predicated region
  $region14: #{resnet_forward.17} parent=0 // pred_check
    _
  $region15: #{resnet_forward.17} parent=0 // pred_check_branch
    %16 = sbr.rel (0) target = $region17
  $region16: #{resnet_forward.17} parent=0 // pred_region
    _
  $region17: #{resnet_forward.17} parent=0 // pred_fallthru
    _
  %v17 = vld [vmem:[%s0] sm:$0xff]
  %v18 = vld [vmem:[%s0 + $0x8] sm:$0xff]
  %v19 = vld [vmem:[%s1] sm:$0xff]
  %v20 = vld [vmem:[%s1 + $0x8] sm:$0xff]
  %v21 = vld [vmem:[%s1 + $0x10] sm:$0xff]
  %v22 = vld [vmem:[%s1 + $0x18] sm:$0xff]
  %v23 = vld [vmem:[%s1 + $0x20] sm:$0xff]
  %v24 = vld [vmem:[%s1 + $0x28] sm:$0xff]
  %v25 = vld [vmem:[%s1 + $0x30] sm:$0xff]
  %v26 = vld [vmem:[%s1 + $0x38] sm:$0xff]
  %v27 = vld [vmem:[%s1 + $0x40] sm:$0xff]
  %v28 = vld [vmem:[%s1 + $0x48] sm:$0xff]
  %v29 = vld [vmem:[%s1 + $0x50] sm:$0xff]
  %v30 = vld [vmem:[%s1 + $0x58] sm:$0xff]
  %v31 = vld [vmem:[%s1 + $0x60] sm:$0xff]
  %v32 = vld [vmem:[%s1 + $0x68] sm:$0xff]
  %v33 = vld [vmem:[%s1 + $0x70] sm:$0xff]
  %v34 = vld [vmem:[%s1 + $0x78] sm:$0xff]
  %v35 = vld [vmem:[%s1 + $0x80] sm:$0xff]
  %v36 = vld [vmem:[%s1 + $0x88] sm:$0xff]
  %vm37 = vcmask 130048
  %v39 = vsel %vm37, %v18, 0
  %41 = vmatprep.subr.mxu0 0.0
  %42 = vmatpush1.msra.mxu0 %v19
  %43 = vmatprep.subr.mxu0 0.0
  %44 = vmatpush1.msra.mxu0 %v20
  %45 = vmatprep.subr.mxu0 0.0
  %46 = vmatpush1.msra.mxu0 %v21
  %47 = vmatprep.subr.mxu0 0.0
  %48 = vmatpush1.msra.mxu0 %v22
  %49 = vmatprep.subr.mxu0 0.0
  %50 = vmatpush1.msra.mxu0 %v23
  %51 = vmatprep.subr.mxu0 0.0
  %52 = vmatpush1.msra.mxu0 %v24
  %53 = vmatprep.subr.mxu0 0.0
  %54 = vmatpush1.msra.mxu0 %v25
  %55 = vmatprep.subr.mxu0 0.0
  %56 = vmatpush1.msra.mxu0 %v26
  %57 = vmatprep.subr.mxu0 0.0
  %58 = vmatpush1.msra.mxu0 %v27
  %59 = vmatprep.subr.mxu0 0.0
  %60 = vmatpush1.msra.mxu0 %v28
  %61 = vmatprep.subr.mxu0 0.0
  %62 = vmatpush1.msra.mxu0 %v29
  %63 = vmatprep.subr.mxu0 0.0
  %64 = vmatpush1.msra.mxu0 %v30
  %65 = vmatprep.subr.mxu0 0.0
  %66 = vmatpush1.msra.mxu0 %v31
  %67 = vmatprep.subr.mxu0 0.0
  %68 = vmatpush1.msra.mxu0 %v32
  %69 = vmatprep.subr.mxu0 0.0
  %70 = vmatpush1.msra.mxu0 %v33
  %71 = vmatprep.subr.mxu0 0.0
  %72 = vmatpush1.msra.mxu0 %v34
  %73 = vmatprep.subr.mxu0 0.0
  %74 = vmatpush1.msra.mxu0 %v35
  %75 = vmatprep.subr.mxu0 0.0
  %76 = vmatpush1.msra.mxu0 %v36
  %77 = vmatprep.subr.mxu0 0.0
  %78 = vmatpush1.msra.mxu0 0.0
  %79 = vmatprep.subr.mxu0 0.0
  %80 = vmatpush1.msra.mxu0 0.0
  %81 = vmatprep.subr.mxu0 0.0
  %82 = vmatpush1.msra.mxu0 0.0
  %83 = vmatprep.subr.mxu0 0.0
  %84 = vmatpush1.msra.mxu0 0.0
  %85 = vmatprep.subr.mxu0 0.0
  %86 = vmatpush1.msra.mxu0 0.0
  %87 = vmatprep.subr.mxu0 0.0
  %88 = vmatpush1.msra.mxu0 0.0
  %89 = vmatprep.subr.mxu0 0.0
  %90 = vmatpush1.msra.mxu0 0.0
  %91 = vmatprep.subr.mxu0 0.0
  %92 = vmatpush1.msra.mxu0 0.0
  %93 = vmatprep.subr.mxu0 0.0
  %94 = vmatpush1.msra.mxu0 0.0
  %95 = vmatprep.subr.mxu0 0.0
  %96 = vmatpush1.msra.mxu0 0.0
  %97 = vmatprep.subr.mxu0 0.0
  %98 = vmatpush1.msra.mxu0 0.0
  %99 = vmatprep.subr.mxu0 0.0
  %100 = vmatpush1.msra.mxu0 0.0
  %101 = vmatprep.subr.mxu0 0.0
  %102 = vmatpush1.msra.mxu0 0.0
  %103 = vmatprep.subr.mxu0 0.0
  %104 = vmatpush1.msra.mxu0 0.0
  %105 = vmatprep.mubr.f32.mxu0 %v39
  %106 = vmatmul.mubr.f32.gmra.mrb[0].mxu0 %v17
  %v107 = vpop.f32.mrb[0].mxu0
  %v108 = vadd.f32 0.0, %v107
  %v109 = vpop.f32.mrb[0].mxu0
  %110 = vdwg.mxu0
  %vm111 = vcmask 261120
  %v112 = vsel %vm111, %v108, 0.0
  %v113 = vrot.slane %v112, 4
  %v114 = vadd.f32 %v112, %v113
  %v115 = vrot.slane %v114, 2
  %v116 = vadd.f32 %v114, %v115
  %v117 = vrot.slane %v116, 1
  %v118 = vadd.f32 %v116, %v117
  %v119 = vrcp.pop 8.0
  %v120 = vmul.f32 %v118, %v119
  %v121 = vsub.f32 %v108, %v120
  %v122 = vmul.f32 %v121, %v121
  %v123 = vsel %vm111, %v122, 0.0
  %v124 = vrot.slane %v123, 4
  %v125 = vadd.f32 %v123, %v124
  %v126 = vrot.slane %v125, 2
  %v127 = vadd.f32 %v125, %v126
  %v128 = vrot.slane %v127, 1
  %v129 = vadd.f32 %v127, %v128
  %v130 = vmul.f32 %v129, %v119
  %v131 = vld [vmem:[%s2] sm:$0x1]
  %v132 = vadd.f32 %v130, 1e-05
  %v133 = vrsqrt.pop %v132
  %v134 = vmul.f32 %v131, %v133
  %v136 = vlaneseq
  %v137 = vshrl.u32 %v136, 7
  %v138 = vsub.s32 0, %v137
  %v139 = vrot.slane %v134, %v138
  %v141 = vmul.f32 %v121, %v139
  %v142 = vld [vmem:[%s3] sm:$0x1]
  %v144 = vlaneseq
  %v145 = vshrl.u32 %v144, 7
  %v146 = vsub.s32 0, %v145
  %v147 = vrot.slane %v142, %v146
  %v149 = vadd.f32 %v141, %v147
  %v150 = vmax.f32 %v149, 0.0
  %151 = vst.msk [vmem:[%s4] sm:$0xff] %vm111, %v150
  // Predicated region
  $region18: #{resnet_forward.17} parent=0 // pred_check
    _
  $region19: #{resnet_forward.17} parent=0 // pred_check_branch
    %153 = sbr.rel (0) target = $region21
  $region20: #{resnet_forward.17} parent=0 // pred_region
    _
  $region21: #{resnet_forward.17} parent=0 // pred_fallthru
    _
  // Predicated region
  $region22: #{resnet_forward.17} parent=0 // pred_check
    _
  $region23: #{resnet_forward.17} parent=0 // pred_check_branch
    %155 = sbr.rel (0) target = $region25
  $region24: #{resnet_forward.17} parent=0 // pred_region
    _
  $region25: #{resnet_forward.17} parent=0 // pred_fallthru
    _

// kernel: resnet_forward.18
$region0: #{resnet_forward.18}
  #allocation0 [shape = 'u32[]', space=smem, size = 0x4, offset = 0x4, fixed_abs, tag = 'smem constant byte address 0x4 - core index']
  #allocation1 [shape = 'u32[144,128]{1,0:T(1,128)}', space=vmem, size = 0x12000, scoped, tag = 'internal scratch']
  %s0 = inlined_call_operand.vmem [shape: f32[8,288], index: 0, kind: input, shape index: {}]
  %s1 = inlined_call_operand.vmem [shape: f32[288,32], index: 1, kind: input, shape index: {}]
  %s2 = inlined_call_operand.vmem [shape: f32[1,32], index: 2, kind: input, shape index: {}, may-alias: {2,6}]
  %s3 = inlined_call_operand.vmem [shape: f32[1,32], index: 3, kind: input, shape index: {}, may-alias: {3,7}]
  %s4 = inlined_call_operand.vmem [shape: f32[8,16], index: 4, kind: input, shape index: {}]
  %s5 = inlined_call_operand.vmem [shape: f32[16,32], index: 5, kind: input, shape index: {}]
  %s6 = inlined_call_operand.vmem [shape: f32[1,32], index: 6, kind: input, shape index: {}, may-alias: {2,6}]
  %s7 = inlined_call_operand.vmem [shape: f32[1,32], index: 7, kind: input, shape index: {}, may-alias: {3,7}]
  %s8 = inlined_call_operand.vmem [shape: f32[8,32], index: 8, kind: output, shape index: {}]
  %s9 = sld [smem:[#allocation0]]
  $region42: #{resnet_forward.18} parent=0
    _
  %s11 = ssub.s32 1, %s9
  %s12 = scalar_select 0, %s11, %s9
  // Predicated region
  $region2: #{resnet_forward.18} parent=0 // pred_check
    _
  $region3: #{resnet_forward.18} parent=0 // pred_check_branch
    %14 = sbr.rel (0) target = $region5
  $region4: #{resnet_forward.18} parent=0 // pred_region
    _
  $region5: #{resnet_forward.18} parent=0 // pred_fallthru
    _
  // Predicated region
  $region6: #{resnet_forward.18} parent=0 // pred_check
    _
  $region7: #{resnet_forward.18} parent=0 // pred_check_branch
    %16 = sbr.rel (0) target = $region9
  $region8: #{resnet_forward.18} parent=0 // pred_region
    _
  $region9: #{resnet_forward.18} parent=0 // pred_fallthru
    _
  // Predicated region
  $region10: #{resnet_forward.18} parent=0 // pred_check
    _
  $region11: #{resnet_forward.18} parent=0 // pred_check_branch
    %18 = sbr.rel (0) target = $region13
  $region12: #{resnet_forward.18} parent=0 // pred_region
    _
  $region13: #{resnet_forward.18} parent=0 // pred_fallthru
    _
  // Predicated region
  $region14: #{resnet_forward.18} parent=0 // pred_check
    _
  $region15: #{resnet_forward.18} parent=0 // pred_check_branch
    %20 = sbr.rel (0) target = $region17
  $region16: #{resnet_forward.18} parent=0 // pred_region
    _
  $region17: #{resnet_forward.18} parent=0 // pred_fallthru
    _
  // Predicated region
  $region18: #{resnet_forward.18} parent=0 // pred_check
    _
  $region19: #{resnet_forward.18} parent=0 // pred_check_branch
    %22 = sbr.rel (0) target = $region21
  $region20: #{resnet_forward.18} parent=0 // pred_region
    _
  $region21: #{resnet_forward.18} parent=0 // pred_fallthru
    _
  // Predicated region
  $region22: #{resnet_forward.18} parent=0 // pred_check
    _
  $region23: #{resnet_forward.18} parent=0 // pred_check_branch
    %24 = sbr.rel (0) target = $region25
  $region24: #{resnet_forward.18} parent=0 // pred_region
    _
  $region25: #{resnet_forward.18} parent=0 // pred_fallthru
    _
  // Predicated region
  $region26: #{resnet_forward.18} parent=0 // pred_check
    _
  $region27: #{resnet_forward.18} parent=0 // pred_check_branch
    %26 = sbr.rel (0) target = $region29
  $region28: #{resnet_forward.18} parent=0 // pred_region
    _
  $region29: #{resnet_forward.18} parent=0 // pred_fallthru
    _
  // Predicated region
  $region30: #{resnet_forward.18} parent=0 // pred_check
    _
  $region31: #{resnet_forward.18} parent=0 // pred_check_branch
    %28 = sbr.rel (0) target = $region33
  $region32: #{resnet_forward.18} parent=0 // pred_region
    _
  $region33: #{resnet_forward.18} parent=0 // pred_fallthru
    _
  %v29 = vld [vmem:[%s0] sm:$0xff]
  %v30 = vld [vmem:[%s0 + $0x8] sm:$0xff]
  %v31 = vld [vmem:[%s0 + $0x10] sm:$0xff]
  %v32 = vld [vmem:[%s1] sm:$0xff]
  %v33 = vld [vmem:[%s1 + $0x8] sm:$0xff]
  %v34 = vld [vmem:[%s1 + $0x10] sm:$0xff]
  %v35 = vld [vmem:[%s1 + $0x18] sm:$0xff]
  %v36 = vld [vmem:[%s1 + $0x20] sm:$0xff]
  %v37 = vld [vmem:[%s1 + $0x28] sm:$0xff]
  %v38 = vld [vmem:[%s1 + $0x30] sm:$0xff]
  %v39 = vld [vmem:[%s1 + $0x38] sm:$0xff]
  %v40 = vld [vmem:[%s1 + $0x40] sm:$0xff]
  %v41 = vld [vmem:[%s1 + $0x48] sm:$0xff]
  %v42 = vld [vmem:[%s1 + $0x50] sm:$0xff]
  %v43 = vld [vmem:[%s1 + $0x58] sm:$0xff]
  %v44 = vld [vmem:[%s1 + $0x60] sm:$0xff]
  %v45 = vld [vmem:[%s1 + $0x68] sm:$0xff]
  %v46 = vld [vmem:[%s1 + $0x70] sm:$0xff]
  %v47 = vld [vmem:[%s1 + $0x78] sm:$0xff]
  %v48 = vld [vmem:[%s1 + $0x80] sm:$0xff]
  %v49 = vld [vmem:[%s1 + $0x88] sm:$0xff]
  %v50 = vld [vmem:[%s1 + $0x90] sm:$0xff]
  %v51 = vld [vmem:[%s1 + $0x98] sm:$0xff]
  %v52 = vld [vmem:[%s1 + $0xa0] sm:$0xff]
  %v53 = vld [vmem:[%s1 + $0xa8] sm:$0xff]
  %v54 = vld [vmem:[%s1 + $0xb0] sm:$0xff]
  %v55 = vld [vmem:[%s1 + $0xb8] sm:$0xff]
  %v56 = vld [vmem:[%s1 + $0xc0] sm:$0xff]
  %v57 = vld [vmem:[%s1 + $0xc8] sm:$0xff]
  %v58 = vld [vmem:[%s1 + $0xd0] sm:$0xff]
  %v59 = vld [vmem:[%s1 + $0xd8] sm:$0xff]
  %v60 = vld [vmem:[%s1 + $0xe0] sm:$0xff]
  %v61 = vld [vmem:[%s1 + $0xe8] sm:$0xff]
  %v62 = vld [vmem:[%s1 + $0xf0] sm:$0xff]
  %v63 = vld [vmem:[%s1 + $0xf8] sm:$0xff]
  %v64 = vld [vmem:[%s1 + $0x100] sm:$0xff]
  %v65 = vld [vmem:[%s1 + $0x108] sm:$0xff]
  %v66 = vld [vmem:[%s1 + $0x110] sm:$0xff]
  %v67 = vld [vmem:[%s1 + $0x118] sm:$0xff]
  %vm68 = vcmask 261120
  %v70 = vsel %vm68, %v31, 0
  %72 = vmatprep.subr.mxu0 0.0
  %73 = vmatpush1.msra.mxu0 %v32
  %74 = vmatprep.subr.mxu0 0.0
  %75 = vmatpush1.msra.mxu0 %v33
  %76 = vmatprep.subr.mxu0 0.0
  %77 = vmatpush1.msra.mxu0 %v34
  %78 = vmatprep.subr.mxu0 0.0
  %79 = vmatpush1.msra.mxu0 %v35
  %80 = vmatprep.subr.mxu0 0.0
  %81 = vmatpush1.msra.mxu0 %v36
  %82 = vmatprep.subr.mxu0 0.0
  %83 = vmatpush1.msra.mxu0 %v37
  %84 = vmatprep.subr.mxu0 0.0
  %85 = vmatpush1.msra.mxu0 %v38
  %86 = vmatprep.subr.mxu0 0.0
  %87 = vmatpush1.msra.mxu0 %v39
  %88 = vmatprep.subr.mxu0 0.0
  %89 = vmatpush1.msra.mxu0 %v40
  %90 = vmatprep.subr.mxu0 0.0
  %91 = vmatpush1.msra.mxu0 %v41
  %92 = vmatprep.subr.mxu0 0.0
  %93 = vmatpush1.msra.mxu0 %v42
  %94 = vmatprep.subr.mxu0 0.0
  %95 = vmatpush1.msra.mxu0 %v43
  %96 = vmatprep.subr.mxu0 0.0
  %97 = vmatpush1.msra.mxu0 %v44
  %98 = vmatprep.subr.mxu0 0.0
  %99 = vmatpush1.msra.mxu0 %v45
  %100 = vmatprep.subr.mxu0 0.0
  %101 = vmatpush1.msra.mxu0 %v46
  %102 = vmatprep.subr.mxu0 0.0
  %103 = vmatpush1.msra.mxu0 %v47
  %104 = vmatprep.subr.mxu0 0.0
  %105 = vmatpush1.msra.mxu0 %v48
  %106 = vmatprep.subr.mxu0 0.0
  %107 = vmatpush1.msra.mxu0 %v49
  %108 = vmatprep.subr.mxu0 0.0
  %109 = vmatpush1.msra.mxu0 %v50
  %110 = vmatprep.subr.mxu0 0.0
  %111 = vmatpush1.msra.mxu0 %v51
  %112 = vmatprep.subr.mxu0 0.0
  %113 = vmatpush1.msra.mxu0 %v52
  %114 = vmatprep.subr.mxu0 0.0
  %115 = vmatpush1.msra.mxu0 %v53
  %116 = vmatprep.subr.mxu0 0.0
  %117 = vmatpush1.msra.mxu0 %v54
  %118 = vmatprep.subr.mxu0 0.0
  %119 = vmatpush1.msra.mxu0 %v55
  %120 = vmatprep.subr.mxu0 0.0
  %121 = vmatpush1.msra.mxu0 %v56
  %122 = vmatprep.subr.mxu0 0.0
  %123 = vmatpush1.msra.mxu0 %v57
  %124 = vmatprep.subr.mxu0 0.0
  %125 = vmatpush1.msra.mxu0 %v58
  %126 = vmatprep.subr.mxu0 0.0
  %127 = vmatpush1.msra.mxu0 %v59
  %128 = vmatprep.subr.mxu0 0.0
  %129 = vmatpush1.msra.mxu0 %v60
  %130 = vmatprep.subr.mxu0 0.0
  %131 = vmatpush1.msra.mxu0 %v61
  %132 = vmatprep.subr.mxu0 0.0
  %133 = vmatpush1.msra.mxu0 %v62
  %134 = vmatprep.subr.mxu0 0.0
  %135 = vmatpush1.msra.mxu0 %v63
  %136 = vmatprep.mubr.f32.mxu0 %v30
  %137 = vmatmul.mubr.f32.gmra.mrb[0].mxu0 %v29
  %v138 = vpop.f32.mrb[0].mxu0
  %v139 = vadd.f32 0.0, %v138
  %v140 = vpop.f32.mrb[0].mxu0
  %141 = vdwg.mxu0
  %142 = vmatprep.subr.mxu0 0.0
  %143 = vmatpush1.msra.mxu0 %v64
  %144 = vmatprep.subr.mxu0 0.0
  %145 = vmatpush1.msra.mxu0 %v65
  %146 = vmatprep.subr.mxu0 0.0
  %147 = vmatpush1.msra.mxu0 %v66
  %148 = vmatprep.subr.mxu0 0.0
  %149 = vmatpush1.msra.mxu0 %v67
  %150 = vmatprep.subr.mxu0 0.0
  %151 = vmatpush1.msra.mxu0 0.0
  %152 = vmatprep.subr.mxu0 0.0
  %153 = vmatpush1.msra.mxu0 0.0
  %154 = vmatprep.subr.mxu0 0.0
  %155 = vmatpush1.msra.mxu0 0.0
  %156 = vmatprep.subr.mxu0 0.0
  %157 = vmatpush1.msra.mxu0 0.0
  %158 = vmatprep.subr.mxu0 0.0
  %159 = vmatpush1.msra.mxu0 0.0
  %160 = vmatprep.subr.mxu0 0.0
  %161 = vmatpush1.msra.mxu0 0.0
  %162 = vmatprep.subr.mxu0 0.0
  %163 = vmatpush1.msra.mxu0 0.0
  %164 = vmatprep.subr.mxu0 0.0
  %165 = vmatpush1.msra.mxu0 0.0
  %166 = vmatprep.subr.mxu0 0.0
  %167 = vmatpush1.msra.mxu0 0.0
  %168 = vmatprep.subr.mxu0 0.0
  %169 = vmatpush1.msra.mxu0 0.0
  %170 = vmatprep.subr.mxu0 0.0
  %171 = vmatpush1.msra.mxu0 0.0
  %172 = vmatprep.subr.mxu0 0.0
  %173 = vmatpush1.msra.mxu0 0.0
  %174 = vmatprep.subr.mxu0 0.0
  %175 = vmatpush1.msra.mxu0 0.0
  %176 = vmatprep.subr.mxu0 0.0
  %177 = vmatpush1.msra.mxu0 0.0
  %178 = vmatprep.subr.mxu0 0.0
  %179 = vmatpush1.msra.mxu0 0.0
  %180 = vmatprep.subr.mxu0 0.0
  %181 = vmatpush1.msra.mxu0 0.0
  %182 = vmatprep.subr.mxu0 0.0
  %183 = vmatpush1.msra.mxu0 0.0
  %184 = vmatprep.subr.mxu0 0.0
  %185 = vmatpush1.msra.mxu0 0.0
  %186 = vmatprep.subr.mxu0 0.0
  %187 = vmatpush1.msra.mxu0 0.0
  %188 = vmatprep.subr.mxu0 0.0
  %189 = vmatpush1.msra.mxu0 0.0
  %190 = vmatprep.subr.mxu0 0.0
  %191 = vmatpush1.msra.mxu0 0.0
  %192 = vmatprep.subr.mxu0 0.0
  %193 = vmatpush1.msra.mxu0 0.0
  %194 = vmatprep.subr.mxu0 0.0
  %195 = vmatpush1.msra.mxu0 0.0
  %196 = vmatprep.subr.mxu0 0.0
  %197 = vmatpush1.msra.mxu0 0.0
  %198 = vmatprep.subr.mxu0 0.0
  %199 = vmatpush1.msra.mxu0 0.0
  %200 = vmatprep.subr.mxu0 0.0
  %201 = vmatpush1.msra.mxu0 0.0
  %202 = vmatprep.subr.mxu0 0.0
  %203 = vmatpush1.msra.mxu0 0.0
  %204 = vmatprep.subr.mxu0 0.0
  %205 = vmatpush1.msra.mxu0 0.0
  %206 = vmatprep.mubr.f32.mxu0 0.0
  %207 = vmatmul.mubr.f32.gmra.mrb[0].mxu0 %v70
  %v208 = vpop.f32.mrb[0].mxu0
  %v209 = vadd.f32 %v139, %v208
  %v210 = vpop.f32.mrb[0].mxu0
  %211 = vdwg.mxu0
  %v212 = vsel %vm68, %v209, 0.0
  %v213 = vrot.slane %v212, 4
  %v214 = vadd.f32 %v212, %v213
  %v215 = vrot.slane %v214, 2
  %v216 = vadd.f32 %v214, %v215
  %v217 = vrot.slane %v216, 1
  %v218 = vadd.f32 %v216, %v217
  %v219 = vrcp.pop 8.0
  %v220 = vmul.f32 %v218, %v219
  %v221 = vsub.f32 %v209, %v220
  %v222 = vmul.f32 %v221, %v221
  %v223 = vsel %vm68, %v222, 0.0
  %v224 = vrot.slane %v223, 4
  %v225 = vadd.f32 %v223, %v224
  %v226 = vrot.slane %v225, 2
  %v227 = vadd.f32 %v225, %v226
  %v228 = vrot.slane %v227, 1
  %v229 = vadd.f32 %v227, %v228
  %v230 = vmul.f32 %v229, %v219
  %v231 = vld [vmem:[%s2] sm:$0x1]
  %v232 = vadd.f32 %v230, 1e-05
  %v233 = vrsqrt.pop %v232
  %v234 = vmul.f32 %v231, %v233
  %v236 = vlaneseq
  %v237 = vshrl.u32 %v236, 7
  %v238 = vsub.s32 0, %v237
  %v239 = vrot.slane %v234, %v238
  %v241 = vmul.f32 %v221, %v239
  %v242 = vld [vmem:[%s3] sm:$0x1]
  %v244 = vlaneseq
  %v245 = vshrl.u32 %v244, 7
  %v246 = vsub.s32 0, %v245
  %v247 = vrot.slane %v242, %v246
  %v249 = vadd.f32 %v241, %v247
  %v250 = vld [vmem:[%s4] sm:$0xff]
  %v251 = vld [vmem:[%s5] sm:$0xff]
  %v252 = vld [vmem:[%s5 + $0x8] sm:$0xff]
  %vm253 = vcmask 130048
  %v255 = vsel %vm253, %v250, 0
  %257 = vmatprep.subr.mxu0 0.0
  %258 = vmatpush1.msra.mxu0 %v251
  %259 = vmatprep.subr.mxu0 0.0
  %260 = vmatpush1.msra.mxu0 %v252
  %261 = vmatprep.subr.mxu0 0.0
  %262 = vmatpush1.msra.mxu0 0.0
  %263 = vmatprep.subr.mxu0 0.0
  %264 = vmatpush1.msra.mxu0 0.0
  %265 = vmatprep.subr.mxu0 0.0
  %266 = vmatpush1.msra.mxu0 0.0
  %267 = vmatprep.subr.mxu0 0.0
  %268 = vmatpush1.msra.mxu0 0.0
  %269 = vmatprep.subr.mxu0 0.0
  %270 = vmatpush1.msra.mxu0 0.0
  %271 = vmatprep.subr.mxu0 0.0
  %272 = vmatpush1.msra.mxu0 0.0
  %273 = vmatprep.subr.mxu0 0.0
  %274 = vmatpush1.msra.mxu0 0.0
  %275 = vmatprep.subr.mxu0 0.0
  %276 = vmatpush1.msra.mxu0 0.0
  %277 = vmatprep.subr.mxu0 0.0
  %278 = vmatpush1.msra.mxu0 0.0
  %279 = vmatprep.subr.mxu0 0.0
  %280 = vmatpush1.msra.mxu0 0.0
  %281 = vmatprep.subr.mxu0 0.0
  %282 = vmatpush1.msra.mxu0 0.0
  %283 = vmatprep.subr.mxu0 0.0
  %284 = vmatpush1.msra.mxu0 0.0
  %285 = vmatprep.subr.mxu0 0.0
  %286 = vmatpush1.msra.mxu0 0.0
  %287 = vmatprep.subr.mxu0 0.0
  %288 = vmatpush1.msra.mxu0 0.0
  %289 = vmatprep.subr.mxu0 0.0
  %290 = vmatpush1.msra.mxu0 0.0
  %291 = vmatprep.subr.mxu0 0.0
  %292 = vmatpush1.msra.mxu0 0.0
  %293 = vmatprep.subr.mxu0 0.0
  %294 = vmatpush1.msra.mxu0 0.0
  %295 = vmatprep.subr.mxu0 0.0
  %296 = vmatpush1.msra.mxu0 0.0
  %297 = vmatprep.subr.mxu0 0.0
  %298 = vmatpush1.msra.mxu0 0.0
  %299 = vmatprep.subr.mxu0 0.0
  %300 = vmatpush1.msra.mxu0 0.0
  %301 = vmatprep.subr.mxu0 0.0
  %302 = vmatpush1.msra.mxu0 0.0
  %303 = vmatprep.subr.mxu0 0.0
  %304 = vmatpush1.msra.mxu0 0.0
  %305 = vmatprep.subr.mxu0 0.0
  %306 = vmatpush1.msra.mxu0 0.0
  %307 = vmatprep.subr.mxu0 0.0
  %308 = vmatpush1.msra.mxu0 0.0
  %309 = vmatprep.subr.mxu0 0.0
  %310 = vmatpush1.msra.mxu0 0.0
  %311 = vmatprep.subr.mxu0 0.0
  %312 = vmatpush1.msra.mxu0 0.0
  %313 = vmatprep.subr.mxu0 0.0
  %314 = vmatpush1.msra.mxu0 0.0
  %315 = vmatprep.subr.mxu0 0.0
  %316 = vmatpush1.msra.mxu0 0.0
  %317 = vmatprep.subr.mxu0 0.0
  %318 = vmatpush1.msra.mxu0 0.0
  %319 = vmatprep.subr.mxu0 0.0
  %320 = vmatpush1.msra.mxu0 0.0
  %321 = vmatprep.mubr.f32.mxu0 0.0
  %322 = vmatmul.mubr.f32.gmra.mrb[0].mxu0 %v255
  %v323 = vpop.f32.mrb[0].mxu0
  %v324 = vadd.f32 0.0, %v323
  %v325 = vpop.f32.mrb[0].mxu0
  %326 = vdwg.mxu0
  %v327 = vsel %vm68, %v324, 0.0
  %v328 = vrot.slane %v327, 4
  %v329 = vadd.f32 %v327, %v328
  %v330 = vrot.slane %v329, 2
  %v331 = vadd.f32 %v329, %v330
  %v332 = vrot.slane %v331, 1
  %v333 = vadd.f32 %v331, %v332
  %v334 = vmul.f32 %v333, %v219
  %v335 = vsub.f32 %v324, %v334
  %v336 = vmul.f32 %v335, %v335
  %v337 = vsel %vm68, %v336, 0.0
  %v338 = vrot.slane %v337, 4
  %v339 = vadd.f32 %v337, %v338
  %v340 = vrot.slane %v339, 2
  %v341 = vadd.f32 %v339, %v340
  %v342 = vrot.slane %v341, 1
  %v343 = vadd.f32 %v341, %v342
  %v344 = vmul.f32 %v343, %v219
  %v345 = vld [vmem:[%s6] sm:$0x1]
  %v346 = vadd.f32 %v344, 1e-05
  %v347 = vrsqrt.pop %v346
  %v348 = vmul.f32 %v345, %v347
  %v350 = vlaneseq
  %v351 = vshrl.u32 %v350, 7
  %v352 = vsub.s32 0, %v351
  %v353 = vrot.slane %v348, %v352
  %v355 = vmul.f32 %v335, %v353
  %v356 = vld [vmem:[%s7] sm:$0x1]
  %v358 = vlaneseq
  %v359 = vshrl.u32 %v358, 7
  %v360 = vsub.s32 0, %v359
  %v361 = vrot.slane %v356, %v360
  %v363 = vadd.f32 %v355, %v361
  %v364 = vadd.f32 %v249, %v363
  %365 = vst.msk [vmem:[%s8] sm:$0xff] %vm68, %v364
  // Predicated region
  $region34: #{resnet_forward.18} parent=0 // pred_check
    _
  $region35: #{resnet_forward.18} parent=0 // pred_check_branch
    %367 = sbr.rel (0) target = $region37
  $region36: #{resnet_forward.18} parent=0 // pred_region
    _
  $region37: #{resnet_forward.18} parent=0 // pred_fallthru
    _
  // Predicated region
  $region38: #{resnet_forward.18} parent=0 // pred_check
    _
  $region39: #{resnet_forward.18} parent=0 // pred_check_branch
    %369 = sbr.rel (0) target = $region41
  $region40: #{resnet_forward.18} parent=0 // pred_region
    _
  $region41: #{resnet_forward.18} parent=0 // pred_fallthru
    _

// kernel: resnet_forward.19
$region0: #{resnet_forward.19}
  #allocation0 [shape = 'u32[]', space=smem, size = 0x4, offset = 0x4, fixed_abs, tag = 'smem constant byte address 0x4 - core index']
  #allocation1 [shape = 'u32[144,128]{1,0:T(1,128)}', space=vmem, size = 0x12000, scoped, tag = 'internal scratch']
  %s0 = inlined_call_operand.vmem [shape: f32[2,288], index: 0, kind: input, shape index: {}]
  %s1 = inlined_call_operand.vmem [shape: f32[288,64], index: 1, kind: input, shape index: {}]
  %s2 = inlined_call_operand.vmem [shape: f32[1,64], index: 2, kind: input, shape index: {}]
  %s3 = inlined_call_operand.vmem [shape: f32[1,64], index: 3, kind: input, shape index: {}]
  %s4 = inlined_call_operand.vmem [shape: f32[2,64], index: 4, kind: output, shape index: {}]
  %s5 = sld [smem:[#allocation0]]
  $region26: #{resnet_forward.19} parent=0
    _
  %s7 = ssub.s32 1, %s5
  %s8 = scalar_select 0, %s7, %s5
  // Predicated region
  $region2: #{resnet_forward.19} parent=0 // pred_check
    _
  $region3: #{resnet_forward.19} parent=0 // pred_check_branch
    %10 = sbr.rel (0) target = $region5
  $region4: #{resnet_forward.19} parent=0 // pred_region
    _
  $region5: #{resnet_forward.19} parent=0 // pred_fallthru
    _
  // Predicated region
  $region6: #{resnet_forward.19} parent=0 // pred_check
    _
  $region7: #{resnet_forward.19} parent=0 // pred_check_branch
    %12 = sbr.rel (0) target = $region9
  $region8: #{resnet_forward.19} parent=0 // pred_region
    _
  $region9: #{resnet_forward.19} parent=0 // pred_fallthru
    _
  // Predicated region
  $region10: #{resnet_forward.19} parent=0 // pred_check
    _
  $region11: #{resnet_forward.19} parent=0 // pred_check_branch
    %14 = sbr.rel (0) target = $region13
  $region12: #{resnet_forward.19} parent=0 // pred_region
    _
  $region13: #{resnet_forward.19} parent=0 // pred_fallthru
    _
  // Predicated region
  $region14: #{resnet_forward.19} parent=0 // pred_check
    _
  $region15: #{resnet_forward.19} parent=0 // pred_check_branch
    %16 = sbr.rel (0) target = $region17
  $region16: #{resnet_forward.19} parent=0 // pred_region
    _
  $region17: #{resnet_forward.19} parent=0 // pred_fallthru
    _
  %v17 = vld [vmem:[%s0] sm:$0x3f]
  %v18 = vld [vmem:[%s1] sm:$0xff]
  %v19 = vld [vmem:[%s1 + $0x8] sm:$0xff]
  %v20 = vld [vmem:[%s1 + $0x10] sm:$0xff]
  %v21 = vld [vmem:[%s1 + $0x18] sm:$0xff]
  %v22 = vld [vmem:[%s1 + $0x20] sm:$0xff]
  %v23 = vld [vmem:[%s1 + $0x28] sm:$0xff]
  %v24 = vld [vmem:[%s1 + $0x30] sm:$0xff]
  %v25 = vld [vmem:[%s1 + $0x38] sm:$0xff]
  %v26 = vld [vmem:[%s1 + $0x40] sm:$0xff]
  %v27 = vld [vmem:[%s1 + $0x48] sm:$0xff]
  %v28 = vld [vmem:[%s1 + $0x50] sm:$0xff]
  %v29 = vld [vmem:[%s1 + $0x58] sm:$0xff]
  %v30 = vld [vmem:[%s1 + $0x60] sm:$0xff]
  %v31 = vld [vmem:[%s1 + $0x68] sm:$0xff]
  %v32 = vld [vmem:[%s1 + $0x70] sm:$0xff]
  %v33 = vld [vmem:[%s1 + $0x78] sm:$0xff]
  %v34 = vld [vmem:[%s1 + $0x80] sm:$0xff]
  %v35 = vld [vmem:[%s1 + $0x88] sm:$0xff]
  %v36 = vld [vmem:[%s1 + $0x90] sm:$0xff]
  %v37 = vld [vmem:[%s1 + $0x98] sm:$0xff]
  %v38 = vld [vmem:[%s1 + $0xa0] sm:$0xff]
  %v39 = vld [vmem:[%s1 + $0xa8] sm:$0xff]
  %v40 = vld [vmem:[%s1 + $0xb0] sm:$0xff]
  %v41 = vld [vmem:[%s1 + $0xb8] sm:$0xff]
  %v42 = vld [vmem:[%s1 + $0xc0] sm:$0xff]
  %v43 = vld [vmem:[%s1 + $0xc8] sm:$0xff]
  %v44 = vld [vmem:[%s1 + $0xd0] sm:$0xff]
  %v45 = vld [vmem:[%s1 + $0xd8] sm:$0xff]
  %v46 = vld [vmem:[%s1 + $0xe0] sm:$0xff]
  %v47 = vld [vmem:[%s1 + $0xe8] sm:$0xff]
  %v48 = vld [vmem:[%s1 + $0xf0] sm:$0xff]
  %v49 = vld [vmem:[%s1 + $0xf8] sm:$0xff]
  %v50 = vld [vmem:[%s1 + $0x100] sm:$0xff]
  %v51 = vld [vmem:[%s1 + $0x108] sm:$0xff]
  %v52 = vld [vmem:[%s1 + $0x110] sm:$0xff]
  %v53 = vld [vmem:[%s1 + $0x118] sm:$0xff]
  %v55 = vcombine.high %v17, %v17
  %v57 = vunpack.c.l.s4 1983009808
  %v58 = vunpack.c.0.s8 %v57
  %v59 = vlaneseq
  %v60 = vshrl.u32 %v59, 7
  %v61 = vsub.s32 %v58, %v60
  %v62 = vrot.slane %v17, %v61
  %v64 = vunpack.c.l.s4 1983009808
  %v65 = vunpack.c.0.s8 %v64
  %v66 = vlaneseq
  %v67 = vshrl.u32 %v66, 7
  %v68 = vsub.s32 %v65, %v67
  %v69 = vrot.slane %v55, %v68
  %v70 = vcombine.high %v62, %v62
  %vm73 = vcmask 261120
  %v74 = vsel %vm73, %v69, 0
  %76 = vmatprep.subr.mxu0 0.0
  %77 = vmatpush1.msra.mxu0 %v18
  %78 = vmatprep.subr.mxu0 0.0
  %79 = vmatpush1.msra.mxu0 %v19
  %80 = vmatprep.subr.mxu0 0.0
  %81 = vmatpush1.msra.mxu0 %v20
  %82 = vmatprep.subr.mxu0 0.0
  %83 = vmatpush1.msra.mxu0 %v21
  %84 = vmatprep.subr.mxu0 0.0
  %85 = vmatpush1.msra.mxu0 %v22
  %86 = vmatprep.subr.mxu0 0.0
  %87 = vmatpush1.msra.mxu0 %v23
  %88 = vmatprep.subr.mxu0 0.0
  %89 = vmatpush1.msra.mxu0 %v24
  %90 = vmatprep.subr.mxu0 0.0
  %91 = vmatpush1.msra.mxu0 %v25
  %92 = vmatprep.subr.mxu0 0.0
  %93 = vmatpush1.msra.mxu0 %v26
  %94 = vmatprep.subr.mxu0 0.0
  %95 = vmatpush1.msra.mxu0 %v27
  %96 = vmatprep.subr.mxu0 0.0
  %97 = vmatpush1.msra.mxu0 %v28
  %98 = vmatprep.subr.mxu0 0.0
  %99 = vmatpush1.msra.mxu0 %v29
  %100 = vmatprep.subr.mxu0 0.0
  %101 = vmatpush1.msra.mxu0 %v30
  %102 = vmatprep.subr.mxu0 0.0
  %103 = vmatpush1.msra.mxu0 %v31
  %104 = vmatprep.subr.mxu0 0.0
  %105 = vmatpush1.msra.mxu0 %v32
  %106 = vmatprep.subr.mxu0 0.0
  %107 = vmatpush1.msra.mxu0 %v33
  %108 = vmatprep.subr.mxu0 0.0
  %109 = vmatpush1.msra.mxu0 %v34
  %110 = vmatprep.subr.mxu0 0.0
  %111 = vmatpush1.msra.mxu0 %v35
  %112 = vmatprep.subr.mxu0 0.0
  %113 = vmatpush1.msra.mxu0 %v36
  %114 = vmatprep.subr.mxu0 0.0
  %115 = vmatpush1.msra.mxu0 %v37
  %116 = vmatprep.subr.mxu0 0.0
  %117 = vmatpush1.msra.mxu0 %v38
  %118 = vmatprep.subr.mxu0 0.0
  %119 = vmatpush1.msra.mxu0 %v39
  %120 = vmatprep.subr.mxu0 0.0
  %121 = vmatpush1.msra.mxu0 %v40
  %122 = vmatprep.subr.mxu0 0.0
  %123 = vmatpush1.msra.mxu0 %v41
  %124 = vmatprep.subr.mxu0 0.0
  %125 = vmatpush1.msra.mxu0 %v42
  %126 = vmatprep.subr.mxu0 0.0
  %127 = vmatpush1.msra.mxu0 %v43
  %128 = vmatprep.subr.mxu0 0.0
  %129 = vmatpush1.msra.mxu0 %v44
  %130 = vmatprep.subr.mxu0 0.0
  %131 = vmatpush1.msra.mxu0 %v45
  %132 = vmatprep.subr.mxu0 0.0
  %133 = vmatpush1.msra.mxu0 %v46
  %134 = vmatprep.subr.mxu0 0.0
  %135 = vmatpush1.msra.mxu0 %v47
  %136 = vmatprep.subr.mxu0 0.0
  %137 = vmatpush1.msra.mxu0 %v48
  %138 = vmatprep.subr.mxu0 0.0
  %139 = vmatpush1.msra.mxu0 %v49
  %140 = vmatprep.mubr.f32.mxu0 %v70
  %141 = vmatmul.mubr.f32.gmra.mrb[0].mxu0 %v62
  %v142 = vpop.f32.mrb[0].mxu0
  %v143 = vadd.f32 0.0, %v142
  %v144 = vpop.f32.mrb[0].mxu0
  %145 = vdwg.mxu0
  %146 = vmatprep.subr.mxu0 0.0
  %147 = vmatpush1.msra.mxu0 %v50
  %148 = vmatprep.subr.mxu0 0.0
  %149 = vmatpush1.msra.mxu0 %v51
  %150 = vmatprep.subr.mxu0 0.0
  %151 = vmatpush1.msra.mxu0 %v52
  %152 = vmatprep.subr.mxu0 0.0
  %153 = vmatpush1.msra.mxu0 %v53
  %154 = vmatprep.subr.mxu0 0.0
  %155 = vmatpush1.msra.mxu0 0.0
  %156 = vmatprep.subr.mxu0 0.0
  %157 = vmatpush1.msra.mxu0 0.0
  %158 = vmatprep.subr.mxu0 0.0
  %159 = vmatpush1.msra.mxu0 0.0
  %160 = vmatprep.subr.mxu0 0.0
  %161 = vmatpush1.msra.mxu0 0.0
  %162 = vmatprep.subr.mxu0 0.0
  %163 = vmatpush1.msra.mxu0 0.0
  %164 = vmatprep.subr.mxu0 0.0
  %165 = vmatpush1.msra.mxu0 0.0
  %166 = vmatprep.subr.mxu0 0.0
  %167 = vmatpush1.msra.mxu0 0.0
  %168 = vmatprep.subr.mxu0 0.0
  %169 = vmatpush1.msra.mxu0 0.0
  %170 = vmatprep.subr.mxu0 0.0
  %171 = vmatpush1.msra.mxu0 0.0
  %172 = vmatprep.subr.mxu0 0.0
  %173 = vmatpush1.msra.mxu0 0.0
  %174 = vmatprep.subr.mxu0 0.0
  %175 = vmatpush1.msra.mxu0 0.0
  %176 = vmatprep.subr.mxu0 0.0
  %177 = vmatpush1.msra.mxu0 0.0
  %178 = vmatprep.subr.mxu0 0.0
  %179 = vmatpush1.msra.mxu0 0.0
  %180 = vmatprep.subr.mxu0 0.0
  %181 = vmatpush1.msra.mxu0 0.0
  %182 = vmatprep.subr.mxu0 0.0
  %183 = vmatpush1.msra.mxu0 0.0
  %184 = vmatprep.subr.mxu0 0.0
  %185 = vmatpush1.msra.mxu0 0.0
  %186 = vmatprep.subr.mxu0 0.0
  %187 = vmatpush1.msra.mxu0 0.0
  %188 = vmatprep.subr.mxu0 0.0
  %189 = vmatpush1.msra.mxu0 0.0
  %190 = vmatprep.subr.mxu0 0.0
  %191 = vmatpush1.msra.mxu0 0.0
  %192 = vmatprep.subr.mxu0 0.0
  %193 = vmatpush1.msra.mxu0 0.0
  %194 = vmatprep.subr.mxu0 0.0
  %195 = vmatpush1.msra.mxu0 0.0
  %196 = vmatprep.subr.mxu0 0.0
  %197 = vmatpush1.msra.mxu0 0.0
  %198 = vmatprep.subr.mxu0 0.0
  %199 = vmatpush1.msra.mxu0 0.0
  %200 = vmatprep.subr.mxu0 0.0
  %201 = vmatpush1.msra.mxu0 0.0
  %202 = vmatprep.subr.mxu0 0.0
  %203 = vmatpush1.msra.mxu0 0.0
  %204 = vmatprep.subr.mxu0 0.0
  %205 = vmatpush1.msra.mxu0 0.0
  %206 = vmatprep.subr.mxu0 0.0
  %207 = vmatpush1.msra.mxu0 0.0
  %208 = vmatprep.subr.mxu0 0.0
  %209 = vmatpush1.msra.mxu0 0.0
  %210 = vmatprep.mubr.f32.mxu0 0.0
  %211 = vmatmul.mubr.f32.gmra.mrb[0].mxu0 %v74
  %v212 = vpop.f32.mrb[0].mxu0
  %v213 = vadd.f32 %v143, %v212
  %v214 = vpop.f32.mrb[0].mxu0
  %215 = vdwg.mxu0
  %vm216 = vcmask 517120
  %v217 = vsel %vm216, %v213, 0.0
  %v218 = vrot.slane %v217, 4
  %v219 = vadd.f32 %v217, %v218
  %v220 = vrot.slane %v219, 2
  %v221 = vadd.f32 %v219, %v220
  %v222 = vrot.slane %v221, 1
  %v223 = vadd.f32 %v221, %v222
  %v224 = vrcp.pop 2.0
  %v225 = vmul.f32 %v223, %v224
  %v226 = vsub.f32 %v213, %v225
  %v227 = vmul.f32 %v226, %v226
  %v228 = vsel %vm216, %v227, 0.0
  %v229 = vrot.slane %v228, 4
  %v230 = vadd.f32 %v228, %v229
  %v231 = vrot.slane %v230, 2
  %v232 = vadd.f32 %v230, %v231
  %v233 = vrot.slane %v232, 1
  %v234 = vadd.f32 %v232, %v233
  %v235 = vmul.f32 %v234, %v224
  %v236 = vld [vmem:[%s2] sm:$0x1]
  %v237 = vadd.f32 %v235, 1e-05
  %v238 = vrsqrt.pop %v237
  %v239 = vmul.f32 %v236, %v238
  %v241 = vlaneseq
  %v242 = vshrl.u32 %v241, 7
  %v243 = vsub.s32 0, %v242
  %v244 = vrot.slane %v239, %v243
  %v246 = vmul.f32 %v226, %v244
  %v247 = vld [vmem:[%s3] sm:$0x1]
  %v249 = vlaneseq
  %v250 = vshrl.u32 %v249, 7
  %v251 = vsub.s32 0, %v250
  %v252 = vrot.slane %v247, %v251
  %v254 = vadd.f32 %v246, %v252
  %v255 = vmax.f32 %v254, 0.0
  %256 = vst.msk [vmem:[%s4] sm:$0x3] %vm216, %v255
  // Predicated region
  $region18: #{resnet_forward.19} parent=0 // pred_check
    _
  $region19: #{resnet_forward.19} parent=0 // pred_check_branch
    %258 = sbr.rel (0) target = $region21
  $region20: #{resnet_forward.19} parent=0 // pred_region
    _
  $region21: #{resnet_forward.19} parent=0 // pred_fallthru
    _
  // Predicated region
  $region22: #{resnet_forward.19} parent=0 // pred_check
    _
  $region23: #{resnet_forward.19} parent=0 // pred_check_branch
    %260 = sbr.rel (0) target = $region25
  $region24: #{resnet_forward.19} parent=0 // pred_region
    _
  $region25: #{resnet_forward.19} parent=0 // pred_fallthru
    _

// kernel: resnet_forward.21
$region0: #{resnet_forward.21}
  #allocation0 [shape = 'u32[]', space=smem, size = 0x4, offset = 0x4, fixed_abs, tag = 'smem constant byte address 0x4 - core index']
  #allocation1 [shape = 'u32[144,128]{1,0:T(1,128)}', space=vmem, size = 0x12000, scoped, tag = 'internal scratch']
  %s0 = inlined_call_operand.vmem [shape: f32[2,1,64], index: 0, kind: input, shape index: {}]
  %s1 = inlined_call_operand.vmem [shape: f32[64,10], index: 1, kind: input, shape index: {}]
  %s2 = inlined_call_operand.vmem [shape: f32[1,10], index: 2, kind: input, shape index: {}]
  %s3 = inlined_call_operand.hbm [shape: f32[2,10], index: 3, kind: output, shape index: {}]
  %s4 = sld [smem:[#allocation0]]
  $region22: #{resnet_forward.21} parent=0
    _
  %s6 = ssub.s32 1, %s4
  %s7 = scalar_select 0, %s6, %s4
  $region1: #{resnet_forward.21} parent=0
    #allocation2 [shape = 'u8[1024]{0}', space=vmem, size = 0x400, scoped, tag = 'output window, operand 0, single buffered']
    #allocation3 [shape = 's32[1]{0}', space=sflag, size = 0x4, scoped, tag = 'scoped memory for resnet_forward.21']
    %8 = vsyncpa [#allocation3], 0
    // Predicated region
    $region2: #{resnet_forward.21} parent=1 // pred_check
      _
    $region3: #{resnet_forward.21} parent=1 // pred_check_branch
      %10 = sbr.rel (0) target = $region5
    $region4: #{resnet_forward.21} parent=1 // pred_region
      _
    $region5: #{resnet_forward.21} parent=1 // pred_fallthru
      _
    // Predicated region
    $region6: #{resnet_forward.21} parent=1 // pred_check
      _
    $region7: #{resnet_forward.21} parent=1 // pred_check_branch
      %12 = sbr.rel (0) target = $region9
    $region8: #{resnet_forward.21} parent=1 // pred_region
      _
    $region9: #{resnet_forward.21} parent=1 // pred_fallthru
      _
    // Predicated region
    $region10: #{resnet_forward.21} parent=1 // pred_check
      _
    $region11: #{resnet_forward.21} parent=1 // pred_check_branch
      %14 = sbr.rel (0) target = $region13
    $region12: #{resnet_forward.21} parent=1 // pred_region
      _
    $region13: #{resnet_forward.21} parent=1 // pred_fallthru
      _
    %v15 = vld [vmem:[%s0] sm:$0x1]
    %v16 = vld [vmem:[%s0 + $0x1] sm:$0x1]
    %v17 = vadd.f32 %v15, 0.0
    %v18 = vadd.f32 %v16, 0.0
    %v19 = vld [vmem:[%s1] sm:$0xff]
    %v20 = vld [vmem:[%s1 + $0x8] sm:$0xff]
    %v21 = vld [vmem:[%s1 + $0x10] sm:$0xff]
    %v22 = vld [vmem:[%s1 + $0x18] sm:$0xff]
    %v23 = vld [vmem:[%s1 + $0x20] sm:$0xff]
    %v24 = vld [vmem:[%s1 + $0x28] sm:$0xff]
    %v25 = vld [vmem:[%s1 + $0x30] sm:$0xff]
    %v26 = vld [vmem:[%s1 + $0x38] sm:$0xff]
    %v27 = vld [vmem:[%s2] sm:$0x1]
    %v29 = vlaneseq
    %v30 = vshrl.u32 %v29, 7
    %v31 = vsub.s32 0, %v30
    %v32 = vrot.slane %v27, %v31
    %v36 = vcombine.low %v17, %v18
    %v38 = vunpack.c.l.s4 1966171168
    %v39 = vunpack.c.0.s8 %v38
    %v40 = vlaneseq
    %v41 = vshrl.u32 %v40, 7
    %v42 = vsub.s32 %v39, %v41
    %v43 = vrot.slane %v36, %v42
    %v45 = vunpack.c.l.s4 1966171168
    %v46 = vunpack.c.0.s8 %v45
    %v47 = vlaneseq
    %v48 = vshrl.u32 %v47, 7
    %v49 = vsub.s32 %v46, %v48
    %v50 = vrot.slane %v43, %v49
    %vm51 = vcmask 523264
    %v52 = vsel %vm51, %v50, 0
    %54 = vmatprep.subr.mxu0 0.0
    %55 = vmatpush1.msra.mxu0 %v19
    %56 = vmatprep.subr.mxu0 0.0
    %57 = vmatpush1.msra.mxu0 %v20
    %58 = vmatprep.subr.mxu0 0.0
    %59 = vmatpush1.msra.mxu0 %v21
    %60 = vmatprep.subr.mxu0 0.0
    %61 = vmatpush1.msra.mxu0 %v22
    %62 = vmatprep.subr.mxu0 0.0
    %63 = vmatpush1.msra.mxu0 %v23
    %64 = vmatprep.subr.mxu0 0.0
    %65 = vmatpush1.msra.mxu0 %v24
    %66 = vmatprep.subr.mxu0 0.0
    %67 = vmatpush1.msra.mxu0 %v25
    %68 = vmatprep.subr.mxu0 0.0
    %69 = vmatpush1.msra.mxu0 %v26
    %70 = vmatprep.subr.mxu0 0.0
    %71 = vmatpush1.msra.mxu0 0.0
    %72 = vmatprep.subr.mxu0 0.0
    %73 = vmatpush1.msra.mxu0 0.0
    %74 = vmatprep.subr.mxu0 0.0
    %75 = vmatpush1.msra.mxu0 0.0
    %76 = vmatprep.subr.mxu0 0.0
    %77 = vmatpush1.msra.mxu0 0.0
    %78 = vmatprep.subr.mxu0 0.0
    %79 = vmatpush1.msra.mxu0 0.0
    %80 = vmatprep.subr.mxu0 0.0
    %81 = vmatpush1.msra.mxu0 0.0
    %82 = vmatprep.subr.mxu0 0.0
    %83 = vmatpush1.msra.mxu0 0.0
    %84 = vmatprep.subr.mxu0 0.0
    %85 = vmatpush1.msra.mxu0 0.0
    %86 = vmatprep.subr.mxu0 0.0
    %87 = vmatpush1.msra.mxu0 0.0
    %88 = vmatprep.subr.mxu0 0.0
    %89 = vmatpush1.msra.mxu0 0.0
    %90 = vmatprep.subr.mxu0 0.0
    %91 = vmatpush1.msra.mxu0 0.0
    %92 = vmatprep.subr.mxu0 0.0
    %93 = vmatpush1.msra.mxu0 0.0
    %94 = vmatprep.subr.mxu0 0.0
    %95 = vmatpush1.msra.mxu0 0.0
    %96 = vmatprep.subr.mxu0 0.0
    %97 = vmatpush1.msra.mxu0 0.0
    %98 = vmatprep.subr.mxu0 0.0
    %99 = vmatpush1.msra.mxu0 0.0
    %100 = vmatprep.subr.mxu0 0.0
    %101 = vmatpush1.msra.mxu0 0.0
    %102 = vmatprep.subr.mxu0 0.0
    %103 = vmatpush1.msra.mxu0 0.0
    %104 = vmatprep.subr.mxu0 0.0
    %105 = vmatpush1.msra.mxu0 0.0
    %106 = vmatprep.subr.mxu0 0.0
    %107 = vmatpush1.msra.mxu0 0.0
    %108 = vmatprep.subr.mxu0 0.0
    %109 = vmatpush1.msra.mxu0 0.0
    %110 = vmatprep.subr.mxu0 0.0
    %111 = vmatpush1.msra.mxu0 0.0
    %112 = vmatprep.subr.mxu0 0.0
    %113 = vmatpush1.msra.mxu0 0.0
    %114 = vmatprep.subr.mxu0 0.0
    %115 = vmatpush1.msra.mxu0 0.0
    %116 = vmatprep.subr.mxu0 0.0
    %117 = vmatpush1.msra.mxu0 0.0
    %118 = vmatprep.mubr.f32.mxu0 0.0
    %119 = vmatmul.mubr.f32.gmra.mrb[0].mxu0 %v52
    %v120 = vpop.f32.mrb[0].mxu0
    %v121 = vadd.f32 %v32, %v120
    %v122 = vpop.f32.mrb[0].mxu0
    %123 = vdwg.mxu0
    %vm124 = vcmask 74752
    %125 = vst.msk [vmem:[#allocation2] sm:$0x3] %vm124, %v121
    // Predicated region
    $region14: #{resnet_forward.21} parent=1 // pred_check
      _
    $region15: #{resnet_forward.21} parent=1 // pred_check_branch
      %127 = sbr.rel (0) target = $region17
    $region16: #{resnet_forward.21} parent=1 // pred_region
      %s129 = ssub.s32 32, 32
      %130 = vsyncadd [#allocation3], %s129
      %s132 = sshll.u32 [#allocation2], 4
      %s133 = int_to_ptr.vmem [resolvable:$true] %s132
      %135 = dma.vmem_to_hbm [thread:$0]  %s133, 32, %s3, [#allocation3]
    $region17: #{resnet_forward.21} parent=1 // pred_fallthru
      _
    // Predicated region
    $region18: #{resnet_forward.21} parent=1 // pred_check
      _
    $region19: #{resnet_forward.21} parent=1 // pred_check_branch
      %137 = sbr.rel (0) target = $region21
    $region20: #{resnet_forward.21} parent=1 // pred_region
      %138 = dma.done [#allocation3], 32
    $region21: #{resnet_forward.21} parent=1 // pred_fallthru
      _
    %139 = vsyncpa [#allocation3], 1

// kernel: resnet_forward.20
$region0: #{resnet_forward.20}
  #allocation0 [shape = 'u32[]', space=smem, size = 0x4, offset = 0x4, fixed_abs, tag = 'smem constant byte address 0x4 - core index']
  #allocation1 [shape = 'u32[144,128]{1,0:T(1,128)}', space=vmem, size = 0x12000, scoped, tag = 'internal scratch']
  %s0 = inlined_call_operand.vmem [shape: f32[2,576], index: 0, kind: input, shape index: {}]
  %s1 = inlined_call_operand.vmem [shape: f32[576,64], index: 1, kind: input, shape index: {}]
  %s2 = inlined_call_operand.vmem [shape: f32[1,64], index: 2, kind: input, shape index: {}, may-alias: {2,6}]
  %s3 = inlined_call_operand.vmem [shape: f32[1,64], index: 3, kind: input, shape index: {}, may-alias: {3,7}]
  %s4 = inlined_call_operand.vmem [shape: f32[2,32], index: 4, kind: input, shape index: {}]
  %s5 = inlined_call_operand.vmem [shape: f32[32,64], index: 5, kind: input, shape index: {}]
  %s6 = inlined_call_operand.vmem [shape: f32[1,64], index: 6, kind: input, shape index: {}, may-alias: {2,6}]
  %s7 = inlined_call_operand.vmem [shape: f32[1,64], index: 7, kind: input, shape index: {}, may-alias: {3,7}]
  %s8 = inlined_call_operand.vmem [shape: f32[2,64], index: 8, kind: output, shape index: {}]
  %s9 = sld [smem:[#allocation0]]
  $region42: #{resnet_forward.20} parent=0
    _
  %s11 = ssub.s32 1, %s9
  %s12 = scalar_select 0, %s11, %s9
  // Predicated region
  $region2: #{resnet_forward.20} parent=0 // pred_check
    _
  $region3: #{resnet_forward.20} parent=0 // pred_check_branch
    %14 = sbr.rel (0) target = $region5
  $region4: #{resnet_forward.20} parent=0 // pred_region
    _
  $region5: #{resnet_forward.20} parent=0 // pred_fallthru
    _
  // Predicated region
  $region6: #{resnet_forward.20} parent=0 // pred_check
    _
  $region7: #{resnet_forward.20} parent=0 // pred_check_branch
    %16 = sbr.rel (0) target = $region9
  $region8: #{resnet_forward.20} parent=0 // pred_region
    _
  $region9: #{resnet_forward.20} parent=0 // pred_fallthru
    _
  // Predicated region
  $region10: #{resnet_forward.20} parent=0 // pred_check
    _
  $region11: #{resnet_forward.20} parent=0 // pred_check_branch
    %18 = sbr.rel (0) target = $region13
  $region12: #{resnet_forward.20} parent=0 // pred_region
    _
  $region13: #{resnet_forward.20} parent=0 // pred_fallthru
    _
  // Predicated region
  $region14: #{resnet_forward.20} parent=0 // pred_check
    _
  $region15: #{resnet_forward.20} parent=0 // pred_check_branch
    %20 = sbr.rel (0) target = $region17
  $region16: #{resnet_forward.20} parent=0 // pred_region
    _
  $region17: #{resnet_forward.20} parent=0 // pred_fallthru
    _
  // Predicated region
  $region18: #{resnet_forward.20} parent=0 // pred_check
    _
  $region19: #{resnet_forward.20} parent=0 // pred_check_branch
    %22 = sbr.rel (0) target = $region21
  $region20: #{resnet_forward.20} parent=0 // pred_region
    _
  $region21: #{resnet_forward.20} parent=0 // pred_fallthru
    _
  // Predicated region
  $region22: #{resnet_forward.20} parent=0 // pred_check
    _
  $region23: #{resnet_forward.20} parent=0 // pred_check_branch
    %24 = sbr.rel (0) target = $region25
  $region24: #{resnet_forward.20} parent=0 // pred_region
    _
  $region25: #{resnet_forward.20} parent=0 // pred_fallthru
    _
  // Predicated region
  $region26: #{resnet_forward.20} parent=0 // pred_check
    _
  $region27: #{resnet_forward.20} parent=0 // pred_check_branch
    %26 = sbr.rel (0) target = $region29
  $region28: #{resnet_forward.20} parent=0 // pred_region
    _
  $region29: #{resnet_forward.20} parent=0 // pred_fallthru
    _
  // Predicated region
  $region30: #{resnet_forward.20} parent=0 // pred_check
    _
  $region31: #{resnet_forward.20} parent=0 // pred_check_branch
    %28 = sbr.rel (0) target = $region33
  $region32: #{resnet_forward.20} parent=0 // pred_region
    _
  $region33: #{resnet_forward.20} parent=0 // pred_fallthru
    _
  %v29 = vld [vmem:[%s0] sm:$0xff]
  %v30 = vld [vmem:[%s0 + $0x8] sm:$0x3]
  %v31 = vld [vmem:[%s1] sm:$0xff]
  %v32 = vld [vmem:[%s1 + $0x8] sm:$0xff]
  %v33 = vld [vmem:[%s1 + $0x10] sm:$0xff]
  %v34 = vld [vmem:[%s1 + $0x18] sm:$0xff]
  %v35 = vld [vmem:[%s1 + $0x20] sm:$0xff]
  %v36 = vld [vmem:[%s1 + $0x28] sm:$0xff]
  %v37 = vld [vmem:[%s1 + $0x30] sm:$0xff]
  %v38 = vld [vmem:[%s1 + $0x38] sm:$0xff]
  %v39 = vld [vmem:[%s1 + $0x40] sm:$0xff]
  %v40 = vld [vmem:[%s1 + $0x48] sm:$0xff]
  %v41 = vld [vmem:[%s1 + $0x50] sm:$0xff]
  %v42 = vld [vmem:[%s1 + $0x58] sm:$0xff]
  %v43 = vld [vmem:[%s1 + $0x60] sm:$0xff]
  %v44 = vld [vmem:[%s1 + $0x68] sm:$0xff]
  %v45 = vld [vmem:[%s1 + $0x70] sm:$0xff]
  %v46 = vld [vmem:[%s1 + $0x78] sm:$0xff]
  %v47 = vld [vmem:[%s1 + $0x80] sm:$0xff]
  %v48 = vld [vmem:[%s1 + $0x88] sm:$0xff]
  %v49 = vld [vmem:[%s1 + $0x90] sm:$0xff]
  %v50 = vld [vmem:[%s1 + $0x98] sm:$0xff]
  %v51 = vld [vmem:[%s1 + $0xa0] sm:$0xff]
  %v52 = vld [vmem:[%s1 + $0xa8] sm:$0xff]
  %v53 = vld [vmem:[%s1 + $0xb0] sm:$0xff]
  %v54 = vld [vmem:[%s1 + $0xb8] sm:$0xff]
  %v55 = vld [vmem:[%s1 + $0xc0] sm:$0xff]
  %v56 = vld [vmem:[%s1 + $0xc8] sm:$0xff]
  %v57 = vld [vmem:[%s1 + $0xd0] sm:$0xff]
  %v58 = vld [vmem:[%s1 + $0xd8] sm:$0xff]
  %v59 = vld [vmem:[%s1 + $0xe0] sm:$0xff]
  %v60 = vld [vmem:[%s1 + $0xe8] sm:$0xff]
  %v61 = vld [vmem:[%s1 + $0xf0] sm:$0xff]
  %v62 = vld [vmem:[%s1 + $0xf8] sm:$0xff]
  %v63 = vld [vmem:[%s1 + $0x100] sm:$0xff]
  %v64 = vld [vmem:[%s1 + $0x108] sm:$0xff]
  %v65 = vld [vmem:[%s1 + $0x110] sm:$0xff]
  %v66 = vld [vmem:[%s1 + $0x118] sm:$0xff]
  %v67 = vld [vmem:[%s1 + $0x120] sm:$0xff]
  %v68 = vld [vmem:[%s1 + $0x128] sm:$0xff]
  %v69 = vld [vmem:[%s1 + $0x130] sm:$0xff]
  %v70 = vld [vmem:[%s1 + $0x138] sm:$0xff]
  %v71 = vld [vmem:[%s1 + $0x140] sm:$0xff]
  %v72 = vld [vmem:[%s1 + $0x148] sm:$0xff]
  %v73 = vld [vmem:[%s1 + $0x150] sm:$0xff]
  %v74 = vld [vmem:[%s1 + $0x158] sm:$0xff]
  %v75 = vld [vmem:[%s1 + $0x160] sm:$0xff]
  %v76 = vld [vmem:[%s1 + $0x168] sm:$0xff]
  %v77 = vld [vmem:[%s1 + $0x170] sm:$0xff]
  %v78 = vld [vmem:[%s1 + $0x178] sm:$0xff]
  %v79 = vld [vmem:[%s1 + $0x180] sm:$0xff]
  %v80 = vld [vmem:[%s1 + $0x188] sm:$0xff]
  %v81 = vld [vmem:[%s1 + $0x190] sm:$0xff]
  %v82 = vld [vmem:[%s1 + $0x198] sm:$0xff]
  %v83 = vld [vmem:[%s1 + $0x1a0] sm:$0xff]
  %v84 = vld [vmem:[%s1 + $0x1a8] sm:$0xff]
  %v85 = vld [vmem:[%s1 + $0x1b0] sm:$0xff]
  %v86 = vld [vmem:[%s1 + $0x1b8] sm:$0xff]
  %v87 = vld [vmem:[%s1 + $0x1c0] sm:$0xff]
  %v88 = vld [vmem:[%s1 + $0x1c8] sm:$0xff]
  %v89 = vld [vmem:[%s1 + $0x1d0] sm:$0xff]
  %v90 = vld [vmem:[%s1 + $0x1d8] sm:$0xff]
  %v91 = vld [vmem:[%s1 + $0x1e0] sm:$0xff]
  %v92 = vld [vmem:[%s1 + $0x1e8] sm:$0xff]
  %v93 = vld [vmem:[%s1 + $0x1f0] sm:$0xff]
  %v94 = vld [vmem:[%s1 + $0x1f8] sm:$0xff]
  %v95 = vld [vmem:[%s1 + $0x200] sm:$0xff]
  %v96 = vld [vmem:[%s1 + $0x208] sm:$0xff]
  %v97 = vld [vmem:[%s1 + $0x210] sm:$0xff]
  %v98 = vld [vmem:[%s1 + $0x218] sm:$0xff]
  %v99 = vld [vmem:[%s1 + $0x220] sm:$0xff]
  %v100 = vld [vmem:[%s1 + $0x228] sm:$0xff]
  %v101 = vld [vmem:[%s1 + $0x230] sm:$0xff]
  %v102 = vld [vmem:[%s1 + $0x238] sm:$0xff]
  %v105 = vcombine.high %v29, %v29
  %v107 = vunpack.c.l.s4 1983009808
  %v108 = vunpack.c.0.s8 %v107
  %v109 = vlaneseq
  %v110 = vshrl.u32 %v109, 7
  %v111 = vsub.s32 %v108, %v110
  %v112 = vrot.slane %v29, %v111
  %v114 = vunpack.c.l.s4 1983009808
  %v115 = vunpack.c.0.s8 %v114
  %v116 = vlaneseq
  %v117 = vshrl.u32 %v116, 7
  %v118 = vsub.s32 %v115, %v117
  %v119 = vrot.slane %v105, %v118
  %v120 = vcombine.high %v112, %v112
  %v121 = vcombine.high %v119, %v119
  %v123 = vunpack.c.l.s4 1983009808
  %v124 = vunpack.c.0.s8 %v123
  %v125 = vlaneseq
  %v126 = vshrl.u32 %v125, 7
  %v127 = vsub.s32 %v124, %v126
  %v128 = vrot.slane %v30, %v127
  %vm133 = vcmask 523264
  %v134 = vsel %vm133, %v128, 0
  %136 = vmatprep.subr.mxu0 0.0
  %137 = vmatpush1.msra.mxu0 %v31
  %138 = vmatprep.subr.mxu0 0.0
  %139 = vmatpush1.msra.mxu0 %v32
  %140 = vmatprep.subr.mxu0 0.0
  %141 = vmatpush1.msra.mxu0 %v33
  %142 = vmatprep.subr.mxu0 0.0
  %143 = vmatpush1.msra.mxu0 %v34
  %144 = vmatprep.subr.mxu0 0.0
  %145 = vmatpush1.msra.mxu0 %v35
  %146 = vmatprep.subr.mxu0 0.0
  %147 = vmatpush1.msra.mxu0 %v36
  %148 = vmatprep.subr.mxu0 0.0
  %149 = vmatpush1.msra.mxu0 %v37
  %150 = vmatprep.subr.mxu0 0.0
  %151 = vmatpush1.msra.mxu0 %v38
  %152 = vmatprep.subr.mxu0 0.0
  %153 = vmatpush1.msra.mxu0 %v39
  %154 = vmatprep.subr.mxu0 0.0
  %155 = vmatpush1.msra.mxu0 %v40
  %156 = vmatprep.subr.mxu0 0.0
  %157 = vmatpush1.msra.mxu0 %v41
  %158 = vmatprep.subr.mxu0 0.0
  %159 = vmatpush1.msra.mxu0 %v42
  %160 = vmatprep.subr.mxu0 0.0
  %161 = vmatpush1.msra.mxu0 %v43
  %162 = vmatprep.subr.mxu0 0.0
  %163 = vmatpush1.msra.mxu0 %v44
  %164 = vmatprep.subr.mxu0 0.0
  %165 = vmatpush1.msra.mxu0 %v45
  %166 = vmatprep.subr.mxu0 0.0
  %167 = vmatpush1.msra.mxu0 %v46
  %168 = vmatprep.subr.mxu0 0.0
  %169 = vmatpush1.msra.mxu0 %v47
  %170 = vmatprep.subr.mxu0 0.0
  %171 = vmatpush1.msra.mxu0 %v48
  %172 = vmatprep.subr.mxu0 0.0
  %173 = vmatpush1.msra.mxu0 %v49
  %174 = vmatprep.subr.mxu0 0.0
  %175 = vmatpush1.msra.mxu0 %v50
  %176 = vmatprep.subr.mxu0 0.0
  %177 = vmatpush1.msra.mxu0 %v51
  %178 = vmatprep.subr.mxu0 0.0
  %179 = vmatpush1.msra.mxu0 %v52
  %180 = vmatprep.subr.mxu0 0.0
  %181 = vmatpush1.msra.mxu0 %v53
  %182 = vmatprep.subr.mxu0 0.0
  %183 = vmatpush1.msra.mxu0 %v54
  %184 = vmatprep.subr.mxu0 0.0
  %185 = vmatpush1.msra.mxu0 %v55
  %186 = vmatprep.subr.mxu0 0.0
  %187 = vmatpush1.msra.mxu0 %v56
  %188 = vmatprep.subr.mxu0 0.0
  %189 = vmatpush1.msra.mxu0 %v57
  %190 = vmatprep.subr.mxu0 0.0
  %191 = vmatpush1.msra.mxu0 %v58
  %192 = vmatprep.subr.mxu0 0.0
  %193 = vmatpush1.msra.mxu0 %v59
  %194 = vmatprep.subr.mxu0 0.0
  %195 = vmatpush1.msra.mxu0 %v60
  %196 = vmatprep.subr.mxu0 0.0
  %197 = vmatpush1.msra.mxu0 %v61
  %198 = vmatprep.subr.mxu0 0.0
  %199 = vmatpush1.msra.mxu0 %v62
  %200 = vmatprep.mubr.f32.mxu0 %v120
  %201 = vmatmul.mubr.f32.gmra.mrb[0].mxu0 %v112
  %v202 = vpop.f32.mrb[0].mxu0
  %v203 = vadd.f32 0.0, %v202
  %v204 = vpop.f32.mrb[0].mxu0
  %205 = vdwg.mxu0
  %206 = vmatprep.subr.mxu0 0.0
  %207 = vmatpush1.msra.mxu0 %v63
  %208 = vmatprep.subr.mxu0 0.0
  %209 = vmatpush1.msra.mxu0 %v64
  %210 = vmatprep.subr.mxu0 0.0
  %211 = vmatpush1.msra.mxu0 %v65
  %212 = vmatprep.subr.mxu0 0.0
  %213 = vmatpush1.msra.mxu0 %v66
  %214 = vmatprep.subr.mxu0 0.0
  %215 = vmatpush1.msra.mxu0 %v67
  %216 = vmatprep.subr.mxu0 0.0
  %217 = vmatpush1.msra.mxu0 %v68
  %218 = vmatprep.subr.mxu0 0.0
  %219 = vmatpush1.msra.mxu0 %v69
  %220 = vmatprep.subr.mxu0 0.0
  %221 = vmatpush1.msra.mxu0 %v70
  %222 = vmatprep.subr.mxu0 0.0
  %223 = vmatpush1.msra.mxu0 %v71
  %224 = vmatprep.subr.mxu0 0.0
  %225 = vmatpush1.msra.mxu0 %v72
  %226 = vmatprep.subr.mxu0 0.0
  %227 = vmatpush1.msra.mxu0 %v73
  %228 = vmatprep.subr.mxu0 0.0
  %229 = vmatpush1.msra.mxu0 %v74
  %230 = vmatprep.subr.mxu0 0.0
  %231 = vmatpush1.msra.mxu0 %v75
  %232 = vmatprep.subr.mxu0 0.0
  %233 = vmatpush1.msra.mxu0 %v76
  %234 = vmatprep.subr.mxu0 0.0
  %235 = vmatpush1.msra.mxu0 %v77
  %236 = vmatprep.subr.mxu0 0.0
  %237 = vmatpush1.msra.mxu0 %v78
  %238 = vmatprep.subr.mxu0 0.0
  %239 = vmatpush1.msra.mxu0 %v79
  %240 = vmatprep.subr.mxu0 0.0
  %241 = vmatpush1.msra.mxu0 %v80
  %242 = vmatprep.subr.mxu0 0.0
  %243 = vmatpush1.msra.mxu0 %v81
  %244 = vmatprep.subr.mxu0 0.0
  %245 = vmatpush1.msra.mxu0 %v82
  %246 = vmatprep.subr.mxu0 0.0
  %247 = vmatpush1.msra.mxu0 %v83
  %248 = vmatprep.subr.mxu0 0.0
  %249 = vmatpush1.msra.mxu0 %v84
  %250 = vmatprep.subr.mxu0 0.0
  %251 = vmatpush1.msra.mxu0 %v85
  %252 = vmatprep.subr.mxu0 0.0
  %253 = vmatpush1.msra.mxu0 %v86
  %254 = vmatprep.subr.mxu0 0.0
  %255 = vmatpush1.msra.mxu0 %v87
  %256 = vmatprep.subr.mxu0 0.0
  %257 = vmatpush1.msra.mxu0 %v88
  %258 = vmatprep.subr.mxu0 0.0
  %259 = vmatpush1.msra.mxu0 %v89
  %260 = vmatprep.subr.mxu0 0.0
  %261 = vmatpush1.msra.mxu0 %v90
  %262 = vmatprep.subr.mxu0 0.0
  %263 = vmatpush1.msra.mxu0 %v91
  %264 = vmatprep.subr.mxu0 0.0
  %265 = vmatpush1.msra.mxu0 %v92
  %266 = vmatprep.subr.mxu0 0.0
  %267 = vmatpush1.msra.mxu0 %v93
  %268 = vmatprep.subr.mxu0 0.0
  %269 = vmatpush1.msra.mxu0 %v94
  %270 = vmatprep.mubr.f32.mxu0 %v121
  %271 = vmatmul.mubr.f32.gmra.mrb[0].mxu0 %v119
  %v272 = vpop.f32.mrb[0].mxu0
  %v273 = vadd.f32 %v203, %v272
  %v274 = vpop.f32.mrb[0].mxu0
  %275 = vdwg.mxu0
  %276 = vmatprep.subr.mxu0 0.0
  %277 = vmatpush1.msra.mxu0 %v95
  %278 = vmatprep.subr.mxu0 0.0
  %279 = vmatpush1.msra.mxu0 %v96
  %280 = vmatprep.subr.mxu0 0.0
  %281 = vmatpush1.msra.mxu0 %v97
  %282 = vmatprep.subr.mxu0 0.0
  %283 = vmatpush1.msra.mxu0 %v98
  %284 = vmatprep.subr.mxu0 0.0
  %285 = vmatpush1.msra.mxu0 %v99
  %286 = vmatprep.subr.mxu0 0.0
  %287 = vmatpush1.msra.mxu0 %v100
  %288 = vmatprep.subr.mxu0 0.0
  %289 = vmatpush1.msra.mxu0 %v101
  %290 = vmatprep.subr.mxu0 0.0
  %291 = vmatpush1.msra.mxu0 %v102
  %292 = vmatprep.subr.mxu0 0.0
  %293 = vmatpush1.msra.mxu0 0.0
  %294 = vmatprep.subr.mxu0 0.0
  %295 = vmatpush1.msra.mxu0 0.0
  %296 = vmatprep.subr.mxu0 0.0
  %297 = vmatpush1.msra.mxu0 0.0
  %298 = vmatprep.subr.mxu0 0.0
  %299 = vmatpush1.msra.mxu0 0.0
  %300 = vmatprep.subr.mxu0 0.0
  %301 = vmatpush1.msra.mxu0 0.0
  %302 = vmatprep.subr.mxu0 0.0
  %303 = vmatpush1.msra.mxu0 0.0
  %304 = vmatprep.subr.mxu0 0.0
  %305 = vmatpush1.msra.mxu0 0.0
  %306 = vmatprep.subr.mxu0 0.0
  %307 = vmatpush1.msra.mxu0 0.0
  %308 = vmatprep.subr.mxu0 0.0
  %309 = vmatpush1.msra.mxu0 0.0
  %310 = vmatprep.subr.mxu0 0.0
  %311 = vmatpush1.msra.mxu0 0.0
  %312 = vmatprep.subr.mxu0 0.0
  %313 = vmatpush1.msra.mxu0 0.0
  %314 = vmatprep.subr.mxu0 0.0
  %315 = vmatpush1.msra.mxu0 0.0
  %316 = vmatprep.subr.mxu0 0.0
  %317 = vmatpush1.msra.mxu0 0.0
  %318 = vmatprep.subr.mxu0 0.0
  %319 = vmatpush1.msra.mxu0 0.0
  %320 = vmatprep.subr.mxu0 0.0
  %321 = vmatpush1.msra.mxu0 0.0
  %322 = vmatprep.subr.mxu0 0.0
  %323 = vmatpush1.msra.mxu0 0.0
  %324 = vmatprep.subr.mxu0 0.0
  %325 = vmatpush1.msra.mxu0 0.0
  %326 = vmatprep.subr.mxu0 0.0
  %327 = vmatpush1.msra.mxu0 0.0
  %328 = vmatprep.subr.mxu0 0.0
  %329 = vmatpush1.msra.mxu0 0.0
  %330 = vmatprep.subr.mxu0 0.0
  %331 = vmatpush1.msra.mxu0 0.0
  %332 = vmatprep.subr.mxu0 0.0
  %333 = vmatpush1.msra.mxu0 0.0
  %334 = vmatprep.subr.mxu0 0.0
  %335 = vmatpush1.msra.mxu0 0.0
  %336 = vmatprep.subr.mxu0 0.0
  %337 = vmatpush1.msra.mxu0 0.0
  %338 = vmatprep.subr.mxu0 0.0
  %339 = vmatpush1.msra.mxu0 0.0
  %340 = vmatprep.mubr.f32.mxu0 0.0
  %341 = vmatmul.mubr.f32.gmra.mrb[0].mxu0 %v134
  %v342 = vpop.f32.mrb[0].mxu0
  %v343 = vadd.f32 %v273, %v342
  %v344 = vpop.f32.mrb[0].mxu0
  %345 = vdwg.mxu0
  %vm346 = vcmask 517120
  %v347 = vsel %vm346, %v343, 0.0
  %v348 = vrot.slane %v347, 4
  %v349 = vadd.f32 %v347, %v348
  %v350 = vrot.slane %v349, 2
  %v351 = vadd.f32 %v349, %v350
  %v352 = vrot.slane %v351, 1
  %v353 = vadd.f32 %v351, %v352
  %v354 = vrcp.pop 2.0
  %v355 = vmul.f32 %v353, %v354
  %v356 = vsub.f32 %v343, %v355
  %v357 = vmul.f32 %v356, %v356
  %v358 = vsel %vm346, %v357, 0.0
  %v359 = vrot.slane %v358, 4
  %v360 = vadd.f32 %v358, %v359
  %v361 = vrot.slane %v360, 2
  %v362 = vadd.f32 %v360, %v361
  %v363 = vrot.slane %v362, 1
  %v364 = vadd.f32 %v362, %v363
  %v365 = vmul.f32 %v364, %v354
  %v366 = vld [vmem:[%s2] sm:$0x1]
  %v367 = vadd.f32 %v365, 1e-05
  %v368 = vrsqrt.pop %v367
  %v369 = vmul.f32 %v366, %v368
  %v371 = vlaneseq
  %v372 = vshrl.u32 %v371, 7
  %v373 = vsub.s32 0, %v372
  %v374 = vrot.slane %v369, %v373
  %v376 = vmul.f32 %v356, %v374
  %v377 = vld [vmem:[%s3] sm:$0x1]
  %v379 = vlaneseq
  %v380 = vshrl.u32 %v379, 7
  %v381 = vsub.s32 0, %v380
  %v382 = vrot.slane %v377, %v381
  %v384 = vadd.f32 %v376, %v382
  %v385 = vld [vmem:[%s4] sm:$0x3]
  %v386 = vld [vmem:[%s5] sm:$0xff]
  %v387 = vld [vmem:[%s5 + $0x8] sm:$0xff]
  %v388 = vld [vmem:[%s5 + $0x10] sm:$0xff]
  %v389 = vld [vmem:[%s5 + $0x18] sm:$0xff]
  %vm390 = vcmask 261120
  %v392 = vsel %vm390, %v385, 0
  %394 = vmatprep.subr.mxu0 0.0
  %395 = vmatpush1.msra.mxu0 %v386
  %396 = vmatprep.subr.mxu0 0.0
  %397 = vmatpush1.msra.mxu0 %v387
  %398 = vmatprep.subr.mxu0 0.0
  %399 = vmatpush1.msra.mxu0 %v388
  %400 = vmatprep.subr.mxu0 0.0
  %401 = vmatpush1.msra.mxu0 %v389
  %402 = vmatprep.subr.mxu0 0.0
  %403 = vmatpush1.msra.mxu0 0.0
  %404 = vmatprep.subr.mxu0 0.0
  %405 = vmatpush1.msra.mxu0 0.0
  %406 = vmatprep.subr.mxu0 0.0
  %407 = vmatpush1.msra.mxu0 0.0
  %408 = vmatprep.subr.mxu0 0.0
  %409 = vmatpush1.msra.mxu0 0.0
  %410 = vmatprep.subr.mxu0 0.0
  %411 = vmatpush1.msra.mxu0 0.0
  %412 = vmatprep.subr.mxu0 0.0
  %413 = vmatpush1.msra.mxu0 0.0
  %414 = vmatprep.subr.mxu0 0.0
  %415 = vmatpush1.msra.mxu0 0.0
  %416 = vmatprep.subr.mxu0 0.0
  %417 = vmatpush1.msra.mxu0 0.0
  %418 = vmatprep.subr.mxu0 0.0
  %419 = vmatpush1.msra.mxu0 0.0
  %420 = vmatprep.subr.mxu0 0.0
  %421 = vmatpush1.msra.mxu0 0.0
  %422 = vmatprep.subr.mxu0 0.0
  %423 = vmatpush1.msra.mxu0 0.0
  %424 = vmatprep.subr.mxu0 0.0
  %425 = vmatpush1.msra.mxu0 0.0
  %426 = vmatprep.subr.mxu0 0.0
  %427 = vmatpush1.msra.mxu0 0.0
  %428 = vmatprep.subr.mxu0 0.0
  %429 = vmatpush1.msra.mxu0 0.0
  %430 = vmatprep.subr.mxu0 0.0
  %431 = vmatpush1.msra.mxu0 0.0
  %432 = vmatprep.subr.mxu0 0.0
  %433 = vmatpush1.msra.mxu0 0.0
  %434 = vmatprep.subr.mxu0 0.0
  %435 = vmatpush1.msra.mxu0 0.0
  %436 = vmatprep.subr.mxu0 0.0
  %437 = vmatpush1.msra.mxu0 0.0
  %438 = vmatprep.subr.mxu0 0.0
  %439 = vmatpush1.msra.mxu0 0.0
  %440 = vmatprep.subr.mxu0 0.0
  %441 = vmatpush1.msra.mxu0 0.0
  %442 = vmatprep.subr.mxu0 0.0
  %443 = vmatpush1.msra.mxu0 0.0
  %444 = vmatprep.subr.mxu0 0.0
  %445 = vmatpush1.msra.mxu0 0.0
  %446 = vmatprep.subr.mxu0 0.0
  %447 = vmatpush1.msra.mxu0 0.0
  %448 = vmatprep.subr.mxu0 0.0
  %449 = vmatpush1.msra.mxu0 0.0
  %450 = vmatprep.subr.mxu0 0.0
  %451 = vmatpush1.msra.mxu0 0.0
  %452 = vmatprep.subr.mxu0 0.0
  %453 = vmatpush1.msra.mxu0 0.0
  %454 = vmatprep.subr.mxu0 0.0
  %455 = vmatpush1.msra.mxu0 0.0
  %456 = vmatprep.subr.mxu0 0.0
  %457 = vmatpush1.msra.mxu0 0.0
  %458 = vmatprep.mubr.f32.mxu0 0.0
  %459 = vmatmul.mubr.f32.gmra.mrb[0].mxu0 %v392
  %v460 = vpop.f32.mrb[0].mxu0
  %v461 = vadd.f32 0.0, %v460
  %v462 = vpop.f32.mrb[0].mxu0
  %463 = vdwg.mxu0
  %v464 = vsel %vm346, %v461, 0.0
  %v465 = vrot.slane %v464, 4
  %v466 = vadd.f32 %v464, %v465
  %v467 = vrot.slane %v466, 2
  %v468 = vadd.f32 %v466, %v467
  %v469 = vrot.slane %v468, 1
  %v470 = vadd.f32 %v468, %v469
  %v471 = vmul.f32 %v470, %v354
  %v472 = vsub.f32 %v461, %v471
  %v473 = vmul.f32 %v472, %v472
  %v474 = vsel %vm346, %v473, 0.0
  %v475 = vrot.slane %v474, 4
  %v476 = vadd.f32 %v474, %v475
  %v477 = vrot.slane %v476, 2
  %v478 = vadd.f32 %v476, %v477
  %v479 = vrot.slane %v478, 1
  %v480 = vadd.f32 %v478, %v479
  %v481 = vmul.f32 %v480, %v354
  %v482 = vld [vmem:[%s6] sm:$0x1]
  %v483 = vadd.f32 %v481, 1e-05
  %v484 = vrsqrt.pop %v483
  %v485 = vmul.f32 %v482, %v484
  %v487 = vlaneseq
  %v488 = vshrl.u32 %v487, 7
  %v489 = vsub.s32 0, %v488
  %v490 = vrot.slane %v485, %v489
  %v492 = vmul.f32 %v472, %v490
  %v493 = vld [vmem:[%s7] sm:$0x1]
  %v495 = vlaneseq
  %v496 = vshrl.u32 %v495, 7
  %v497 = vsub.s32 0, %v496
  %v498 = vrot.slane %v493, %v497
  %v500 = vadd.f32 %v492, %v498
  %v501 = vadd.f32 %v384, %v500
  %502 = vst.msk [vmem:[%s8] sm:$0x3] %vm346, %v501
  // Predicated region
  $region34: #{resnet_forward.20} parent=0 // pred_check
    _
  $region35: #{resnet_forward.20} parent=0 // pred_check_branch
    %504 = sbr.rel (0) target = $region37
  $region36: #{resnet_forward.20} parent=0 // pred_region
    _
  $region37: #{resnet_forward.20} parent=0 // pred_fallthru
    _
  // Predicated region
  $region38: #{resnet_forward.20} parent=0 // pred_check
    _
  $region39: #{resnet_forward.20} parent=0 // pred_check_branch
    %506 = sbr.rel (0) target = $region41
  $region40: #{resnet_forward.20} parent=0 // pred_region
    _
  $region41: #{resnet_forward.20} parent=0 // pred_fallthru
    _

</llo_original>
